<compile_context>
chip_gen: v7x
topology: tpu7x:2x2x1
jax: 0.10.0
libtpu: 0.0.40
codegen_flags: <defaults>
</compile_context>

<pallas_src>
import functools

import jax
import jax.numpy as jnp
from jax.experimental import pallas as pl
from jax.experimental.pallas import tpu as pltpu


def _round_up(x, m):
    return (x + m - 1) // m * m


def _vq_argmin_kernel(z_ref, et_ref, hesq_ref, idx_ref, *, k_chunk):
    """Nearest-codebook-entry index for one tile of latent rows.

    z_ref    : (T, Dp)    dots_dtype  latent tile (feature-padded)
    et_ref   : (Dp, Kp)   dots_dtype  pre-transposed codebook
    hesq_ref : (1, Kp)    f32         0.5*||e_k||^2 (padded codes -> +huge)
    idx_ref  : (1, 1, T)  i32         argmin codebook index per row
    """
    z = z_ref[...]                                          # (T, Dp)
    t = z.shape[0]
    kp = et_ref.shape[1]
    n_chunks = kp // k_chunk

    best_val = jnp.full((t,), jnp.inf, dtype=jnp.float32)
    best_idx = jnp.zeros((t,), dtype=jnp.int32)
    # Static unroll over K chunks keeps the (T, K) intermediate to a few vregs
    # instead of a monolithic (T, Kp) slab.  Tie-breaking matches torch.argmin
    # (first minimum wins): strict '<' across chunks, argmin within a chunk.
    for c in range(n_chunks):
        lo = c * k_chunk
        dots = jnp.dot(z, et_ref[:, lo:lo + k_chunk],
                       preferred_element_type=jnp.float32)  # (T, kc) on MXU
        dist = hesq_ref[:, lo:lo + k_chunk] - dots           # (T, kc)
        local_val = jnp.min(dist, axis=1)                    # (T,)
        local_idx = jnp.argmin(dist, axis=1).astype(jnp.int32) + lo
        take = local_val < best_val
        best_val = jnp.where(take, local_val, best_val)
        best_idx = jnp.where(take, local_idx, best_idx)

    idx_ref[...] = best_idx[None, None, :]


def vector_quantize(z_nchw, codebook, commitment_cost, *,
                    tile_rows=512, dots_dtype=jnp.bfloat16):
    """Pallas implementation of VectorQuantizer.forward.

    Args:
      z_nchw: (B, C, H, W) float32, C == embed_dim.
      codebook: (n_embed, embed_dim) float32.
      dots_dtype: dtype of the distance matmul operands (bf16 is MXU-native on
        v5e/v6e/v7x; jnp.float32 for bit-exact-to-f32 argmin).
    Returns:
      z_q (B, C, H, W), codebook_loss (scalar), commitment_loss (scalar),
      indices (B, H, W) int32.
    """
    B, C, H, W = z_nchw.shape
    K, D = codebook.shape
    assert C == D, "channel dim must equal embed_dim"

    # NCHW -> NHWC -> (N, D): matches z.permute(0,2,3,1).view(-1, embed_dim).
    z_flat = jnp.transpose(z_nchw, (0, 2, 3, 1)).reshape(-1, D)
    z_flat = z_flat.astype(jnp.float32)
    N = z_flat.shape[0]
    codebook = codebook.astype(jnp.float32)

    # Lane-dense padding of feature / codebook axes (exact w.r.t. the math:
    # zero features don't change dot products; padded codes get +huge dist).
    Dp = _round_up(D, 128)
    Kp = _round_up(K, 128)

    # In-kernel K chunking: multiple of 128 that divides Kp, capped at 2048.
    if Kp <= 2048:
        k_chunk = Kp
    else:
        k_chunk = 2048
        while Kp % k_chunk:
            k_chunk -= 128

    # Generation-aware VMEM budget (v7x: 64 MiB physical; v5e/v6e: 128 MiB).
    try:
        vmem_phys = int(getattr(pltpu.get_tpu_info(), "vmem_capacity_bytes",
                                128 * 1024 * 1024))
    except Exception:
        vmem_phys = 128 * 1024 * 1024
    vmem_limit = max(16 * 1024 * 1024,
                     min(64 * 1024 * 1024, int(vmem_phys * 0.7)))
    budget = int(vmem_limit * 0.8)

    dsz = jnp.dtype(dots_dtype).itemsize

    def _vmem_bytes(t):
        io = 2 * t * Dp * dsz                    # z tile (double-buffered)
        io += 2 * t * 4                          # idx output
        io += Dp * Kp * dsz + Kp * 4             # codebook side (single-buf)
        inter = 3 * t * k_chunk * 4              # dots / dist / argmin scratch
        return io + inter

    def _halve(t):
        return max(128, (t // 2) // 128 * 128)

    tile_rows = max(128, _round_up(min(tile_rows, _round_up(N, 128)), 128))
    while tile_rows > 128 and _vmem_bytes(tile_rows) > budget:
        tile_rows = _halve(tile_rows)
    # Keep >= 2 grid steps so the "parallel" row axis can be sharded across
    # v7x's two TensorCores (one extra ~0.35us step is a no-op on v5e/v6e).
    if tile_rows > 128 and _round_up(N, tile_rows) // tile_rows < 2:
        tile_rows = _halve(tile_rows)

    Np = _round_up(N, tile_rows)
    num_tiles = Np // tile_rows

    # Kernel operands.  z is passed already cast to the matmul dtype (halves
    # the dominant input DMA); the exact-f32 z_q / losses are computed below.
    z_in = z_flat.astype(dots_dtype)
    if Np != N or Dp != D:
        z_in = jnp.pad(z_in, ((0, Np - N), (0, Dp - D)))
    if Kp != K or Dp != D:
        e_pad = jnp.pad(codebook, ((0, Kp - K), (0, Dp - D)))
    else:
        e_pad = codebook
    e_t = e_pad.T.astype(dots_dtype)                          # (Dp, Kp)
    half_e_sq = 0.5 * jnp.sum(e_pad * e_pad, axis=1)          # (Kp,)
    if Kp != K:
        half_e_sq = jnp.where(jnp.arange(Kp) < K, half_e_sq, jnp.float32(1e30))
    half_e_sq = half_e_sq[None, :].astype(jnp.float32)        # (1, Kp)

    kernel = functools.partial(_vq_argmin_kernel, k_chunk=k_chunk)
    out_shape = jax.ShapeDtypeStruct((num_tiles, 1, tile_rows), jnp.int32)
    out_spec = pl.BlockSpec((1, 1, tile_rows), lambda i: (i, 0, 0))
    z_spec = pl.BlockSpec((tile_rows, Dp), lambda i: (i, 0))
    compiler_params = pltpu.CompilerParams(
        # No cross-step accumulator -> the row axis is fully independent.
        dimension_semantics=("parallel",),
        vmem_limit_bytes=vmem_limit,
    )

    def _call(single_buffer_codebook):
        cb_kw = {}
        if single_buffer_codebook:
            # Grid-invariant codebook inputs: one VMEM buffer is enough
            # (saves ~Kp*Dp*dsz + Kp*4 bytes of double-buffer waste on v7x).
            cb_kw = dict(pipeline_mode=pl.Buffered(1))
        in_specs = [
            z_spec,
            pl.BlockSpec((Dp, Kp), lambda i: (0, 0), **cb_kw),   # codebook^T
            pl.BlockSpec((1, Kp), lambda i: (0, 0), **cb_kw),    # 0.5*||e||^2
        ]
        grid_spec = pltpu.PrefetchScalarGridSpec(
            num_scalar_prefetch=0,
            grid=(num_tiles,),
            in_specs=in_specs,
            out_specs=out_spec,
        )
        return pl.pallas_call(
            kernel,
            out_shape=out_shape,
            grid_spec=grid_spec,
            compiler_params=compiler_params,
        )(z_in, e_t, half_e_sq)

    try:
        idx_tiles = jax.block_until_ready(_call(True))
    except Exception:
        # Fallback for jax versions without BlockSpec(pipeline_mode=...):
        # default double-buffering of the grid-invariant codebook inputs.
        idx_tiles = _call(False)

    idx_flat = idx_tiles.reshape(-1)[:N]

    # z_q and losses in the wrapper: XLA row-gather + fused elementwise
    # reduce, exact f32, far cheaper than the old in-kernel one-hot matmul.
    z_q_flat = codebook[idx_flat]                              # (N, D) f32
    diff = z_q_flat - z_flat
    mse = jnp.mean(diff * diff)
    codebook_loss = mse
    commitment_loss = jnp.float32(commitment_cost) * mse

    # Straight-through: the forward value of z + (z_q - z).detach() is z_q.
    # TODO(synk): detach()/straight-through is backward-only autograd
    # semantics; a custom_vjp is needed if this is trained under jax.grad.
    z_q = jnp.transpose(z_q_flat.reshape(B, H, W, C), (0, 3, 1, 2))
    indices = idx_flat.reshape(B, H, W)
    return z_q, codebook_loss, commitment_loss, indices


if __name__ == "__main__":
    # Small deterministic config consistent with the module:
    # z: [B, C, H, W] with C == embed_dim.
    n_embed = 64
    embed_dim = 4
    commitment_cost = 0.25
    B, C, H, W = 2, embed_dim, 16, 16

    key = jax.random.PRNGKey(0)
    k_z, k_e = jax.random.split(key)
    z = jax.random.normal(k_z, (B, C, H, W), dtype=jnp.float32)
    # Embedding init: uniform(-1/n_embed, 1/n_embed), as in the module.
    codebook = jax.random.uniform(
        k_e, (n_embed, embed_dim), dtype=jnp.float32,
        minval=-1.0 / n_embed, maxval=1.0 / n_embed)

    z_q, cb_loss, commit_loss, idx = vector_quantize(
        z, codebook, commitment_cost)
    jax.block_until_ready((z_q, cb_loss, commit_loss, idx))

    # Pure-JAX reference of the same math.  The reference uses the same bf16
    # distance matmul as the kernel so the argmin comparison is robust to
    # bf16 rounding on near-tied distances.
    z_flat = jnp.transpose(z, (0, 2, 3, 1)).reshape(-1, embed_dim)
    dots_ref = jnp.dot(z_flat.astype(jnp.bfloat16),
                       codebook.astype(jnp.bfloat16).T,
                       preferred_element_type=jnp.float32)
    dist_ref = 0.5 * jnp.sum(codebook ** 2, axis=1)[None, :] - dots_ref
    idx_ref = jnp.argmin(dist_ref, axis=1)
    zq_ref = codebook[idx_ref]
    mse_ref = jnp.mean((zq_ref - z_flat) ** 2)

    assert idx.shape == (B, H, W)
    assert z_q.shape == (B, C, H, W)
    assert jnp.array_equal(idx.reshape(-1), idx_ref)
    assert jnp.allclose(
        jnp.transpose(z_q, (0, 2, 3, 1)).reshape(-1, embed_dim), zq_ref,
        atol=1e-6)
    assert jnp.allclose(cb_loss, mse_ref, atol=1e-5)
    assert jnp.allclose(commit_loss, commitment_cost * mse_ref, atol=1e-5)

    print("KERNEL_OK")
</pallas_src>

<mosaic_0001>
module attributes {stable_mosaic.version = 11 : i64} {
  func.func @_vq_argmin_kernel(%arg0: i32, %arg1: memref<256x128xbf16, #tpu.memory_space<vmem>>, %arg2: memref<128x128xbf16, #tpu.memory_space<vmem>>, %arg3: memref<1x128xf32, #tpu.memory_space<vmem>>, %arg4: memref<1x1x256xi32, #tpu.memory_space<vmem>>) attributes {dimension_semantics = [#tpu.dimension_semantics<parallel>], iteration_bounds = array<i64: 2>, scalar_prefetch = 0 : i64, scratch_operands = 0 : i64, tpu.core_type = #tpu.core_type<tc>, window_params = [{transform_indices = @transform_0, window_bounds = array<i64: 256, 128>}, {pipeline_mode = #tpu.pipeline_mode<synchronous>, transform_indices = @transform_1, window_bounds = array<i64: 128, 128>}, {pipeline_mode = #tpu.pipeline_mode<synchronous>, transform_indices = @transform_2, window_bounds = array<i64: 1, 128>}, {transform_indices = @transform_3, window_bounds = array<i64: 1, 1, 256>}]} {
    %c0 = arith.constant 0 : index
    %c0_0 = arith.constant 0 : index
    %0 = vector.load %arg1[%c0, %c0_0] : memref<256x128xbf16, #tpu.memory_space<vmem>>, vector<256x128xbf16>
    %cst = arith.constant 0x7F800000 : f32
    %1 = vector.broadcast %cst : f32 to vector<256xf32>
    %c0_i32 = arith.constant 0 : i32
    %2 = vector.broadcast %c0_i32 : i32 to vector<256xi32>
    %c0_1 = arith.constant 0 : index
    %c0_2 = arith.constant 0 : index
    %3 = vector.load %arg2[%c0_1, %c0_2] : memref<128x128xbf16, #tpu.memory_space<vmem>>, vector<128x128xbf16>
    %cst_3 = arith.constant dense<0.000000e+00> : vector<256x128xf32>
    %4 = tpu.matmul %0, %3, %cst_3 {dimension_numbers = #tpu.dot_dimension_numbers<[1], [0], [0], [1], [0, 0, 1, 1], [], []>} : vector<256x128xbf16>, vector<128x128xbf16>, vector<256x128xf32> -> vector<256x128xf32>
    %c0_4 = arith.constant 0 : index
    %c0_5 = arith.constant 0 : index
    %5 = vector.load %arg3[%c0_4, %c0_5] : memref<1x128xf32, #tpu.memory_space<vmem>>, vector<1x128xf32>
    %6 = vector.broadcast %5 : vector<1x128xf32> to vector<256x128xf32>
    %7 = arith.subf %6, %4 : vector<256x128xf32>
    %cst_6 = arith.constant dense<0x7F800000> : vector<256xf32>
    %8 = vector.multi_reduction <minimumf>, %7, %cst_6 [1] : vector<256x128xf32> to vector<256xf32>
    %9 = tpu.reduce_index %7 {axis = 1 : i32, kind = #tpu.reduction_kind<arg_min>} : vector<256x128xf32> -> vector<256xi32>
    %c0_i32_7 = arith.constant 0 : i32
    %10 = vector.broadcast %c0_i32_7 : i32 to vector<256xi32>
    %11 = arith.addi %9, %10 : vector<256xi32>
    %12 = arith.cmpf olt, %8, %1 : vector<256xf32>
    %13 = arith.select %12, %11, %2 : vector<256xi1>, vector<256xi32>
    %14 = vector.shape_cast %13 : vector<256xi32> to vector<1x1x256xi32>
    %c0_8 = arith.constant 0 : index
    %c0_9 = arith.constant 0 : index
    %c0_10 = arith.constant 0 : index
    %15 = vector.load %arg4[%c0_8, %c0_9, %c0_10] : memref<1x1x256xi32, #tpu.memory_space<vmem>>, vector<1x1x256xi32>
    tpu.vector_store %arg4[%c0_8, %c0_9, %c0_10], %14 {strides = array<i32>} : memref<1x1x256xi32, #tpu.memory_space<vmem>>, vector<1x1x256xi32>,
    return
  }
  func.func @transform_0(%arg0: i32) -> (i32, i32) {
    %c0_i32 = arith.constant 0 : i32
    %c0_i32_0 = arith.constant 0 : i32
    return %arg0, %c0_i32 : i32, i32
  }
  func.func @transform_1(%arg0: i32) -> (i32, i32) {
    %c0_i32 = arith.constant 0 : i32
    %c0_i32_0 = arith.constant 0 : i32
    %c0_i32_1 = arith.constant 0 : i32
    return %c0_i32, %c0_i32_0 : i32, i32
  }
  func.func @transform_2(%arg0: i32) -> (i32, i32) {
    %c0_i32 = arith.constant 0 : i32
    %c0_i32_0 = arith.constant 0 : i32
    %c0_i32_1 = arith.constant 0 : i32
    return %c0_i32, %c0_i32_0 : i32, i32
  }
  func.func @transform_3(%arg0: i32) -> (i32, i32, i32) {
    %c0_i32 = arith.constant 0 : i32
    %c0_i32_0 = arith.constant 0 : i32
    %c0_i32_1 = arith.constant 0 : i32
    return %arg0, %c0_i32, %c0_i32_0 : i32, i32, i32
  }
}

module attributes {stable_mosaic.version = 11 : i64} {
  func.func @_vq_argmin_kernel(%arg0: i32, %arg1: memref<256x128xbf16, #tpu.memory_space<vmem>>, %arg2: memref<128x128xbf16, #tpu.memory_space<vmem>>, %arg3: memref<1x128xf32, #tpu.memory_space<vmem>>, %arg4: memref<1x1x256xi32, #tpu.memory_space<vmem>>) attributes {dimension_semantics = [#tpu.dimension_semantics<parallel>], iteration_bounds = array<i64: 2>, scalar_prefetch = 0 : i64, scratch_operands = 0 : i64, tpu.core_type = #tpu.core_type<tc>, window_params = [{transform_indices = @transform_0, window_bounds = array<i64: 256, 128>}, {pipeline_mode = #tpu.pipeline_mode<synchronous>, transform_indices = @transform_1, window_bounds = array<i64: 128, 128>}, {pipeline_mode = #tpu.pipeline_mode<synchronous>, transform_indices = @transform_2, window_bounds = array<i64: 1, 128>}, {transform_indices = @transform_3, window_bounds = array<i64: 1, 1, 256>}]} {
    %c0 = arith.constant 0 : index
    %c0_0 = arith.constant 0 : index
    %0 = vector.load %arg1[%c0, %c0_0] : memref<256x128xbf16, #tpu.memory_space<vmem>>, vector<256x128xbf16>
    %cst = arith.constant 0x7F800000 : f32
    %1 = vector.broadcast %cst : f32 to vector<256xf32>
    %c0_i32 = arith.constant 0 : i32
    %2 = vector.broadcast %c0_i32 : i32 to vector<256xi32>
    %c0_1 = arith.constant 0 : index
    %c0_2 = arith.constant 0 : index
    %3 = vector.load %arg2[%c0_1, %c0_2] : memref<128x128xbf16, #tpu.memory_space<vmem>>, vector<128x128xbf16>
    %cst_3 = arith.constant dense<0.000000e+00> : vector<256x128xf32>
    %4 = tpu.matmul %0, %3, %cst_3 {dimension_numbers = #tpu.dot_dimension_numbers<[1], [0], [0], [1], [0, 0, 1, 1], [], []>} : vector<256x128xbf16>, vector<128x128xbf16>, vector<256x128xf32> -> vector<256x128xf32>
    %c0_4 = arith.constant 0 : index
    %c0_5 = arith.constant 0 : index
    %5 = vector.load %arg3[%c0_4, %c0_5] : memref<1x128xf32, #tpu.memory_space<vmem>>, vector<1x128xf32>
    %6 = vector.broadcast %5 : vector<1x128xf32> to vector<256x128xf32>
    %7 = arith.subf %6, %4 : vector<256x128xf32>
    %cst_6 = arith.constant dense<0x7F800000> : vector<256xf32>
    %8 = vector.multi_reduction <minimumf>, %7, %cst_6 [1] : vector<256x128xf32> to vector<256xf32>
    %9 = tpu.reduce_index %7 {axis = 1 : i32, kind = #tpu.reduction_kind<arg_min>} : vector<256x128xf32> -> vector<256xi32>
    %c0_i32_7 = arith.constant 0 : i32
    %10 = vector.broadcast %c0_i32_7 : i32 to vector<256xi32>
    %11 = arith.addi %9, %10 : vector<256xi32>
    %12 = arith.cmpf olt, %8, %1 : vector<256xf32>
    %13 = arith.select %12, %11, %2 : vector<256xi1>, vector<256xi32>
    %14 = vector.shape_cast %13 : vector<256xi32> to vector<1x1x256xi32>
    %c0_8 = arith.constant 0 : index
    %c0_9 = arith.constant 0 : index
    %c0_10 = arith.constant 0 : index
    %15 = vector.load %arg4[%c0_8, %c0_9, %c0_10] : memref<1x1x256xi32, #tpu.memory_space<vmem>>, vector<1x1x256xi32>
    tpu.vector_store %arg4[%c0_8, %c0_9, %c0_10], %14 {strides = array<i32>} : memref<1x1x256xi32, #tpu.memory_space<vmem>>, vector<1x1x256xi32>,
    return
  }
  func.func @transform_0(%arg0: i32) -> (i32, i32) {
    %c0_i32 = arith.constant 0 : i32
    %c0_i32_0 = arith.constant 0 : i32
    return %arg0, %c0_i32 : i32, i32
  }
  func.func @transform_1(%arg0: i32) -> (i32, i32) {
    %c0_i32 = arith.constant 0 : i32
    %c0_i32_0 = arith.constant 0 : i32
    %c0_i32_1 = arith.constant 0 : i32
    return %c0_i32, %c0_i32_0 : i32, i32
  }
  func.func @transform_2(%arg0: i32) -> (i32, i32) {
    %c0_i32 = arith.constant 0 : i32
    %c0_i32_0 = arith.constant 0 : i32
    %c0_i32_1 = arith.constant 0 : i32
    return %c0_i32, %c0_i32_0 : i32, i32
  }
  func.func @transform_3(%arg0: i32) -> (i32, i32, i32) {
    %c0_i32 = arith.constant 0 : i32
    %c0_i32_0 = arith.constant 0 : i32
    %c0_i32_1 = arith.constant 0 : i32
    return %arg0, %c0_i32, %c0_i32_0 : i32, i32, i32
  }
}

</mosaic_0001>

<llo_original>
// kernel: tpu_custom_call.1
$region0: #{tpu_custom_call.1}
  #allocation0 [shape = 'u32[]', space=smem, size = 0x4, offset = 0x4, fixed_abs, tag = 'smem constant byte address 0x4 - core index']
  #allocation1 [shape = 'u32[144,128]{1,0:T(1,128)}', space=vmem, size = 0x12000, scoped, tag = 'internal scratch']
  %s0 = inlined_call_operand.hbm [shape: bf16[512,128], index: 0, kind: input, shape index: {}]
  %s1 = inlined_call_operand.hbm [shape: bf16[128,128], index: 1, kind: input, shape index: {}]
  %s2 = inlined_call_operand.hbm [shape: f32[1,128], index: 2, kind: input, shape index: {}]
  %s3 = inlined_call_operand.hbm [shape: s32[2,1,256], index: 3, kind: output, shape index: {}]
  %s4 = sld [smem:[#allocation0]]
  $region57: #{tpu_custom_call.1} parent=0
    _
  %s6 = ssub.s32 1, %s4
  %s7 = scalar_select 0, %s6, %s4
  $region1: #{tpu_custom_call.1} parent=0
    #allocation2 [shape = 'u8[131072]{0}', space=vmem, size = 0x20000, scoped, tag = 'input window, operand 0']
    #allocation3 [shape = 's32[2]{0}', space=sflag, size = 0x8, scoped, tag = 'scoped memory for tpu_custom_call.1']
    #allocation4 [shape = 's32[2]{0}', space=sflag, size = 0x8, scoped, tag = 'scoped memory for tpu_custom_call.1']
    #allocation5 [shape = 'u8[32768]{0}', space=vmem, size = 0x8000, scoped, tag = 'input window, operand 1, single buffered']
    #allocation6 [shape = 's32[1]{0}', space=sflag, size = 0x4, scoped, tag = 'scoped memory for tpu_custom_call.1']
    #allocation7 [shape = 'u8[512]{0}', space=vmem, size = 0x400, scoped, tag = 'input window, operand 2, single buffered']
    #allocation8 [shape = 'u8[2048]{0}', space=vmem, size = 0x800, scoped, tag = 'output window, operand 0']
    %8 = vsyncpa [#allocation3], 0
    %s9 = scalar_lea.sflag [#allocation3], 1
    %10 = vsyncpa %s9, 0
    %11 = vsyncpa [#allocation6], 0
    %12 = vsyncpa [#allocation4], 0
    %s13 = scalar_lea.sflag [#allocation4], 1
    %14 = vsyncpa %s13, 0
    loop: start=0, step=1, limit=4
    $region2: #{tpu_custom_call.1} parent=1 // loop_pre_header
      _
    $region3: #{tpu_custom_call.1} parent=1 // loop_header
      %s16 = sphi 0, %s20
      %p17 = scmp.ge.s32.totalorder %s16, 4
      %s26 = sphi 0, %s28
      %s29 = sphi 0, %s26
      %s30 = sphi 0, %s29
      %s46 = sphi 0, %s30
      %s50 = sphi 0, %s50
      %s52 = sphi 0, %s50
      %s53 = sphi 0, %s52
      %s67 = sphi 0, %s53
      %s71 = sphi 0, %s71
      %s73 = sphi 0, %s71
      %s74 = sphi 0, %s73
      %s88 = sphi 0, %s74
      %s94 = sphi 0, %s96
      %s97 = sphi 0, %s94
      %s98 = sphi 0, %s97
      %s114 = sphi 0, %s98
    $region4: #{tpu_custom_call.1} parent=1 // loop_header_branch
      %19 = sbr.rel (%p17) target = $region8
    $region5: #{tpu_custom_call.1} parent=1 // loop_body
      %s21 = ssub.s32 %s16, 1
      %s22 = ssub.s32 %s16, 2
      %s23 = sadd.s32 %s16, 1
      %s24 = ssub.s32 %s16, %s23
      %p25 = scmp.eq.s32.totalorder %s24, 0
      %s27 = sadd.s32 %s26, 1
      %s28 = scalar_select %p25, %s26, %s27
      %p31 = pneg %p25
      %p32 = scmp.eq.s32.totalorder %s16, 1
      %p33 = por %p31, %p32
      %p34 = scmp.ne.s32.totalorder %s26, %s29
      %p35 = scmp.eq.s32.totalorder %s16, 0
      %p36 = por %p34, %p35
      %p37 = scmp.ne.s32.totalorder %s26, %s29
      %p38 = scmp.eq.s32.totalorder %s21, 1
      %p39 = por %p37, %p38
      %p40 = scmp.ne.s32.totalorder %s29, %s30
      %p41 = scmp.eq.s32.totalorder %s21, 0
      %p42 = por %p40, %p41
      %p43 = scmp.ne.s32.totalorder %s29, %s30
      %p44 = scmp.eq.s32.totalorder %s22, 1
      %p45 = por %p43, %p44
      %p47 = scmp.ne.s32.totalorder %s30, %s46
      %p48 = scmp.eq.s32.totalorder %s22, 0
      %p49 = por %p47, %p48
      %s51 = sadd.s32 %s50, 1
      %p54 = scmp.eq.s32.totalorder %s16, 1
      %p55 = scmp.ne.s32.totalorder %s50, %s52
      %p56 = scmp.eq.s32.totalorder %s16, 0
      %p57 = por %p55, %p56
      %p58 = scmp.ne.s32.totalorder %s50, %s52
      %p59 = scmp.eq.s32.totalorder %s21, 1
      %p60 = por %p58, %p59
      %p61 = scmp.ne.s32.totalorder %s52, %s53
      %p62 = scmp.eq.s32.totalorder %s21, 0
      %p63 = por %p61, %p62
      %p64 = scmp.ne.s32.totalorder %s52, %s53
      %p65 = scmp.eq.s32.totalorder %s22, 1
      %p66 = por %p64, %p65
      %p68 = scmp.ne.s32.totalorder %s53, %s67
      %p69 = scmp.eq.s32.totalorder %s22, 0
      %p70 = por %p68, %p69
      %s72 = sadd.s32 %s71, 1
      %p75 = scmp.eq.s32.totalorder %s16, 1
      %p76 = scmp.ne.s32.totalorder %s71, %s73
      %p77 = scmp.eq.s32.totalorder %s16, 0
      %p78 = por %p76, %p77
      %p79 = scmp.ne.s32.totalorder %s71, %s73
      %p80 = scmp.eq.s32.totalorder %s21, 1
      %p81 = por %p79, %p80
      %p82 = scmp.ne.s32.totalorder %s73, %s74
      %p83 = scmp.eq.s32.totalorder %s21, 0
      %p84 = por %p82, %p83
      %p85 = scmp.ne.s32.totalorder %s73, %s74
      %p86 = scmp.eq.s32.totalorder %s22, 1
      %p87 = por %p85, %p86
      %p89 = scmp.ne.s32.totalorder %s74, %s88
      %p90 = scmp.eq.s32.totalorder %s22, 0
      %p91 = por %p89, %p90
      %s92 = ssub.s32 %s16, %s23
      %p93 = scmp.eq.s32.totalorder %s92, 0
      %s95 = sadd.s32 %s94, 1
      %s96 = scalar_select %p93, %s94, %s95
      %p99 = pneg %p93
      %p100 = scmp.eq.s32.totalorder %s16, 1
      %p101 = por %p99, %p100
      %p102 = scmp.ne.s32.totalorder %s94, %s97
      %p103 = scmp.eq.s32.totalorder %s16, 0
      %p104 = por %p102, %p103
      %p105 = scmp.ne.s32.totalorder %s94, %s97
      %p106 = scmp.eq.s32.totalorder %s21, 1
      %p107 = por %p105, %p106
      %p108 = scmp.ne.s32.totalorder %s97, %s98
      %p109 = scmp.eq.s32.totalorder %s21, 0
      %p110 = por %p108, %p109
      %p111 = scmp.ne.s32.totalorder %s97, %s98
      %p112 = scmp.eq.s32.totalorder %s22, 1
      %p113 = por %p111, %p112
      %p115 = scmp.ne.s32.totalorder %s98, %s114
      %p116 = scmp.eq.s32.totalorder %s22, 0
      %p117 = por %p115, %p116
      %p118 = scmp.le.s32.totalorder 1, %s16
      %p119 = scmp.lt.s32.totalorder %s16, 3
      %p120 = pnand %p118, %p119
      %p121 = pneg %p120
      // Predicated region
      $region9: #{tpu_custom_call.1} parent=5 // pred_check
        _
      $region10: #{tpu_custom_call.1} parent=5 // pred_check_branch
        %123 = sbr.rel (%p120) target = $region12
      $region11: #{tpu_custom_call.1} parent=5 // pred_region
        %s124 = ssub.s32 %s16, 1
        // Predicated region
        $region13: #{tpu_custom_call.1} parent=11 // pred_check
          %p125 = pneg %p63
        $region14: #{tpu_custom_call.1} parent=11 // pred_check_branch
          %127 = sbr.rel (%p125) target = $region16
        $region15: #{tpu_custom_call.1} parent=11 // pred_region
          %s129 = ssub.s32 1024, 1024
          %130 = vsyncadd [#allocation6], %s129
          %s131 = sshll.u32 [#allocation5], 4
          %s132 = int_to_ptr.vmem [resolvable:$true] %s131
          %137 = dma.hbm_to_vmem [thread:$0]  %s1, 1024, %s132, [#allocation6], 64, 64, 4
        $region16: #{tpu_custom_call.1} parent=11 // pred_fallthru
          _
        // Predicated region
        $region17: #{tpu_custom_call.1} parent=11 // pred_check
          %p138 = pneg %p84
        $region18: #{tpu_custom_call.1} parent=11 // pred_check_branch
          %140 = sbr.rel (%p138) target = $region20
        $region19: #{tpu_custom_call.1} parent=11 // pred_region
          %s142 = ssub.s32 16, 16
          %143 = vsyncadd [#allocation6], %s142
          %s145 = sshll.u32 [#allocation7], 4
          %s146 = int_to_ptr.vmem [resolvable:$true] %s145
          %148 = dma.hbm_to_vmem [thread:$0]  %s2, 16, %s146, [#allocation6]
        $region20: #{tpu_custom_call.1} parent=11 // pred_fallthru
          _
      $region12: #{tpu_custom_call.1} parent=5 // pred_fallthru
        _
      %p149 = scmp.lt.s32.totalorder %s16, 2
      // Predicated region
      $region21: #{tpu_custom_call.1} parent=5 // pred_check
        %p150 = pneg %p149
      $region22: #{tpu_custom_call.1} parent=5 // pred_check_branch
        %152 = sbr.rel (%p150) target = $region24
      $region23: #{tpu_custom_call.1} parent=5 // pred_region
        // Predicated region
        $region25: #{tpu_custom_call.1} parent=23 // pred_check
          %p153 = pneg %p36
        $region26: #{tpu_custom_call.1} parent=23 // pred_check_branch
          %155 = sbr.rel (%p153) target = $region28
        $region27: #{tpu_custom_call.1} parent=23 // pred_region
          %s156 = sand.u32 %s26, 1
          %s157 = scalar_lea.sflag [#allocation3], %s156
          %s158 = sand.u32 %s26, 1
          %s159 = smul.addr %s158, 128
          %s160 = scalar_lea.vmem [#allocation2], %s159
          %s161 = smul.u32 32, %s16
          %s163 = ssub.s32 2048, 2048
          %164 = vsyncadd %s157, %s163
          %s165 = smul.addr %s161, 64
          %s166 = scalar_lea.hbm %s0, %s165
          %s167 = sshll.u32 %s160, 4
          %s168 = int_to_ptr.vmem [resolvable:$true] %s167
          %173 = dma.hbm_to_vmem [thread:$0]  %s166, 2048, %s168, %s157, 64, 64, 4
        $region28: #{tpu_custom_call.1} parent=23 // pred_fallthru
          _
      $region24: #{tpu_custom_call.1} parent=5 // pred_fallthru
        _
      %p174 = scmp.le.s32.totalorder 1, %s16
      %p175 = scmp.lt.s32.totalorder %s16, 3
      %p176 = pnand %p174, %p175
      %p177 = pneg %p176
      // Predicated region
      $region29: #{tpu_custom_call.1} parent=5 // pred_check
        _
      $region30: #{tpu_custom_call.1} parent=5 // pred_check_branch
        %179 = sbr.rel (%p176) target = $region32
      $region31: #{tpu_custom_call.1} parent=5 // pred_region
        %s180 = ssub.s32 %s16, 1
        %s181 = sand.u32 %s29, 1
        %s182 = scalar_lea.sflag [#allocation3], %s181
        %s183 = sand.u32 %s29, 1
        %s184 = smul.addr %s183, 128
        %s185 = scalar_lea.vmem [#allocation2], %s184
        // Predicated region
        $region33: #{tpu_custom_call.1} parent=31 // pred_check
          %p186 = pneg %p42
        $region34: #{tpu_custom_call.1} parent=31 // pred_check_branch
          %188 = sbr.rel (%p186) target = $region36
        $region35: #{tpu_custom_call.1} parent=31 // pred_region
          %189 = dma.done %s182, 2048
        $region36: #{tpu_custom_call.1} parent=31 // pred_fallthru
          _
        // Predicated region
        $region37: #{tpu_custom_call.1} parent=31 // pred_check
          %p190 = pneg %p63
        $region38: #{tpu_custom_call.1} parent=31 // pred_check_branch
          %192 = sbr.rel (%p190) target = $region40
        $region39: #{tpu_custom_call.1} parent=31 // pred_region
          %193 = dma.done [#allocation6], 1024
        $region40: #{tpu_custom_call.1} parent=31 // pred_fallthru
          _
        // Predicated region
        $region41: #{tpu_custom_call.1} parent=31 // pred_check
          %p194 = pneg %p84
        $region42: #{tpu_custom_call.1} parent=31 // pred_check_branch
          %196 = sbr.rel (%p194) target = $region44
        $region43: #{tpu_custom_call.1} parent=31 // pred_region
          %197 = dma.done [#allocation6], 16
        $region44: #{tpu_custom_call.1} parent=31 // pred_fallthru
          _
        %s198 = sand.u32 %s29, 1
        %s199 = scalar_lea.sflag [#allocation3], %s198
        %s200 = sand.u32 %s29, 1
        %s201 = smul.addr %s200, 128
        %s202 = scalar_lea.vmem [#allocation2], %s201
        %p203 = pneg %p42
        %p204 = pneg %p39
        %p205 = pneg %p63
        %p206 = pneg %p60
        %p207 = pneg %p84
        %p208 = pneg %p81
        %p209 = pneg %p110
        %p210 = pneg %p107
        %s211 = sand.u32 %s97, 1
        %s212 = scalar_lea.sflag [#allocation4], %s211
        %s213 = sand.u32 %s97, 1
        %s214 = smul.addr %s213, 2
        %s215 = scalar_lea.vmem [#allocation8], %s214
        %s216 = smul.u32 32, %s21
        %v218 = vld [vmem:[%s185] sm:$0xf]
        %v219 = vld [vmem:[%s185 + $0x4] sm:$0xf]
        %v220 = vld [vmem:[%s185 + $0x8] sm:$0xf]
        %v221 = vld [vmem:[%s185 + $0xc] sm:$0xf]
        %v222 = vld [vmem:[%s185 + $0x10] sm:$0xf]
        %v223 = vld [vmem:[%s185 + $0x14] sm:$0xf]
        %v224 = vld [vmem:[%s185 + $0x18] sm:$0xf]
        %v225 = vld [vmem:[%s185 + $0x1c] sm:$0xf]
        %v226 = vld [vmem:[%s185 + $0x20] sm:$0xf]
        %v227 = vld [vmem:[%s185 + $0x24] sm:$0xf]
        %v228 = vld [vmem:[%s185 + $0x28] sm:$0xf]
        %v229 = vld [vmem:[%s185 + $0x2c] sm:$0xf]
        %v230 = vld [vmem:[%s185 + $0x30] sm:$0xf]
        %v231 = vld [vmem:[%s185 + $0x34] sm:$0xf]
        %v232 = vld [vmem:[%s185 + $0x38] sm:$0xf]
        %v233 = vld [vmem:[%s185 + $0x3c] sm:$0xf]
        %v234 = vld [vmem:[%s185 + $0x40] sm:$0xf]
        %v235 = vld [vmem:[%s185 + $0x44] sm:$0xf]
        %v236 = vld [vmem:[%s185 + $0x48] sm:$0xf]
        %v237 = vld [vmem:[%s185 + $0x4c] sm:$0xf]
        %v238 = vld [vmem:[%s185 + $0x50] sm:$0xf]
        %v239 = vld [vmem:[%s185 + $0x54] sm:$0xf]
        %v240 = vld [vmem:[%s185 + $0x58] sm:$0xf]
        %v241 = vld [vmem:[%s185 + $0x5c] sm:$0xf]
        %v242 = vld [vmem:[%s185 + $0x60] sm:$0xf]
        %v243 = vld [vmem:[%s185 + $0x64] sm:$0xf]
        %v244 = vld [vmem:[%s185 + $0x68] sm:$0xf]
        %v245 = vld [vmem:[%s185 + $0x6c] sm:$0xf]
        %v246 = vld [vmem:[%s185 + $0x70] sm:$0xf]
        %v247 = vld [vmem:[%s185 + $0x74] sm:$0xf]
        %v248 = vld [vmem:[%s185 + $0x78] sm:$0xf]
        %v249 = vld [vmem:[%s185 + $0x7c] sm:$0xf]
        %v250 = vld [vmem:[#allocation5] sm:$0xf]
        %v251 = vld [vmem:[#allocation5 + $0x4] sm:$0xf]
        %v252 = vld [vmem:[#allocation5 + $0x8] sm:$0xf]
        %v253 = vld [vmem:[#allocation5 + $0xc] sm:$0xf]
        %v254 = vld [vmem:[#allocation5 + $0x10] sm:$0xf]
        %v255 = vld [vmem:[#allocation5 + $0x14] sm:$0xf]
        %v256 = vld [vmem:[#allocation5 + $0x18] sm:$0xf]
        %v257 = vld [vmem:[#allocation5 + $0x1c] sm:$0xf]
        %v258 = vld [vmem:[#allocation5 + $0x20] sm:$0xf]
        %v259 = vld [vmem:[#allocation5 + $0x24] sm:$0xf]
        %v260 = vld [vmem:[#allocation5 + $0x28] sm:$0xf]
        %v261 = vld [vmem:[#allocation5 + $0x2c] sm:$0xf]
        %v262 = vld [vmem:[#allocation5 + $0x30] sm:$0xf]
        %v263 = vld [vmem:[#allocation5 + $0x34] sm:$0xf]
        %v264 = vld [vmem:[#allocation5 + $0x38] sm:$0xf]
        %v265 = vld [vmem:[#allocation5 + $0x3c] sm:$0xf]
        %v298 = vunpack.c.l.b16 %v218
        %v299 = vunpack.c.l.b16 %v219
        %v300 = vunpack.c.l.b16 %v220
        %v301 = vunpack.c.l.b16 %v221
        %v302 = vunpack.c.l.b16 %v222
        %v303 = vunpack.c.l.b16 %v223
        %v304 = vunpack.c.l.b16 %v224
        %v305 = vunpack.c.l.b16 %v225
        %v306 = vunpack.c.l.b16 %v226
        %v307 = vunpack.c.l.b16 %v227
        %v308 = vunpack.c.l.b16 %v228
        %v309 = vunpack.c.l.b16 %v229
        %v310 = vunpack.c.l.b16 %v230
        %v311 = vunpack.c.l.b16 %v231
        %v312 = vunpack.c.l.b16 %v232
        %v313 = vunpack.c.l.b16 %v233
        %v314 = vunpack.c.l.b16 %v234
        %v315 = vunpack.c.l.b16 %v235
        %v316 = vunpack.c.l.b16 %v236
        %v317 = vunpack.c.l.b16 %v237
        %v318 = vunpack.c.l.b16 %v238
        %v319 = vunpack.c.l.b16 %v239
        %v320 = vunpack.c.l.b16 %v240
        %v321 = vunpack.c.l.b16 %v241
        %v322 = vunpack.c.l.b16 %v242
        %v323 = vunpack.c.l.b16 %v243
        %v324 = vunpack.c.l.b16 %v244
        %v325 = vunpack.c.l.b16 %v245
        %v326 = vunpack.c.l.b16 %v246
        %v327 = vunpack.c.l.b16 %v247
        %v328 = vunpack.c.l.b16 %v248
        %v329 = vunpack.c.l.b16 %v249
        %v330 = vpack.c.b16 %v299, %v298
        %v331 = vpack.c.b16 %v301, %v300
        %v332 = vpack.c.b16 %v303, %v302
        %v333 = vpack.c.b16 %v305, %v304
        %v334 = vpack.c.b16 %v307, %v306
        %v335 = vpack.c.b16 %v309, %v308
        %v336 = vpack.c.b16 %v311, %v310
        %v337 = vpack.c.b16 %v313, %v312
        %v338 = vpack.c.b16 %v315, %v314
        %v339 = vpack.c.b16 %v317, %v316
        %v340 = vpack.c.b16 %v319, %v318
        %v341 = vpack.c.b16 %v321, %v320
        %v342 = vpack.c.b16 %v323, %v322
        %v343 = vpack.c.b16 %v325, %v324
        %v344 = vpack.c.b16 %v327, %v326
        %v345 = vpack.c.b16 %v329, %v328
        %v378 = vunpack.c.l.b16 %v250
        %v379 = vunpack.c.l.b16 %v251
        %v380 = vunpack.c.l.b16 %v252
        %v381 = vunpack.c.l.b16 %v253
        %v382 = vunpack.c.l.b16 %v254
        %v383 = vunpack.c.l.b16 %v255
        %v384 = vunpack.c.l.b16 %v256
        %v385 = vunpack.c.l.b16 %v257
        %v386 = vunpack.c.l.b16 %v258
        %v387 = vunpack.c.l.b16 %v259
        %v388 = vunpack.c.l.b16 %v260
        %v389 = vunpack.c.l.b16 %v261
        %v390 = vunpack.c.l.b16 %v262
        %v391 = vunpack.c.l.b16 %v263
        %v392 = vunpack.c.l.b16 %v264
        %v393 = vunpack.c.l.b16 %v265
        %v394 = vpack.c.b16 %v379, %v378
        %v395 = vpack.c.b16 %v381, %v380
        %v396 = vpack.c.b16 %v383, %v382
        %v397 = vpack.c.b16 %v385, %v384
        %v398 = vpack.c.b16 %v387, %v386
        %v399 = vpack.c.b16 %v389, %v388
        %v400 = vpack.c.b16 %v391, %v390
        %v401 = vpack.c.b16 %v393, %v392
        %410 = vmatprep.subr.bf16.mxu0 0
        %411 = vmatpush1.bf16.msra.mxu0 %v394
        %412 = vmatprep.subr.bf16.mxu0 0
        %413 = vmatpush1.bf16.msra.mxu0 %v395
        %414 = vmatprep.subr.bf16.mxu0 0
        %415 = vmatpush1.bf16.msra.mxu0 %v396
        %416 = vmatprep.subr.bf16.mxu0 0
        %417 = vmatpush1.bf16.msra.mxu0 %v397
        %418 = vmatprep.subr.bf16.mxu0 0
        %419 = vmatpush1.bf16.msra.mxu0 %v398
        %420 = vmatprep.subr.bf16.mxu0 0
        %421 = vmatpush1.bf16.msra.mxu0 %v399
        %422 = vmatprep.subr.bf16.mxu0 0
        %423 = vmatpush1.bf16.msra.mxu0 %v400
        %424 = vmatprep.subr.bf16.mxu0 0
        %425 = vmatpush1.bf16.msra.mxu0 %v401
        %426 = vmatprep.subr.bf16.mxu0 0
        %427 = vmatpush1.bf16.msra.mxu0 0
        %428 = vmatprep.subr.bf16.mxu0 0
        %429 = vmatpush1.bf16.msra.mxu0 0
        %430 = vmatprep.subr.bf16.mxu0 0
        %431 = vmatpush1.bf16.msra.mxu0 0
        %432 = vmatprep.subr.bf16.mxu0 0
        %433 = vmatpush1.bf16.msra.mxu0 0
        %434 = vmatprep.subr.bf16.mxu0 0
        %435 = vmatpush1.bf16.msra.mxu0 0
        %436 = vmatprep.subr.bf16.mxu0 0
        %437 = vmatpush1.bf16.msra.mxu0 0
        %438 = vmatprep.subr.bf16.mxu0 0
        %439 = vmatpush1.bf16.msra.mxu0 0
        %440 = vmatprep.subr.bf16.mxu0 0
        %441 = vmatpush1.bf16.msra.mxu0 0
        %442 = vmatprep.mubr.bf16.mxu0 0
        %443 = vmatmul.mubr.bf16.gmra.mrb[0].mxu0 %v330
        %v444 = vpop.f32.mrb[0].mxu0
        %v445 = vadd.f32 0.0, %v444
        %v446 = vpop.f32.mrb[0].mxu0
        %v447 = vpop.f32.mrb[0].mxu0
        %v448 = vadd.f32 0.0, %v447
        %v449 = vpop.f32.mrb[0].mxu0
        %450 = vmatprep.mubr.bf16.mxu0 0
        %451 = vmatmul.mubr.bf16.gmra.mrb[0].mxu0 %v331
        %v452 = vpop.f32.mrb[0].mxu0
        %v453 = vadd.f32 0.0, %v452
        %v454 = vpop.f32.mrb[0].mxu0
        %v455 = vpop.f32.mrb[0].mxu0
        %v456 = vadd.f32 0.0, %v455
        %v457 = vpop.f32.mrb[0].mxu0
        %458 = vmatprep.mubr.bf16.mxu0 0
        %459 = vmatmul.mubr.bf16.gmra.mrb[0].mxu0 %v332
        %v460 = vpop.f32.mrb[0].mxu0
        %v461 = vadd.f32 0.0, %v460
        %v462 = vpop.f32.mrb[0].mxu0
        %v463 = vpop.f32.mrb[0].mxu0
        %v464 = vadd.f32 0.0, %v463
        %v465 = vpop.f32.mrb[0].mxu0
        %466 = vmatprep.mubr.bf16.mxu0 0
        %467 = vmatmul.mubr.bf16.gmra.mrb[0].mxu0 %v333
        %v468 = vpop.f32.mrb[0].mxu0
        %v469 = vadd.f32 0.0, %v468
        %v470 = vpop.f32.mrb[0].mxu0
        %v471 = vpop.f32.mrb[0].mxu0
        %v472 = vadd.f32 0.0, %v471
        %v473 = vpop.f32.mrb[0].mxu0
        %474 = vmatprep.mubr.bf16.mxu0 0
        %475 = vmatmul.mubr.bf16.gmra.mrb[0].mxu0 %v334
        %v476 = vpop.f32.mrb[0].mxu0
        %v477 = vadd.f32 0.0, %v476
        %v478 = vpop.f32.mrb[0].mxu0
        %v479 = vpop.f32.mrb[0].mxu0
        %v480 = vadd.f32 0.0, %v479
        %v481 = vpop.f32.mrb[0].mxu0
        %482 = vmatprep.mubr.bf16.mxu0 0
        %483 = vmatmul.mubr.bf16.gmra.mrb[0].mxu0 %v335
        %v484 = vpop.f32.mrb[0].mxu0
        %v485 = vadd.f32 0.0, %v484
        %v486 = vpop.f32.mrb[0].mxu0
        %v487 = vpop.f32.mrb[0].mxu0
        %v488 = vadd.f32 0.0, %v487
        %v489 = vpop.f32.mrb[0].mxu0
        %490 = vmatprep.mubr.bf16.mxu0 0
        %491 = vmatmul.mubr.bf16.gmra.mrb[0].mxu0 %v336
        %v492 = vpop.f32.mrb[0].mxu0
        %v493 = vadd.f32 0.0, %v492
        %v494 = vpop.f32.mrb[0].mxu0
        %v495 = vpop.f32.mrb[0].mxu0
        %v496 = vadd.f32 0.0, %v495
        %v497 = vpop.f32.mrb[0].mxu0
        %498 = vmatprep.mubr.bf16.mxu0 0
        %499 = vmatmul.mubr.bf16.gmra.mrb[0].mxu0 %v337
        %v500 = vpop.f32.mrb[0].mxu0
        %v501 = vadd.f32 0.0, %v500
        %v502 = vpop.f32.mrb[0].mxu0
        %v503 = vpop.f32.mrb[0].mxu0
        %v504 = vadd.f32 0.0, %v503
        %v505 = vpop.f32.mrb[0].mxu0
        %506 = vmatprep.mubr.bf16.mxu0 0
        %507 = vmatmul.mubr.bf16.gmra.mrb[0].mxu0 %v338
        %v508 = vpop.f32.mrb[0].mxu0
        %v509 = vadd.f32 0.0, %v508
        %v510 = vpop.f32.mrb[0].mxu0
        %v511 = vpop.f32.mrb[0].mxu0
        %v512 = vadd.f32 0.0, %v511
        %v513 = vpop.f32.mrb[0].mxu0
        %514 = vmatprep.mubr.bf16.mxu0 0
        %515 = vmatmul.mubr.bf16.gmra.mrb[0].mxu0 %v339
        %v516 = vpop.f32.mrb[0].mxu0
        %v517 = vadd.f32 0.0, %v516
        %v518 = vpop.f32.mrb[0].mxu0
        %v519 = vpop.f32.mrb[0].mxu0
        %v520 = vadd.f32 0.0, %v519
        %v521 = vpop.f32.mrb[0].mxu0
        %522 = vmatprep.mubr.bf16.mxu0 0
        %523 = vmatmul.mubr.bf16.gmra.mrb[0].mxu0 %v340
        %v524 = vpop.f32.mrb[0].mxu0
        %v525 = vadd.f32 0.0, %v524
        %v526 = vpop.f32.mrb[0].mxu0
        %v527 = vpop.f32.mrb[0].mxu0
        %v528 = vadd.f32 0.0, %v527
        %v529 = vpop.f32.mrb[0].mxu0
        %530 = vmatprep.mubr.bf16.mxu0 0
        %531 = vmatmul.mubr.bf16.gmra.mrb[0].mxu0 %v341
        %v532 = vpop.f32.mrb[0].mxu0
        %v533 = vadd.f32 0.0, %v532
        %v534 = vpop.f32.mrb[0].mxu0
        %v535 = vpop.f32.mrb[0].mxu0
        %v536 = vadd.f32 0.0, %v535
        %v537 = vpop.f32.mrb[0].mxu0
        %538 = vmatprep.mubr.bf16.mxu0 0
        %539 = vmatmul.mubr.bf16.gmra.mrb[0].mxu0 %v342
        %v540 = vpop.f32.mrb[0].mxu0
        %v541 = vadd.f32 0.0, %v540
        %v542 = vpop.f32.mrb[0].mxu0
        %v543 = vpop.f32.mrb[0].mxu0
        %v544 = vadd.f32 0.0, %v543
        %v545 = vpop.f32.mrb[0].mxu0
        %546 = vmatprep.mubr.bf16.mxu0 0
        %547 = vmatmul.mubr.bf16.gmra.mrb[0].mxu0 %v343
        %v548 = vpop.f32.mrb[0].mxu0
        %v549 = vadd.f32 0.0, %v548
        %v550 = vpop.f32.mrb[0].mxu0
        %v551 = vpop.f32.mrb[0].mxu0
        %v552 = vadd.f32 0.0, %v551
        %v553 = vpop.f32.mrb[0].mxu0
        %554 = vmatprep.mubr.bf16.mxu0 0
        %555 = vmatmul.mubr.bf16.gmra.mrb[0].mxu0 %v344
        %v556 = vpop.f32.mrb[0].mxu0
        %v557 = vadd.f32 0.0, %v556
        %v558 = vpop.f32.mrb[0].mxu0
        %v559 = vpop.f32.mrb[0].mxu0
        %v560 = vadd.f32 0.0, %v559
        %v561 = vpop.f32.mrb[0].mxu0
        %562 = vmatprep.mubr.bf16.mxu0 0
        %563 = vmatmul.mubr.bf16.gmra.mrb[0].mxu0 %v345
        %v564 = vpop.f32.mrb[0].mxu0
        %v565 = vadd.f32 0.0, %v564
        %v566 = vpop.f32.mrb[0].mxu0
        %v567 = vpop.f32.mrb[0].mxu0
        %v568 = vadd.f32 0.0, %v567
        %v569 = vpop.f32.mrb[0].mxu0
        %570 = vdwg.mxu0
        %v571 = vld [vmem:[#allocation7] sm:$0x1]
        %v573 = vlaneseq
        %v574 = vshrl.u32 %v573, 7
        %v575 = vsub.s32 0, %v574
        %v576 = vrot.slane %v571, %v575
        %v578 = vsub.f32 %v576, %v445
        %v579 = vsub.f32 %v576, %v448
        %v580 = vsub.f32 %v576, %v453
        %v581 = vsub.f32 %v576, %v456
        %v582 = vsub.f32 %v576, %v461
        %v583 = vsub.f32 %v576, %v464
        %v584 = vsub.f32 %v576, %v469
        %v585 = vsub.f32 %v576, %v472
        %v586 = vsub.f32 %v576, %v477
        %v587 = vsub.f32 %v576, %v480
        %v588 = vsub.f32 %v576, %v485
        %v589 = vsub.f32 %v576, %v488
        %v590 = vsub.f32 %v576, %v493
        %v591 = vsub.f32 %v576, %v496
        %v592 = vsub.f32 %v576, %v501
        %v593 = vsub.f32 %v576, %v504
        %v594 = vsub.f32 %v576, %v509
        %v595 = vsub.f32 %v576, %v512
        %v596 = vsub.f32 %v576, %v517
        %v597 = vsub.f32 %v576, %v520
        %v598 = vsub.f32 %v576, %v525
        %v599 = vsub.f32 %v576, %v528
        %v600 = vsub.f32 %v576, %v533
        %v601 = vsub.f32 %v576, %v536
        %v602 = vsub.f32 %v576, %v541
        %v603 = vsub.f32 %v576, %v544
        %v604 = vsub.f32 %v576, %v549
        %v605 = vsub.f32 %v576, %v552
        %v606 = vsub.f32 %v576, %v557
        %v607 = vsub.f32 %v576, %v560
        %v608 = vsub.f32 %v576, %v565
        %v609 = vsub.f32 %v576, %v568
        %610 = vmin.xlane.f32.xlu0 %v578
        %v611 = vpop.xlane.xlu0 %610
        %612 = vmin.xlane.f32.xlu0 %v579
        %v613 = vpop.xlane.xlu0 %612
        %614 = vmin.xlane.f32.xlu0 %v580
        %v615 = vpop.xlane.xlu0 %614
        %616 = vmin.xlane.f32.xlu0 %v581
        %v617 = vpop.xlane.xlu0 %616
        %618 = vmin.xlane.f32.xlu0 %v582
        %v619 = vpop.xlane.xlu0 %618
        %620 = vmin.xlane.f32.xlu0 %v583
        %v621 = vpop.xlane.xlu0 %620
        %622 = vmin.xlane.f32.xlu0 %v584
        %v623 = vpop.xlane.xlu0 %622
        %624 = vmin.xlane.f32.xlu0 %v585
        %v625 = vpop.xlane.xlu0 %624
        %626 = vmin.xlane.f32.xlu0 %v586
        %v627 = vpop.xlane.xlu0 %626
        %628 = vmin.xlane.f32.xlu0 %v587
        %v629 = vpop.xlane.xlu0 %628
        %630 = vmin.xlane.f32.xlu0 %v588
        %v631 = vpop.xlane.xlu0 %630
        %632 = vmin.xlane.f32.xlu0 %v589
        %v633 = vpop.xlane.xlu0 %632
        %634 = vmin.xlane.f32.xlu0 %v590
        %v635 = vpop.xlane.xlu0 %634
        %636 = vmin.xlane.f32.xlu0 %v591
        %v637 = vpop.xlane.xlu0 %636
        %638 = vmin.xlane.f32.xlu0 %v592
        %v639 = vpop.xlane.xlu0 %638
        %640 = vmin.xlane.f32.xlu0 %v593
        %v641 = vpop.xlane.xlu0 %640
        %642 = vmin.xlane.f32.xlu0 %v594
        %v643 = vpop.xlane.xlu0 %642
        %644 = vmin.xlane.f32.xlu0 %v595
        %v645 = vpop.xlane.xlu0 %644
        %646 = vmin.xlane.f32.xlu0 %v596
        %v647 = vpop.xlane.xlu0 %646
        %648 = vmin.xlane.f32.xlu0 %v597
        %v649 = vpop.xlane.xlu0 %648
        %650 = vmin.xlane.f32.xlu0 %v598
        %v651 = vpop.xlane.xlu0 %650
        %652 = vmin.xlane.f32.xlu0 %v599
        %v653 = vpop.xlane.xlu0 %652
        %654 = vmin.xlane.f32.xlu0 %v600
        %v655 = vpop.xlane.xlu0 %654
        %656 = vmin.xlane.f32.xlu0 %v601
        %v657 = vpop.xlane.xlu0 %656
        %658 = vmin.xlane.f32.xlu0 %v602
        %v659 = vpop.xlane.xlu0 %658
        %660 = vmin.xlane.f32.xlu0 %v603
        %v661 = vpop.xlane.xlu0 %660
        %662 = vmin.xlane.f32.xlu0 %v604
        %v663 = vpop.xlane.xlu0 %662
        %664 = vmin.xlane.f32.xlu0 %v605
        %v665 = vpop.xlane.xlu0 %664
        %666 = vmin.xlane.f32.xlu0 %v606
        %v667 = vpop.xlane.xlu0 %666
        %668 = vmin.xlane.f32.xlu0 %v607
        %v669 = vpop.xlane.xlu0 %668
        %670 = vmin.xlane.f32.xlu0 %v608
        %v671 = vpop.xlane.xlu0 %670
        %672 = vmin.xlane.f32.xlu0 %v609
        %v673 = vpop.xlane.xlu0 %672
        %674 = vmin.index.xlane.f32.xlu0 %v578
        %v675 = vpop.xlane.xlu0 %674
        %676 = vmin.index.xlane.f32.xlu0 %v579
        %v677 = vpop.xlane.xlu0 %676
        %678 = vmin.index.xlane.f32.xlu0 %v580
        %v679 = vpop.xlane.xlu0 %678
        %680 = vmin.index.xlane.f32.xlu0 %v581
        %v681 = vpop.xlane.xlu0 %680
        %682 = vmin.index.xlane.f32.xlu0 %v582
        %v683 = vpop.xlane.xlu0 %682
        %684 = vmin.index.xlane.f32.xlu0 %v583
        %v685 = vpop.xlane.xlu0 %684
        %686 = vmin.index.xlane.f32.xlu0 %v584
        %v687 = vpop.xlane.xlu0 %686
        %688 = vmin.index.xlane.f32.xlu0 %v585
        %v689 = vpop.xlane.xlu0 %688
        %690 = vmin.index.xlane.f32.xlu0 %v586
        %v691 = vpop.xlane.xlu0 %690
        %692 = vmin.index.xlane.f32.xlu0 %v587
        %v693 = vpop.xlane.xlu0 %692
        %694 = vmin.index.xlane.f32.xlu0 %v588
        %v695 = vpop.xlane.xlu0 %694
        %696 = vmin.index.xlane.f32.xlu0 %v589
        %v697 = vpop.xlane.xlu0 %696
        %698 = vmin.index.xlane.f32.xlu0 %v590
        %v699 = vpop.xlane.xlu0 %698
        %700 = vmin.index.xlane.f32.xlu0 %v591
        %v701 = vpop.xlane.xlu0 %700
        %702 = vmin.index.xlane.f32.xlu0 %v592
        %v703 = vpop.xlane.xlu0 %702
        %704 = vmin.index.xlane.f32.xlu0 %v593
        %v705 = vpop.xlane.xlu0 %704
        %706 = vmin.index.xlane.f32.xlu0 %v594
        %v707 = vpop.xlane.xlu0 %706
        %708 = vmin.index.xlane.f32.xlu0 %v595
        %v709 = vpop.xlane.xlu0 %708
        %710 = vmin.index.xlane.f32.xlu0 %v596
        %v711 = vpop.xlane.xlu0 %710
        %712 = vmin.index.xlane.f32.xlu0 %v597
        %v713 = vpop.xlane.xlu0 %712
        %714 = vmin.index.xlane.f32.xlu0 %v598
        %v715 = vpop.xlane.xlu0 %714
        %716 = vmin.index.xlane.f32.xlu0 %v599
        %v717 = vpop.xlane.xlu0 %716
        %718 = vmin.index.xlane.f32.xlu0 %v600
        %v719 = vpop.xlane.xlu0 %718
        %720 = vmin.index.xlane.f32.xlu0 %v601
        %v721 = vpop.xlane.xlu0 %720
        %722 = vmin.index.xlane.f32.xlu0 %v602
        %v723 = vpop.xlane.xlu0 %722
        %724 = vmin.index.xlane.f32.xlu0 %v603
        %v725 = vpop.xlane.xlu0 %724
        %726 = vmin.index.xlane.f32.xlu0 %v604
        %v727 = vpop.xlane.xlu0 %726
        %728 = vmin.index.xlane.f32.xlu0 %v605
        %v729 = vpop.xlane.xlu0 %728
        %730 = vmin.index.xlane.f32.xlu0 %v606
        %v731 = vpop.xlane.xlu0 %730
        %732 = vmin.index.xlane.f32.xlu0 %v607
        %v733 = vpop.xlane.xlu0 %732
        %734 = vmin.index.xlane.f32.xlu0 %v608
        %v735 = vpop.xlane.xlu0 %734
        %736 = vmin.index.xlane.f32.xlu0 %v609
        %v737 = vpop.xlane.xlu0 %736
        %vm738 = vcmp.lt.f32.partialorder %v611, inf
        %vm739 = vcmp.lt.f32.partialorder %v613, inf
        %vm740 = vcmp.lt.f32.partialorder %v615, inf
        %vm741 = vcmp.lt.f32.partialorder %v617, inf
        %vm742 = vcmp.lt.f32.partialorder %v619, inf
        %vm743 = vcmp.lt.f32.partialorder %v621, inf
        %vm744 = vcmp.lt.f32.partialorder %v623, inf
        %vm745 = vcmp.lt.f32.partialorder %v625, inf
        %vm746 = vcmp.lt.f32.partialorder %v627, inf
        %vm747 = vcmp.lt.f32.partialorder %v629, inf
        %vm748 = vcmp.lt.f32.partialorder %v631, inf
        %vm749 = vcmp.lt.f32.partialorder %v633, inf
        %vm750 = vcmp.lt.f32.partialorder %v635, inf
        %vm751 = vcmp.lt.f32.partialorder %v637, inf
        %vm752 = vcmp.lt.f32.partialorder %v639, inf
        %vm753 = vcmp.lt.f32.partialorder %v641, inf
        %vm754 = vcmp.lt.f32.partialorder %v643, inf
        %vm755 = vcmp.lt.f32.partialorder %v645, inf
        %vm756 = vcmp.lt.f32.partialorder %v647, inf
        %vm757 = vcmp.lt.f32.partialorder %v649, inf
        %vm758 = vcmp.lt.f32.partialorder %v651, inf
        %vm759 = vcmp.lt.f32.partialorder %v653, inf
        %vm760 = vcmp.lt.f32.partialorder %v655, inf
        %vm761 = vcmp.lt.f32.partialorder %v657, inf
        %vm762 = vcmp.lt.f32.partialorder %v659, inf
        %vm763 = vcmp.lt.f32.partialorder %v661, inf
        %vm764 = vcmp.lt.f32.partialorder %v663, inf
        %vm765 = vcmp.lt.f32.partialorder %v665, inf
        %vm766 = vcmp.lt.f32.partialorder %v667, inf
        %vm767 = vcmp.lt.f32.partialorder %v669, inf
        %vm768 = vcmp.lt.f32.partialorder %v671, inf
        %vm769 = vcmp.lt.f32.partialorder %v673, inf
        %v770 = vsel %vm738, %v675, 0
        %v771 = vsel %vm739, %v677, 0
        %v772 = vsel %vm740, %v679, 0
        %v773 = vsel %vm741, %v681, 0
        %v774 = vsel %vm742, %v683, 0
        %v775 = vsel %vm743, %v685, 0
        %v776 = vsel %vm744, %v687, 0
        %v777 = vsel %vm745, %v689, 0
        %v778 = vsel %vm746, %v691, 0
        %v779 = vsel %vm747, %v693, 0
        %v780 = vsel %vm748, %v695, 0
        %v781 = vsel %vm749, %v697, 0
        %v782 = vsel %vm750, %v699, 0
        %v783 = vsel %vm751, %v701, 0
        %v784 = vsel %vm752, %v703, 0
        %v785 = vsel %vm753, %v705, 0
        %v786 = vsel %vm754, %v707, 0
        %v787 = vsel %vm755, %v709, 0
        %v788 = vsel %vm756, %v711, 0
        %v789 = vsel %vm757, %v713, 0
        %v790 = vsel %vm758, %v715, 0
        %v791 = vsel %vm759, %v717, 0
        %v792 = vsel %vm760, %v719, 0
        %v793 = vsel %vm761, %v721, 0
        %v794 = vsel %vm762, %v723, 0
        %v795 = vsel %vm763, %v725, 0
        %v796 = vsel %vm764, %v727, 0
        %v797 = vsel %vm765, %v729, 0
        %v798 = vsel %vm766, %v731, 0
        %v799 = vsel %vm767, %v733, 0
        %v800 = vsel %vm768, %v735, 0
        %v801 = vsel %vm769, %v737, 0
        %v802 = vlaneseq
        %v803 = vshrl.u32 %v802, 7
        %v804 = vsub.s32 0, %v803
        %v805 = vrot.slane %v770, %v804
        %v806 = vlaneseq
        %v807 = vshrl.u32 %v806, 7
        %v808 = vsub.s32 1, %v807
        %v809 = vrot.slane %v770, %v808
        %v810 = vlaneseq
        %v811 = vshrl.u32 %v810, 7
        %v812 = vsub.s32 2, %v811
        %v813 = vrot.slane %v770, %v812
        %v814 = vlaneseq
        %v815 = vshrl.u32 %v814, 7
        %v816 = vsub.s32 3, %v815
        %v817 = vrot.slane %v770, %v816
        %v818 = vlaneseq
        %v819 = vshrl.u32 %v818, 7
        %v820 = vsub.s32 4, %v819
        %v821 = vrot.slane %v770, %v820
        %v822 = vlaneseq
        %v823 = vshrl.u32 %v822, 7
        %v824 = vsub.s32 5, %v823
        %v825 = vrot.slane %v770, %v824
        %v826 = vlaneseq
        %v827 = vshrl.u32 %v826, 7
        %v828 = vsub.s32 6, %v827
        %v829 = vrot.slane %v770, %v828
        %v830 = vlaneseq
        %v831 = vshrl.u32 %v830, 7
        %v832 = vsub.s32 7, %v831
        %v833 = vrot.slane %v770, %v832
        %v834 = vlaneseq
        %v835 = vshrl.u32 %v834, 7
        %v836 = vsub.s32 0, %v835
        %v837 = vrot.slane %v771, %v836
        %v838 = vlaneseq
        %v839 = vshrl.u32 %v838, 7
        %v840 = vsub.s32 1, %v839
        %v841 = vrot.slane %v771, %v840
        %v842 = vlaneseq
        %v843 = vshrl.u32 %v842, 7
        %v844 = vsub.s32 2, %v843
        %v845 = vrot.slane %v771, %v844
        %v846 = vlaneseq
        %v847 = vshrl.u32 %v846, 7
        %v848 = vsub.s32 3, %v847
        %v849 = vrot.slane %v771, %v848
        %v850 = vlaneseq
        %v851 = vshrl.u32 %v850, 7
        %v852 = vsub.s32 4, %v851
        %v853 = vrot.slane %v771, %v852
        %v854 = vlaneseq
        %v855 = vshrl.u32 %v854, 7
        %v856 = vsub.s32 5, %v855
        %v857 = vrot.slane %v771, %v856
        %v858 = vlaneseq
        %v859 = vshrl.u32 %v858, 7
        %v860 = vsub.s32 6, %v859
        %v861 = vrot.slane %v771, %v860
        %v862 = vlaneseq
        %v863 = vshrl.u32 %v862, 7
        %v864 = vsub.s32 7, %v863
        %v865 = vrot.slane %v771, %v864
        %v866 = vlaneseq
        %v867 = vshrl.u32 %v866, 7
        %v868 = vsub.s32 0, %v867
        %v869 = vrot.slane %v772, %v868
        %v870 = vlaneseq
        %v871 = vshrl.u32 %v870, 7
        %v872 = vsub.s32 1, %v871
        %v873 = vrot.slane %v772, %v872
        %v874 = vlaneseq
        %v875 = vshrl.u32 %v874, 7
        %v876 = vsub.s32 2, %v875
        %v877 = vrot.slane %v772, %v876
        %v878 = vlaneseq
        %v879 = vshrl.u32 %v878, 7
        %v880 = vsub.s32 3, %v879
        %v881 = vrot.slane %v772, %v880
        %v882 = vlaneseq
        %v883 = vshrl.u32 %v882, 7
        %v884 = vsub.s32 4, %v883
        %v885 = vrot.slane %v772, %v884
        %v886 = vlaneseq
        %v887 = vshrl.u32 %v886, 7
        %v888 = vsub.s32 5, %v887
        %v889 = vrot.slane %v772, %v888
        %v890 = vlaneseq
        %v891 = vshrl.u32 %v890, 7
        %v892 = vsub.s32 6, %v891
        %v893 = vrot.slane %v772, %v892
        %v894 = vlaneseq
        %v895 = vshrl.u32 %v894, 7
        %v896 = vsub.s32 7, %v895
        %v897 = vrot.slane %v772, %v896
        %v898 = vlaneseq
        %v899 = vshrl.u32 %v898, 7
        %v900 = vsub.s32 0, %v899
        %v901 = vrot.slane %v773, %v900
        %v902 = vlaneseq
        %v903 = vshrl.u32 %v902, 7
        %v904 = vsub.s32 1, %v903
        %v905 = vrot.slane %v773, %v904
        %v906 = vlaneseq
        %v907 = vshrl.u32 %v906, 7
        %v908 = vsub.s32 2, %v907
        %v909 = vrot.slane %v773, %v908
        %v910 = vlaneseq
        %v911 = vshrl.u32 %v910, 7
        %v912 = vsub.s32 3, %v911
        %v913 = vrot.slane %v773, %v912
        %v914 = vlaneseq
        %v915 = vshrl.u32 %v914, 7
        %v916 = vsub.s32 4, %v915
        %v917 = vrot.slane %v773, %v916
        %v918 = vlaneseq
        %v919 = vshrl.u32 %v918, 7
        %v920 = vsub.s32 5, %v919
        %v921 = vrot.slane %v773, %v920
        %v922 = vlaneseq
        %v923 = vshrl.u32 %v922, 7
        %v924 = vsub.s32 6, %v923
        %v925 = vrot.slane %v773, %v924
        %v926 = vlaneseq
        %v927 = vshrl.u32 %v926, 7
        %v928 = vsub.s32 7, %v927
        %v929 = vrot.slane %v773, %v928
        %v930 = vlaneseq
        %v931 = vshrl.u32 %v930, 7
        %v932 = vsub.s32 0, %v931
        %v933 = vrot.slane %v774, %v932
        %v934 = vlaneseq
        %v935 = vshrl.u32 %v934, 7
        %v936 = vsub.s32 1, %v935
        %v937 = vrot.slane %v774, %v936
        %v938 = vlaneseq
        %v939 = vshrl.u32 %v938, 7
        %v940 = vsub.s32 2, %v939
        %v941 = vrot.slane %v774, %v940
        %v942 = vlaneseq
        %v943 = vshrl.u32 %v942, 7
        %v944 = vsub.s32 3, %v943
        %v945 = vrot.slane %v774, %v944
        %v946 = vlaneseq
        %v947 = vshrl.u32 %v946, 7
        %v948 = vsub.s32 4, %v947
        %v949 = vrot.slane %v774, %v948
        %v950 = vlaneseq
        %v951 = vshrl.u32 %v950, 7
        %v952 = vsub.s32 5, %v951
        %v953 = vrot.slane %v774, %v952
        %v954 = vlaneseq
        %v955 = vshrl.u32 %v954, 7
        %v956 = vsub.s32 6, %v955
        %v957 = vrot.slane %v774, %v956
        %v958 = vlaneseq
        %v959 = vshrl.u32 %v958, 7
        %v960 = vsub.s32 7, %v959
        %v961 = vrot.slane %v774, %v960
        %v962 = vlaneseq
        %v963 = vshrl.u32 %v962, 7
        %v964 = vsub.s32 0, %v963
        %v965 = vrot.slane %v775, %v964
        %v966 = vlaneseq
        %v967 = vshrl.u32 %v966, 7
        %v968 = vsub.s32 1, %v967
        %v969 = vrot.slane %v775, %v968
        %v970 = vlaneseq
        %v971 = vshrl.u32 %v970, 7
        %v972 = vsub.s32 2, %v971
        %v973 = vrot.slane %v775, %v972
        %v974 = vlaneseq
        %v975 = vshrl.u32 %v974, 7
        %v976 = vsub.s32 3, %v975
        %v977 = vrot.slane %v775, %v976
        %v978 = vlaneseq
        %v979 = vshrl.u32 %v978, 7
        %v980 = vsub.s32 4, %v979
        %v981 = vrot.slane %v775, %v980
        %v982 = vlaneseq
        %v983 = vshrl.u32 %v982, 7
        %v984 = vsub.s32 5, %v983
        %v985 = vrot.slane %v775, %v984
        %v986 = vlaneseq
        %v987 = vshrl.u32 %v986, 7
        %v988 = vsub.s32 6, %v987
        %v989 = vrot.slane %v775, %v988
        %v990 = vlaneseq
        %v991 = vshrl.u32 %v990, 7
        %v992 = vsub.s32 7, %v991
        %v993 = vrot.slane %v775, %v992
        %v994 = vlaneseq
        %v995 = vshrl.u32 %v994, 7
        %v996 = vsub.s32 0, %v995
        %v997 = vrot.slane %v776, %v996
        %v998 = vlaneseq
        %v999 = vshrl.u32 %v998, 7
        %v1000 = vsub.s32 1, %v999
        %v1001 = vrot.slane %v776, %v1000
        %v1002 = vlaneseq
        %v1003 = vshrl.u32 %v1002, 7
        %v1004 = vsub.s32 2, %v1003
        %v1005 = vrot.slane %v776, %v1004
        %v1006 = vlaneseq
        %v1007 = vshrl.u32 %v1006, 7
        %v1008 = vsub.s32 3, %v1007
        %v1009 = vrot.slane %v776, %v1008
        %v1010 = vlaneseq
        %v1011 = vshrl.u32 %v1010, 7
        %v1012 = vsub.s32 4, %v1011
        %v1013 = vrot.slane %v776, %v1012
        %v1014 = vlaneseq
        %v1015 = vshrl.u32 %v1014, 7
        %v1016 = vsub.s32 5, %v1015
        %v1017 = vrot.slane %v776, %v1016
        %v1018 = vlaneseq
        %v1019 = vshrl.u32 %v1018, 7
        %v1020 = vsub.s32 6, %v1019
        %v1021 = vrot.slane %v776, %v1020
        %v1022 = vlaneseq
        %v1023 = vshrl.u32 %v1022, 7
        %v1024 = vsub.s32 7, %v1023
        %v1025 = vrot.slane %v776, %v1024
        %v1026 = vlaneseq
        %v1027 = vshrl.u32 %v1026, 7
        %v1028 = vsub.s32 0, %v1027
        %v1029 = vrot.slane %v777, %v1028
        %v1030 = vlaneseq
        %v1031 = vshrl.u32 %v1030, 7
        %v1032 = vsub.s32 1, %v1031
        %v1033 = vrot.slane %v777, %v1032
        %v1034 = vlaneseq
        %v1035 = vshrl.u32 %v1034, 7
        %v1036 = vsub.s32 2, %v1035
        %v1037 = vrot.slane %v777, %v1036
        %v1038 = vlaneseq
        %v1039 = vshrl.u32 %v1038, 7
        %v1040 = vsub.s32 3, %v1039
        %v1041 = vrot.slane %v777, %v1040
        %v1042 = vlaneseq
        %v1043 = vshrl.u32 %v1042, 7
        %v1044 = vsub.s32 4, %v1043
        %v1045 = vrot.slane %v777, %v1044
        %v1046 = vlaneseq
        %v1047 = vshrl.u32 %v1046, 7
        %v1048 = vsub.s32 5, %v1047
        %v1049 = vrot.slane %v777, %v1048
        %v1050 = vlaneseq
        %v1051 = vshrl.u32 %v1050, 7
        %v1052 = vsub.s32 6, %v1051
        %v1053 = vrot.slane %v777, %v1052
        %v1054 = vlaneseq
        %v1055 = vshrl.u32 %v1054, 7
        %v1056 = vsub.s32 7, %v1055
        %v1057 = vrot.slane %v777, %v1056
        %v1058 = vlaneseq
        %v1059 = vshrl.u32 %v1058, 7
        %v1060 = vsub.s32 0, %v1059
        %v1061 = vrot.slane %v778, %v1060
        %v1062 = vlaneseq
        %v1063 = vshrl.u32 %v1062, 7
        %v1064 = vsub.s32 1, %v1063
        %v1065 = vrot.slane %v778, %v1064
        %v1066 = vlaneseq
        %v1067 = vshrl.u32 %v1066, 7
        %v1068 = vsub.s32 2, %v1067
        %v1069 = vrot.slane %v778, %v1068
        %v1070 = vlaneseq
        %v1071 = vshrl.u32 %v1070, 7
        %v1072 = vsub.s32 3, %v1071
        %v1073 = vrot.slane %v778, %v1072
        %v1074 = vlaneseq
        %v1075 = vshrl.u32 %v1074, 7
        %v1076 = vsub.s32 4, %v1075
        %v1077 = vrot.slane %v778, %v1076
        %v1078 = vlaneseq
        %v1079 = vshrl.u32 %v1078, 7
        %v1080 = vsub.s32 5, %v1079
        %v1081 = vrot.slane %v778, %v1080
        %v1082 = vlaneseq
        %v1083 = vshrl.u32 %v1082, 7
        %v1084 = vsub.s32 6, %v1083
        %v1085 = vrot.slane %v778, %v1084
        %v1086 = vlaneseq
        %v1087 = vshrl.u32 %v1086, 7
        %v1088 = vsub.s32 7, %v1087
        %v1089 = vrot.slane %v778, %v1088
        %v1090 = vlaneseq
        %v1091 = vshrl.u32 %v1090, 7
        %v1092 = vsub.s32 0, %v1091
        %v1093 = vrot.slane %v779, %v1092
        %v1094 = vlaneseq
        %v1095 = vshrl.u32 %v1094, 7
        %v1096 = vsub.s32 1, %v1095
        %v1097 = vrot.slane %v779, %v1096
        %v1098 = vlaneseq
        %v1099 = vshrl.u32 %v1098, 7
        %v1100 = vsub.s32 2, %v1099
        %v1101 = vrot.slane %v779, %v1100
        %v1102 = vlaneseq
        %v1103 = vshrl.u32 %v1102, 7
        %v1104 = vsub.s32 3, %v1103
        %v1105 = vrot.slane %v779, %v1104
        %v1106 = vlaneseq
        %v1107 = vshrl.u32 %v1106, 7
        %v1108 = vsub.s32 4, %v1107
        %v1109 = vrot.slane %v779, %v1108
        %v1110 = vlaneseq
        %v1111 = vshrl.u32 %v1110, 7
        %v1112 = vsub.s32 5, %v1111
        %v1113 = vrot.slane %v779, %v1112
        %v1114 = vlaneseq
        %v1115 = vshrl.u32 %v1114, 7
        %v1116 = vsub.s32 6, %v1115
        %v1117 = vrot.slane %v779, %v1116
        %v1118 = vlaneseq
        %v1119 = vshrl.u32 %v1118, 7
        %v1120 = vsub.s32 7, %v1119
        %v1121 = vrot.slane %v779, %v1120
        %v1122 = vlaneseq
        %v1123 = vshrl.u32 %v1122, 7
        %v1124 = vsub.s32 0, %v1123
        %v1125 = vrot.slane %v780, %v1124
        %v1126 = vlaneseq
        %v1127 = vshrl.u32 %v1126, 7
        %v1128 = vsub.s32 1, %v1127
        %v1129 = vrot.slane %v780, %v1128
        %v1130 = vlaneseq
        %v1131 = vshrl.u32 %v1130, 7
        %v1132 = vsub.s32 2, %v1131
        %v1133 = vrot.slane %v780, %v1132
        %v1134 = vlaneseq
        %v1135 = vshrl.u32 %v1134, 7
        %v1136 = vsub.s32 3, %v1135
        %v1137 = vrot.slane %v780, %v1136
        %v1138 = vlaneseq
        %v1139 = vshrl.u32 %v1138, 7
        %v1140 = vsub.s32 4, %v1139
        %v1141 = vrot.slane %v780, %v1140
        %v1142 = vlaneseq
        %v1143 = vshrl.u32 %v1142, 7
        %v1144 = vsub.s32 5, %v1143
        %v1145 = vrot.slane %v780, %v1144
        %v1146 = vlaneseq
        %v1147 = vshrl.u32 %v1146, 7
        %v1148 = vsub.s32 6, %v1147
        %v1149 = vrot.slane %v780, %v1148
        %v1150 = vlaneseq
        %v1151 = vshrl.u32 %v1150, 7
        %v1152 = vsub.s32 7, %v1151
        %v1153 = vrot.slane %v780, %v1152
        %v1154 = vlaneseq
        %v1155 = vshrl.u32 %v1154, 7
        %v1156 = vsub.s32 0, %v1155
        %v1157 = vrot.slane %v781, %v1156
        %v1158 = vlaneseq
        %v1159 = vshrl.u32 %v1158, 7
        %v1160 = vsub.s32 1, %v1159
        %v1161 = vrot.slane %v781, %v1160
        %v1162 = vlaneseq
        %v1163 = vshrl.u32 %v1162, 7
        %v1164 = vsub.s32 2, %v1163
        %v1165 = vrot.slane %v781, %v1164
        %v1166 = vlaneseq
        %v1167 = vshrl.u32 %v1166, 7
        %v1168 = vsub.s32 3, %v1167
        %v1169 = vrot.slane %v781, %v1168
        %v1170 = vlaneseq
        %v1171 = vshrl.u32 %v1170, 7
        %v1172 = vsub.s32 4, %v1171
        %v1173 = vrot.slane %v781, %v1172
        %v1174 = vlaneseq
        %v1175 = vshrl.u32 %v1174, 7
        %v1176 = vsub.s32 5, %v1175
        %v1177 = vrot.slane %v781, %v1176
        %v1178 = vlaneseq
        %v1179 = vshrl.u32 %v1178, 7
        %v1180 = vsub.s32 6, %v1179
        %v1181 = vrot.slane %v781, %v1180
        %v1182 = vlaneseq
        %v1183 = vshrl.u32 %v1182, 7
        %v1184 = vsub.s32 7, %v1183
        %v1185 = vrot.slane %v781, %v1184
        %v1186 = vlaneseq
        %v1187 = vshrl.u32 %v1186, 7
        %v1188 = vsub.s32 0, %v1187
        %v1189 = vrot.slane %v782, %v1188
        %v1190 = vlaneseq
        %v1191 = vshrl.u32 %v1190, 7
        %v1192 = vsub.s32 1, %v1191
        %v1193 = vrot.slane %v782, %v1192
        %v1194 = vlaneseq
        %v1195 = vshrl.u32 %v1194, 7
        %v1196 = vsub.s32 2, %v1195
        %v1197 = vrot.slane %v782, %v1196
        %v1198 = vlaneseq
        %v1199 = vshrl.u32 %v1198, 7
        %v1200 = vsub.s32 3, %v1199
        %v1201 = vrot.slane %v782, %v1200
        %v1202 = vlaneseq
        %v1203 = vshrl.u32 %v1202, 7
        %v1204 = vsub.s32 4, %v1203
        %v1205 = vrot.slane %v782, %v1204
        %v1206 = vlaneseq
        %v1207 = vshrl.u32 %v1206, 7
        %v1208 = vsub.s32 5, %v1207
        %v1209 = vrot.slane %v782, %v1208
        %v1210 = vlaneseq
        %v1211 = vshrl.u32 %v1210, 7
        %v1212 = vsub.s32 6, %v1211
        %v1213 = vrot.slane %v782, %v1212
        %v1214 = vlaneseq
        %v1215 = vshrl.u32 %v1214, 7
        %v1216 = vsub.s32 7, %v1215
        %v1217 = vrot.slane %v782, %v1216
        %v1218 = vlaneseq
        %v1219 = vshrl.u32 %v1218, 7
        %v1220 = vsub.s32 0, %v1219
        %v1221 = vrot.slane %v783, %v1220
        %v1222 = vlaneseq
        %v1223 = vshrl.u32 %v1222, 7
        %v1224 = vsub.s32 1, %v1223
        %v1225 = vrot.slane %v783, %v1224
        %v1226 = vlaneseq
        %v1227 = vshrl.u32 %v1226, 7
        %v1228 = vsub.s32 2, %v1227
        %v1229 = vrot.slane %v783, %v1228
        %v1230 = vlaneseq
        %v1231 = vshrl.u32 %v1230, 7
        %v1232 = vsub.s32 3, %v1231
        %v1233 = vrot.slane %v783, %v1232
        %v1234 = vlaneseq
        %v1235 = vshrl.u32 %v1234, 7
        %v1236 = vsub.s32 4, %v1235
        %v1237 = vrot.slane %v783, %v1236
        %v1238 = vlaneseq
        %v1239 = vshrl.u32 %v1238, 7
        %v1240 = vsub.s32 5, %v1239
        %v1241 = vrot.slane %v783, %v1240
        %v1242 = vlaneseq
        %v1243 = vshrl.u32 %v1242, 7
        %v1244 = vsub.s32 6, %v1243
        %v1245 = vrot.slane %v783, %v1244
        %v1246 = vlaneseq
        %v1247 = vshrl.u32 %v1246, 7
        %v1248 = vsub.s32 7, %v1247
        %v1249 = vrot.slane %v783, %v1248
        %v1250 = vlaneseq
        %v1251 = vshrl.u32 %v1250, 7
        %v1252 = vsub.s32 0, %v1251
        %v1253 = vrot.slane %v784, %v1252
        %v1254 = vlaneseq
        %v1255 = vshrl.u32 %v1254, 7
        %v1256 = vsub.s32 1, %v1255
        %v1257 = vrot.slane %v784, %v1256
        %v1258 = vlaneseq
        %v1259 = vshrl.u32 %v1258, 7
        %v1260 = vsub.s32 2, %v1259
        %v1261 = vrot.slane %v784, %v1260
        %v1262 = vlaneseq
        %v1263 = vshrl.u32 %v1262, 7
        %v1264 = vsub.s32 3, %v1263
        %v1265 = vrot.slane %v784, %v1264
        %v1266 = vlaneseq
        %v1267 = vshrl.u32 %v1266, 7
        %v1268 = vsub.s32 4, %v1267
        %v1269 = vrot.slane %v784, %v1268
        %v1270 = vlaneseq
        %v1271 = vshrl.u32 %v1270, 7
        %v1272 = vsub.s32 5, %v1271
        %v1273 = vrot.slane %v784, %v1272
        %v1274 = vlaneseq
        %v1275 = vshrl.u32 %v1274, 7
        %v1276 = vsub.s32 6, %v1275
        %v1277 = vrot.slane %v784, %v1276
        %v1278 = vlaneseq
        %v1279 = vshrl.u32 %v1278, 7
        %v1280 = vsub.s32 7, %v1279
        %v1281 = vrot.slane %v784, %v1280
        %v1282 = vlaneseq
        %v1283 = vshrl.u32 %v1282, 7
        %v1284 = vsub.s32 0, %v1283
        %v1285 = vrot.slane %v785, %v1284
        %v1286 = vlaneseq
        %v1287 = vshrl.u32 %v1286, 7
        %v1288 = vsub.s32 1, %v1287
        %v1289 = vrot.slane %v785, %v1288
        %v1290 = vlaneseq
        %v1291 = vshrl.u32 %v1290, 7
        %v1292 = vsub.s32 2, %v1291
        %v1293 = vrot.slane %v785, %v1292
        %v1294 = vlaneseq
        %v1295 = vshrl.u32 %v1294, 7
        %v1296 = vsub.s32 3, %v1295
        %v1297 = vrot.slane %v785, %v1296
        %v1298 = vlaneseq
        %v1299 = vshrl.u32 %v1298, 7
        %v1300 = vsub.s32 4, %v1299
        %v1301 = vrot.slane %v785, %v1300
        %v1302 = vlaneseq
        %v1303 = vshrl.u32 %v1302, 7
        %v1304 = vsub.s32 5, %v1303
        %v1305 = vrot.slane %v785, %v1304
        %v1306 = vlaneseq
        %v1307 = vshrl.u32 %v1306, 7
        %v1308 = vsub.s32 6, %v1307
        %v1309 = vrot.slane %v785, %v1308
        %v1310 = vlaneseq
        %v1311 = vshrl.u32 %v1310, 7
        %v1312 = vsub.s32 7, %v1311
        %v1313 = vrot.slane %v785, %v1312
        %v1314 = vlaneseq
        %v1315 = vshrl.u32 %v1314, 7
        %v1316 = vsub.s32 0, %v1315
        %v1317 = vrot.slane %v786, %v1316
        %v1318 = vlaneseq
        %v1319 = vshrl.u32 %v1318, 7
        %v1320 = vsub.s32 1, %v1319
        %v1321 = vrot.slane %v786, %v1320
        %v1322 = vlaneseq
        %v1323 = vshrl.u32 %v1322, 7
        %v1324 = vsub.s32 2, %v1323
        %v1325 = vrot.slane %v786, %v1324
        %v1326 = vlaneseq
        %v1327 = vshrl.u32 %v1326, 7
        %v1328 = vsub.s32 3, %v1327
        %v1329 = vrot.slane %v786, %v1328
        %v1330 = vlaneseq
        %v1331 = vshrl.u32 %v1330, 7
        %v1332 = vsub.s32 4, %v1331
        %v1333 = vrot.slane %v786, %v1332
        %v1334 = vlaneseq
        %v1335 = vshrl.u32 %v1334, 7
        %v1336 = vsub.s32 5, %v1335
        %v1337 = vrot.slane %v786, %v1336
        %v1338 = vlaneseq
        %v1339 = vshrl.u32 %v1338, 7
        %v1340 = vsub.s32 6, %v1339
        %v1341 = vrot.slane %v786, %v1340
        %v1342 = vlaneseq
        %v1343 = vshrl.u32 %v1342, 7
        %v1344 = vsub.s32 7, %v1343
        %v1345 = vrot.slane %v786, %v1344
        %v1346 = vlaneseq
        %v1347 = vshrl.u32 %v1346, 7
        %v1348 = vsub.s32 0, %v1347
        %v1349 = vrot.slane %v787, %v1348
        %v1350 = vlaneseq
        %v1351 = vshrl.u32 %v1350, 7
        %v1352 = vsub.s32 1, %v1351
        %v1353 = vrot.slane %v787, %v1352
        %v1354 = vlaneseq
        %v1355 = vshrl.u32 %v1354, 7
        %v1356 = vsub.s32 2, %v1355
        %v1357 = vrot.slane %v787, %v1356
        %v1358 = vlaneseq
        %v1359 = vshrl.u32 %v1358, 7
        %v1360 = vsub.s32 3, %v1359
        %v1361 = vrot.slane %v787, %v1360
        %v1362 = vlaneseq
        %v1363 = vshrl.u32 %v1362, 7
        %v1364 = vsub.s32 4, %v1363
        %v1365 = vrot.slane %v787, %v1364
        %v1366 = vlaneseq
        %v1367 = vshrl.u32 %v1366, 7
        %v1368 = vsub.s32 5, %v1367
        %v1369 = vrot.slane %v787, %v1368
        %v1370 = vlaneseq
        %v1371 = vshrl.u32 %v1370, 7
        %v1372 = vsub.s32 6, %v1371
        %v1373 = vrot.slane %v787, %v1372
        %v1374 = vlaneseq
        %v1375 = vshrl.u32 %v1374, 7
        %v1376 = vsub.s32 7, %v1375
        %v1377 = vrot.slane %v787, %v1376
        %v1378 = vlaneseq
        %v1379 = vshrl.u32 %v1378, 7
        %v1380 = vsub.s32 0, %v1379
        %v1381 = vrot.slane %v788, %v1380
        %v1382 = vlaneseq
        %v1383 = vshrl.u32 %v1382, 7
        %v1384 = vsub.s32 1, %v1383
        %v1385 = vrot.slane %v788, %v1384
        %v1386 = vlaneseq
        %v1387 = vshrl.u32 %v1386, 7
        %v1388 = vsub.s32 2, %v1387
        %v1389 = vrot.slane %v788, %v1388
        %v1390 = vlaneseq
        %v1391 = vshrl.u32 %v1390, 7
        %v1392 = vsub.s32 3, %v1391
        %v1393 = vrot.slane %v788, %v1392
        %v1394 = vlaneseq
        %v1395 = vshrl.u32 %v1394, 7
        %v1396 = vsub.s32 4, %v1395
        %v1397 = vrot.slane %v788, %v1396
        %v1398 = vlaneseq
        %v1399 = vshrl.u32 %v1398, 7
        %v1400 = vsub.s32 5, %v1399
        %v1401 = vrot.slane %v788, %v1400
        %v1402 = vlaneseq
        %v1403 = vshrl.u32 %v1402, 7
        %v1404 = vsub.s32 6, %v1403
        %v1405 = vrot.slane %v788, %v1404
        %v1406 = vlaneseq
        %v1407 = vshrl.u32 %v1406, 7
        %v1408 = vsub.s32 7, %v1407
        %v1409 = vrot.slane %v788, %v1408
        %v1410 = vlaneseq
        %v1411 = vshrl.u32 %v1410, 7
        %v1412 = vsub.s32 0, %v1411
        %v1413 = vrot.slane %v789, %v1412
        %v1414 = vlaneseq
        %v1415 = vshrl.u32 %v1414, 7
        %v1416 = vsub.s32 1, %v1415
        %v1417 = vrot.slane %v789, %v1416
        %v1418 = vlaneseq
        %v1419 = vshrl.u32 %v1418, 7
        %v1420 = vsub.s32 2, %v1419
        %v1421 = vrot.slane %v789, %v1420
        %v1422 = vlaneseq
        %v1423 = vshrl.u32 %v1422, 7
        %v1424 = vsub.s32 3, %v1423
        %v1425 = vrot.slane %v789, %v1424
        %v1426 = vlaneseq
        %v1427 = vshrl.u32 %v1426, 7
        %v1428 = vsub.s32 4, %v1427
        %v1429 = vrot.slane %v789, %v1428
        %v1430 = vlaneseq
        %v1431 = vshrl.u32 %v1430, 7
        %v1432 = vsub.s32 5, %v1431
        %v1433 = vrot.slane %v789, %v1432
        %v1434 = vlaneseq
        %v1435 = vshrl.u32 %v1434, 7
        %v1436 = vsub.s32 6, %v1435
        %v1437 = vrot.slane %v789, %v1436
        %v1438 = vlaneseq
        %v1439 = vshrl.u32 %v1438, 7
        %v1440 = vsub.s32 7, %v1439
        %v1441 = vrot.slane %v789, %v1440
        %v1442 = vlaneseq
        %v1443 = vshrl.u32 %v1442, 7
        %v1444 = vsub.s32 0, %v1443
        %v1445 = vrot.slane %v790, %v1444
        %v1446 = vlaneseq
        %v1447 = vshrl.u32 %v1446, 7
        %v1448 = vsub.s32 1, %v1447
        %v1449 = vrot.slane %v790, %v1448
        %v1450 = vlaneseq
        %v1451 = vshrl.u32 %v1450, 7
        %v1452 = vsub.s32 2, %v1451
        %v1453 = vrot.slane %v790, %v1452
        %v1454 = vlaneseq
        %v1455 = vshrl.u32 %v1454, 7
        %v1456 = vsub.s32 3, %v1455
        %v1457 = vrot.slane %v790, %v1456
        %v1458 = vlaneseq
        %v1459 = vshrl.u32 %v1458, 7
        %v1460 = vsub.s32 4, %v1459
        %v1461 = vrot.slane %v790, %v1460
        %v1462 = vlaneseq
        %v1463 = vshrl.u32 %v1462, 7
        %v1464 = vsub.s32 5, %v1463
        %v1465 = vrot.slane %v790, %v1464
        %v1466 = vlaneseq
        %v1467 = vshrl.u32 %v1466, 7
        %v1468 = vsub.s32 6, %v1467
        %v1469 = vrot.slane %v790, %v1468
        %v1470 = vlaneseq
        %v1471 = vshrl.u32 %v1470, 7
        %v1472 = vsub.s32 7, %v1471
        %v1473 = vrot.slane %v790, %v1472
        %v1474 = vlaneseq
        %v1475 = vshrl.u32 %v1474, 7
        %v1476 = vsub.s32 0, %v1475
        %v1477 = vrot.slane %v791, %v1476
        %v1478 = vlaneseq
        %v1479 = vshrl.u32 %v1478, 7
        %v1480 = vsub.s32 1, %v1479
        %v1481 = vrot.slane %v791, %v1480
        %v1482 = vlaneseq
        %v1483 = vshrl.u32 %v1482, 7
        %v1484 = vsub.s32 2, %v1483
        %v1485 = vrot.slane %v791, %v1484
        %v1486 = vlaneseq
        %v1487 = vshrl.u32 %v1486, 7
        %v1488 = vsub.s32 3, %v1487
        %v1489 = vrot.slane %v791, %v1488
        %v1490 = vlaneseq
        %v1491 = vshrl.u32 %v1490, 7
        %v1492 = vsub.s32 4, %v1491
        %v1493 = vrot.slane %v791, %v1492
        %v1494 = vlaneseq
        %v1495 = vshrl.u32 %v1494, 7
        %v1496 = vsub.s32 5, %v1495
        %v1497 = vrot.slane %v791, %v1496
        %v1498 = vlaneseq
        %v1499 = vshrl.u32 %v1498, 7
        %v1500 = vsub.s32 6, %v1499
        %v1501 = vrot.slane %v791, %v1500
        %v1502 = vlaneseq
        %v1503 = vshrl.u32 %v1502, 7
        %v1504 = vsub.s32 7, %v1503
        %v1505 = vrot.slane %v791, %v1504
        %v1506 = vlaneseq
        %v1507 = vshrl.u32 %v1506, 7
        %v1508 = vsub.s32 0, %v1507
        %v1509 = vrot.slane %v792, %v1508
        %v1510 = vlaneseq
        %v1511 = vshrl.u32 %v1510, 7
        %v1512 = vsub.s32 1, %v1511
        %v1513 = vrot.slane %v792, %v1512
        %v1514 = vlaneseq
        %v1515 = vshrl.u32 %v1514, 7
        %v1516 = vsub.s32 2, %v1515
        %v1517 = vrot.slane %v792, %v1516
        %v1518 = vlaneseq
        %v1519 = vshrl.u32 %v1518, 7
        %v1520 = vsub.s32 3, %v1519
        %v1521 = vrot.slane %v792, %v1520
        %v1522 = vlaneseq
        %v1523 = vshrl.u32 %v1522, 7
        %v1524 = vsub.s32 4, %v1523
        %v1525 = vrot.slane %v792, %v1524
        %v1526 = vlaneseq
        %v1527 = vshrl.u32 %v1526, 7
        %v1528 = vsub.s32 5, %v1527
        %v1529 = vrot.slane %v792, %v1528
        %v1530 = vlaneseq
        %v1531 = vshrl.u32 %v1530, 7
        %v1532 = vsub.s32 6, %v1531
        %v1533 = vrot.slane %v792, %v1532
        %v1534 = vlaneseq
        %v1535 = vshrl.u32 %v1534, 7
        %v1536 = vsub.s32 7, %v1535
        %v1537 = vrot.slane %v792, %v1536
        %v1538 = vlaneseq
        %v1539 = vshrl.u32 %v1538, 7
        %v1540 = vsub.s32 0, %v1539
        %v1541 = vrot.slane %v793, %v1540
        %v1542 = vlaneseq
        %v1543 = vshrl.u32 %v1542, 7
        %v1544 = vsub.s32 1, %v1543
        %v1545 = vrot.slane %v793, %v1544
        %v1546 = vlaneseq
        %v1547 = vshrl.u32 %v1546, 7
        %v1548 = vsub.s32 2, %v1547
        %v1549 = vrot.slane %v793, %v1548
        %v1550 = vlaneseq
        %v1551 = vshrl.u32 %v1550, 7
        %v1552 = vsub.s32 3, %v1551
        %v1553 = vrot.slane %v793, %v1552
        %v1554 = vlaneseq
        %v1555 = vshrl.u32 %v1554, 7
        %v1556 = vsub.s32 4, %v1555
        %v1557 = vrot.slane %v793, %v1556
        %v1558 = vlaneseq
        %v1559 = vshrl.u32 %v1558, 7
        %v1560 = vsub.s32 5, %v1559
        %v1561 = vrot.slane %v793, %v1560
        %v1562 = vlaneseq
        %v1563 = vshrl.u32 %v1562, 7
        %v1564 = vsub.s32 6, %v1563
        %v1565 = vrot.slane %v793, %v1564
        %v1566 = vlaneseq
        %v1567 = vshrl.u32 %v1566, 7
        %v1568 = vsub.s32 7, %v1567
        %v1569 = vrot.slane %v793, %v1568
        %v1570 = vlaneseq
        %v1571 = vshrl.u32 %v1570, 7
        %v1572 = vsub.s32 0, %v1571
        %v1573 = vrot.slane %v794, %v1572
        %v1574 = vlaneseq
        %v1575 = vshrl.u32 %v1574, 7
        %v1576 = vsub.s32 1, %v1575
        %v1577 = vrot.slane %v794, %v1576
        %v1578 = vlaneseq
        %v1579 = vshrl.u32 %v1578, 7
        %v1580 = vsub.s32 2, %v1579
        %v1581 = vrot.slane %v794, %v1580
        %v1582 = vlaneseq
        %v1583 = vshrl.u32 %v1582, 7
        %v1584 = vsub.s32 3, %v1583
        %v1585 = vrot.slane %v794, %v1584
        %v1586 = vlaneseq
        %v1587 = vshrl.u32 %v1586, 7
        %v1588 = vsub.s32 4, %v1587
        %v1589 = vrot.slane %v794, %v1588
        %v1590 = vlaneseq
        %v1591 = vshrl.u32 %v1590, 7
        %v1592 = vsub.s32 5, %v1591
        %v1593 = vrot.slane %v794, %v1592
        %v1594 = vlaneseq
        %v1595 = vshrl.u32 %v1594, 7
        %v1596 = vsub.s32 6, %v1595
        %v1597 = vrot.slane %v794, %v1596
        %v1598 = vlaneseq
        %v1599 = vshrl.u32 %v1598, 7
        %v1600 = vsub.s32 7, %v1599
        %v1601 = vrot.slane %v794, %v1600
        %v1602 = vlaneseq
        %v1603 = vshrl.u32 %v1602, 7
        %v1604 = vsub.s32 0, %v1603
        %v1605 = vrot.slane %v795, %v1604
        %v1606 = vlaneseq
        %v1607 = vshrl.u32 %v1606, 7
        %v1608 = vsub.s32 1, %v1607
        %v1609 = vrot.slane %v795, %v1608
        %v1610 = vlaneseq
        %v1611 = vshrl.u32 %v1610, 7
        %v1612 = vsub.s32 2, %v1611
        %v1613 = vrot.slane %v795, %v1612
        %v1614 = vlaneseq
        %v1615 = vshrl.u32 %v1614, 7
        %v1616 = vsub.s32 3, %v1615
        %v1617 = vrot.slane %v795, %v1616
        %v1618 = vlaneseq
        %v1619 = vshrl.u32 %v1618, 7
        %v1620 = vsub.s32 4, %v1619
        %v1621 = vrot.slane %v795, %v1620
        %v1622 = vlaneseq
        %v1623 = vshrl.u32 %v1622, 7
        %v1624 = vsub.s32 5, %v1623
        %v1625 = vrot.slane %v795, %v1624
        %v1626 = vlaneseq
        %v1627 = vshrl.u32 %v1626, 7
        %v1628 = vsub.s32 6, %v1627
        %v1629 = vrot.slane %v795, %v1628
        %v1630 = vlaneseq
        %v1631 = vshrl.u32 %v1630, 7
        %v1632 = vsub.s32 7, %v1631
        %v1633 = vrot.slane %v795, %v1632
        %v1634 = vlaneseq
        %v1635 = vshrl.u32 %v1634, 7
        %v1636 = vsub.s32 0, %v1635
        %v1637 = vrot.slane %v796, %v1636
        %v1638 = vlaneseq
        %v1639 = vshrl.u32 %v1638, 7
        %v1640 = vsub.s32 1, %v1639
        %v1641 = vrot.slane %v796, %v1640
        %v1642 = vlaneseq
        %v1643 = vshrl.u32 %v1642, 7
        %v1644 = vsub.s32 2, %v1643
        %v1645 = vrot.slane %v796, %v1644
        %v1646 = vlaneseq
        %v1647 = vshrl.u32 %v1646, 7
        %v1648 = vsub.s32 3, %v1647
        %v1649 = vrot.slane %v796, %v1648
        %v1650 = vlaneseq
        %v1651 = vshrl.u32 %v1650, 7
        %v1652 = vsub.s32 4, %v1651
        %v1653 = vrot.slane %v796, %v1652
        %v1654 = vlaneseq
        %v1655 = vshrl.u32 %v1654, 7
        %v1656 = vsub.s32 5, %v1655
        %v1657 = vrot.slane %v796, %v1656
        %v1658 = vlaneseq
        %v1659 = vshrl.u32 %v1658, 7
        %v1660 = vsub.s32 6, %v1659
        %v1661 = vrot.slane %v796, %v1660
        %v1662 = vlaneseq
        %v1663 = vshrl.u32 %v1662, 7
        %v1664 = vsub.s32 7, %v1663
        %v1665 = vrot.slane %v796, %v1664
        %v1666 = vlaneseq
        %v1667 = vshrl.u32 %v1666, 7
        %v1668 = vsub.s32 0, %v1667
        %v1669 = vrot.slane %v797, %v1668
        %v1670 = vlaneseq
        %v1671 = vshrl.u32 %v1670, 7
        %v1672 = vsub.s32 1, %v1671
        %v1673 = vrot.slane %v797, %v1672
        %v1674 = vlaneseq
        %v1675 = vshrl.u32 %v1674, 7
        %v1676 = vsub.s32 2, %v1675
        %v1677 = vrot.slane %v797, %v1676
        %v1678 = vlaneseq
        %v1679 = vshrl.u32 %v1678, 7
        %v1680 = vsub.s32 3, %v1679
        %v1681 = vrot.slane %v797, %v1680
        %v1682 = vlaneseq
        %v1683 = vshrl.u32 %v1682, 7
        %v1684 = vsub.s32 4, %v1683
        %v1685 = vrot.slane %v797, %v1684
        %v1686 = vlaneseq
        %v1687 = vshrl.u32 %v1686, 7
        %v1688 = vsub.s32 5, %v1687
        %v1689 = vrot.slane %v797, %v1688
        %v1690 = vlaneseq
        %v1691 = vshrl.u32 %v1690, 7
        %v1692 = vsub.s32 6, %v1691
        %v1693 = vrot.slane %v797, %v1692
        %v1694 = vlaneseq
        %v1695 = vshrl.u32 %v1694, 7
        %v1696 = vsub.s32 7, %v1695
        %v1697 = vrot.slane %v797, %v1696
        %v1698 = vlaneseq
        %v1699 = vshrl.u32 %v1698, 7
        %v1700 = vsub.s32 0, %v1699
        %v1701 = vrot.slane %v798, %v1700
        %v1702 = vlaneseq
        %v1703 = vshrl.u32 %v1702, 7
        %v1704 = vsub.s32 1, %v1703
        %v1705 = vrot.slane %v798, %v1704
        %v1706 = vlaneseq
        %v1707 = vshrl.u32 %v1706, 7
        %v1708 = vsub.s32 2, %v1707
        %v1709 = vrot.slane %v798, %v1708
        %v1710 = vlaneseq
        %v1711 = vshrl.u32 %v1710, 7
        %v1712 = vsub.s32 3, %v1711
        %v1713 = vrot.slane %v798, %v1712
        %v1714 = vlaneseq
        %v1715 = vshrl.u32 %v1714, 7
        %v1716 = vsub.s32 4, %v1715
        %v1717 = vrot.slane %v798, %v1716
        %v1718 = vlaneseq
        %v1719 = vshrl.u32 %v1718, 7
        %v1720 = vsub.s32 5, %v1719
        %v1721 = vrot.slane %v798, %v1720
        %v1722 = vlaneseq
        %v1723 = vshrl.u32 %v1722, 7
        %v1724 = vsub.s32 6, %v1723
        %v1725 = vrot.slane %v798, %v1724
        %v1726 = vlaneseq
        %v1727 = vshrl.u32 %v1726, 7
        %v1728 = vsub.s32 7, %v1727
        %v1729 = vrot.slane %v798, %v1728
        %v1730 = vlaneseq
        %v1731 = vshrl.u32 %v1730, 7
        %v1732 = vsub.s32 0, %v1731
        %v1733 = vrot.slane %v799, %v1732
        %v1734 = vlaneseq
        %v1735 = vshrl.u32 %v1734, 7
        %v1736 = vsub.s32 1, %v1735
        %v1737 = vrot.slane %v799, %v1736
        %v1738 = vlaneseq
        %v1739 = vshrl.u32 %v1738, 7
        %v1740 = vsub.s32 2, %v1739
        %v1741 = vrot.slane %v799, %v1740
        %v1742 = vlaneseq
        %v1743 = vshrl.u32 %v1742, 7
        %v1744 = vsub.s32 3, %v1743
        %v1745 = vrot.slane %v799, %v1744
        %v1746 = vlaneseq
        %v1747 = vshrl.u32 %v1746, 7
        %v1748 = vsub.s32 4, %v1747
        %v1749 = vrot.slane %v799, %v1748
        %v1750 = vlaneseq
        %v1751 = vshrl.u32 %v1750, 7
        %v1752 = vsub.s32 5, %v1751
        %v1753 = vrot.slane %v799, %v1752
        %v1754 = vlaneseq
        %v1755 = vshrl.u32 %v1754, 7
        %v1756 = vsub.s32 6, %v1755
        %v1757 = vrot.slane %v799, %v1756
        %v1758 = vlaneseq
        %v1759 = vshrl.u32 %v1758, 7
        %v1760 = vsub.s32 7, %v1759
        %v1761 = vrot.slane %v799, %v1760
        %v1762 = vlaneseq
        %v1763 = vshrl.u32 %v1762, 7
        %v1764 = vsub.s32 0, %v1763
        %v1765 = vrot.slane %v800, %v1764
        %v1766 = vlaneseq
        %v1767 = vshrl.u32 %v1766, 7
        %v1768 = vsub.s32 1, %v1767
        %v1769 = vrot.slane %v800, %v1768
        %v1770 = vlaneseq
        %v1771 = vshrl.u32 %v1770, 7
        %v1772 = vsub.s32 2, %v1771
        %v1773 = vrot.slane %v800, %v1772
        %v1774 = vlaneseq
        %v1775 = vshrl.u32 %v1774, 7
        %v1776 = vsub.s32 3, %v1775
        %v1777 = vrot.slane %v800, %v1776
        %v1778 = vlaneseq
        %v1779 = vshrl.u32 %v1778, 7
        %v1780 = vsub.s32 4, %v1779
        %v1781 = vrot.slane %v800, %v1780
        %v1782 = vlaneseq
        %v1783 = vshrl.u32 %v1782, 7
        %v1784 = vsub.s32 5, %v1783
        %v1785 = vrot.slane %v800, %v1784
        %v1786 = vlaneseq
        %v1787 = vshrl.u32 %v1786, 7
        %v1788 = vsub.s32 6, %v1787
        %v1789 = vrot.slane %v800, %v1788
        %v1790 = vlaneseq
        %v1791 = vshrl.u32 %v1790, 7
        %v1792 = vsub.s32 7, %v1791
        %v1793 = vrot.slane %v800, %v1792
        %v1794 = vlaneseq
        %v1795 = vshrl.u32 %v1794, 7
        %v1796 = vsub.s32 0, %v1795
        %v1797 = vrot.slane %v801, %v1796
        %v1798 = vlaneseq
        %v1799 = vshrl.u32 %v1798, 7
        %v1800 = vsub.s32 1, %v1799
        %v1801 = vrot.slane %v801, %v1800
        %v1802 = vlaneseq
        %v1803 = vshrl.u32 %v1802, 7
        %v1804 = vsub.s32 2, %v1803
        %v1805 = vrot.slane %v801, %v1804
        %v1806 = vlaneseq
        %v1807 = vshrl.u32 %v1806, 7
        %v1808 = vsub.s32 3, %v1807
        %v1809 = vrot.slane %v801, %v1808
        %v1810 = vlaneseq
        %v1811 = vshrl.u32 %v1810, 7
        %v1812 = vsub.s32 4, %v1811
        %v1813 = vrot.slane %v801, %v1812
        %v1814 = vlaneseq
        %v1815 = vshrl.u32 %v1814, 7
        %v1816 = vsub.s32 5, %v1815
        %v1817 = vrot.slane %v801, %v1816
        %v1818 = vlaneseq
        %v1819 = vshrl.u32 %v1818, 7
        %v1820 = vsub.s32 6, %v1819
        %v1821 = vrot.slane %v801, %v1820
        %v1822 = vlaneseq
        %v1823 = vshrl.u32 %v1822, 7
        %v1824 = vsub.s32 7, %v1823
        %v1825 = vrot.slane %v801, %v1824
        %v1826 = vcombine.low %v805, %v809
        %v1827 = vcombine.low %v813, %v817
        %v1828 = vcombine.low %v821, %v825
        %v1829 = vcombine.low %v829, %v833
        %v1831 = vunpack.c.l.s4 1966171168
        %v1832 = vunpack.c.0.s8 %v1831
        %v1833 = vlaneseq
        %v1834 = vshrl.u32 %v1833, 7
        %v1835 = vsub.s32 %v1832, %v1834
        %v1836 = vrot.slane %v1826, %v1835
        %v1838 = vunpack.c.l.s4 1966171168
        %v1839 = vunpack.c.0.s8 %v1838
        %v1840 = vlaneseq
        %v1841 = vshrl.u32 %v1840, 7
        %v1842 = vsub.s32 %v1839, %v1841
        %v1843 = vrot.slane %v1827, %v1842
        %v1845 = vunpack.c.l.s4 1966171168
        %v1846 = vunpack.c.0.s8 %v1845
        %v1847 = vlaneseq
        %v1848 = vshrl.u32 %v1847, 7
        %v1849 = vsub.s32 %v1846, %v1848
        %v1850 = vrot.slane %v1828, %v1849
        %v1852 = vunpack.c.l.s4 1966171168
        %v1853 = vunpack.c.0.s8 %v1852
        %v1854 = vlaneseq
        %v1855 = vshrl.u32 %v1854, 7
        %v1856 = vsub.s32 %v1853, %v1855
        %v1857 = vrot.slane %v1829, %v1856
        %v1858 = vcombine.low %v1836, %v1843
        %v1859 = vcombine.low %v1850, %v1857
        %v1861 = vunpack.c.l.s4 1966171168
        %v1862 = vunpack.c.0.s8 %v1861
        %v1863 = vlaneseq
        %v1864 = vshrl.u32 %v1863, 7
        %v1865 = vsub.s32 %v1862, %v1864
        %v1866 = vrot.slane %v1858, %v1865
        %v1868 = vunpack.c.l.s4 1966171168
        %v1869 = vunpack.c.0.s8 %v1868
        %v1870 = vlaneseq
        %v1871 = vshrl.u32 %v1870, 7
        %v1872 = vsub.s32 %v1869, %v1871
        %v1873 = vrot.slane %v1859, %v1872
        %v1874 = vcombine.low %v1866, %v1873
        %v1875 = vcombine.low %v837, %v841
        %v1876 = vcombine.low %v845, %v849
        %v1877 = vcombine.low %v853, %v857
        %v1878 = vcombine.low %v861, %v865
        %v1880 = vunpack.c.l.s4 1966171168
        %v1881 = vunpack.c.0.s8 %v1880
        %v1882 = vlaneseq
        %v1883 = vshrl.u32 %v1882, 7
        %v1884 = vsub.s32 %v1881, %v1883
        %v1885 = vrot.slane %v1875, %v1884
        %v1887 = vunpack.c.l.s4 1966171168
        %v1888 = vunpack.c.0.s8 %v1887
        %v1889 = vlaneseq
        %v1890 = vshrl.u32 %v1889, 7
        %v1891 = vsub.s32 %v1888, %v1890
        %v1892 = vrot.slane %v1876, %v1891
        %v1894 = vunpack.c.l.s4 1966171168
        %v1895 = vunpack.c.0.s8 %v1894
        %v1896 = vlaneseq
        %v1897 = vshrl.u32 %v1896, 7
        %v1898 = vsub.s32 %v1895, %v1897
        %v1899 = vrot.slane %v1877, %v1898
        %v1901 = vunpack.c.l.s4 1966171168
        %v1902 = vunpack.c.0.s8 %v1901
        %v1903 = vlaneseq
        %v1904 = vshrl.u32 %v1903, 7
        %v1905 = vsub.s32 %v1902, %v1904
        %v1906 = vrot.slane %v1878, %v1905
        %v1907 = vcombine.low %v1885, %v1892
        %v1908 = vcombine.low %v1899, %v1906
        %v1910 = vunpack.c.l.s4 1966171168
        %v1911 = vunpack.c.0.s8 %v1910
        %v1912 = vlaneseq
        %v1913 = vshrl.u32 %v1912, 7
        %v1914 = vsub.s32 %v1911, %v1913
        %v1915 = vrot.slane %v1907, %v1914
        %v1917 = vunpack.c.l.s4 1966171168
        %v1918 = vunpack.c.0.s8 %v1917
        %v1919 = vlaneseq
        %v1920 = vshrl.u32 %v1919, 7
        %v1921 = vsub.s32 %v1918, %v1920
        %v1922 = vrot.slane %v1908, %v1921
        %v1923 = vcombine.low %v1915, %v1922
        %v1924 = vcombine.low %v869, %v873
        %v1925 = vcombine.low %v877, %v881
        %v1926 = vcombine.low %v885, %v889
        %v1927 = vcombine.low %v893, %v897
        %v1929 = vunpack.c.l.s4 1966171168
        %v1930 = vunpack.c.0.s8 %v1929
        %v1931 = vlaneseq
        %v1932 = vshrl.u32 %v1931, 7
        %v1933 = vsub.s32 %v1930, %v1932
        %v1934 = vrot.slane %v1924, %v1933
        %v1936 = vunpack.c.l.s4 1966171168
        %v1937 = vunpack.c.0.s8 %v1936
        %v1938 = vlaneseq
        %v1939 = vshrl.u32 %v1938, 7
        %v1940 = vsub.s32 %v1937, %v1939
        %v1941 = vrot.slane %v1925, %v1940
        %v1943 = vunpack.c.l.s4 1966171168
        %v1944 = vunpack.c.0.s8 %v1943
        %v1945 = vlaneseq
        %v1946 = vshrl.u32 %v1945, 7
        %v1947 = vsub.s32 %v1944, %v1946
        %v1948 = vrot.slane %v1926, %v1947
        %v1950 = vunpack.c.l.s4 1966171168
        %v1951 = vunpack.c.0.s8 %v1950
        %v1952 = vlaneseq
        %v1953 = vshrl.u32 %v1952, 7
        %v1954 = vsub.s32 %v1951, %v1953
        %v1955 = vrot.slane %v1927, %v1954
        %v1956 = vcombine.low %v1934, %v1941
        %v1957 = vcombine.low %v1948, %v1955
        %v1959 = vunpack.c.l.s4 1966171168
        %v1960 = vunpack.c.0.s8 %v1959
        %v1961 = vlaneseq
        %v1962 = vshrl.u32 %v1961, 7
        %v1963 = vsub.s32 %v1960, %v1962
        %v1964 = vrot.slane %v1956, %v1963
        %v1966 = vunpack.c.l.s4 1966171168
        %v1967 = vunpack.c.0.s8 %v1966
        %v1968 = vlaneseq
        %v1969 = vshrl.u32 %v1968, 7
        %v1970 = vsub.s32 %v1967, %v1969
        %v1971 = vrot.slane %v1957, %v1970
        %v1972 = vcombine.low %v1964, %v1971
        %v1973 = vcombine.low %v901, %v905
        %v1974 = vcombine.low %v909, %v913
        %v1975 = vcombine.low %v917, %v921
        %v1976 = vcombine.low %v925, %v929
        %v1978 = vunpack.c.l.s4 1966171168
        %v1979 = vunpack.c.0.s8 %v1978
        %v1980 = vlaneseq
        %v1981 = vshrl.u32 %v1980, 7
        %v1982 = vsub.s32 %v1979, %v1981
        %v1983 = vrot.slane %v1973, %v1982
        %v1985 = vunpack.c.l.s4 1966171168
        %v1986 = vunpack.c.0.s8 %v1985
        %v1987 = vlaneseq
        %v1988 = vshrl.u32 %v1987, 7
        %v1989 = vsub.s32 %v1986, %v1988
        %v1990 = vrot.slane %v1974, %v1989
        %v1992 = vunpack.c.l.s4 1966171168
        %v1993 = vunpack.c.0.s8 %v1992
        %v1994 = vlaneseq
        %v1995 = vshrl.u32 %v1994, 7
        %v1996 = vsub.s32 %v1993, %v1995
        %v1997 = vrot.slane %v1975, %v1996
        %v1999 = vunpack.c.l.s4 1966171168
        %v2000 = vunpack.c.0.s8 %v1999
        %v2001 = vlaneseq
        %v2002 = vshrl.u32 %v2001, 7
        %v2003 = vsub.s32 %v2000, %v2002
        %v2004 = vrot.slane %v1976, %v2003
        %v2005 = vcombine.low %v1983, %v1990
        %v2006 = vcombine.low %v1997, %v2004
        %v2008 = vunpack.c.l.s4 1966171168
        %v2009 = vunpack.c.0.s8 %v2008
        %v2010 = vlaneseq
        %v2011 = vshrl.u32 %v2010, 7
        %v2012 = vsub.s32 %v2009, %v2011
        %v2013 = vrot.slane %v2005, %v2012
        %v2015 = vunpack.c.l.s4 1966171168
        %v2016 = vunpack.c.0.s8 %v2015
        %v2017 = vlaneseq
        %v2018 = vshrl.u32 %v2017, 7
        %v2019 = vsub.s32 %v2016, %v2018
        %v2020 = vrot.slane %v2006, %v2019
        %v2021 = vcombine.low %v2013, %v2020
        %v2022 = vcombine.low %v933, %v937
        %v2023 = vcombine.low %v941, %v945
        %v2024 = vcombine.low %v949, %v953
        %v2025 = vcombine.low %v957, %v961
        %v2027 = vunpack.c.l.s4 1966171168
        %v2028 = vunpack.c.0.s8 %v2027
        %v2029 = vlaneseq
        %v2030 = vshrl.u32 %v2029, 7
        %v2031 = vsub.s32 %v2028, %v2030
        %v2032 = vrot.slane %v2022, %v2031
        %v2034 = vunpack.c.l.s4 1966171168
        %v2035 = vunpack.c.0.s8 %v2034
        %v2036 = vlaneseq
        %v2037 = vshrl.u32 %v2036, 7
        %v2038 = vsub.s32 %v2035, %v2037
        %v2039 = vrot.slane %v2023, %v2038
        %v2041 = vunpack.c.l.s4 1966171168
        %v2042 = vunpack.c.0.s8 %v2041
        %v2043 = vlaneseq
        %v2044 = vshrl.u32 %v2043, 7
        %v2045 = vsub.s32 %v2042, %v2044
        %v2046 = vrot.slane %v2024, %v2045
        %v2048 = vunpack.c.l.s4 1966171168
        %v2049 = vunpack.c.0.s8 %v2048
        %v2050 = vlaneseq
        %v2051 = vshrl.u32 %v2050, 7
        %v2052 = vsub.s32 %v2049, %v2051
        %v2053 = vrot.slane %v2025, %v2052
        %v2054 = vcombine.low %v2032, %v2039
        %v2055 = vcombine.low %v2046, %v2053
        %v2057 = vunpack.c.l.s4 1966171168
        %v2058 = vunpack.c.0.s8 %v2057
        %v2059 = vlaneseq
        %v2060 = vshrl.u32 %v2059, 7
        %v2061 = vsub.s32 %v2058, %v2060
        %v2062 = vrot.slane %v2054, %v2061
        %v2064 = vunpack.c.l.s4 1966171168
        %v2065 = vunpack.c.0.s8 %v2064
        %v2066 = vlaneseq
        %v2067 = vshrl.u32 %v2066, 7
        %v2068 = vsub.s32 %v2065, %v2067
        %v2069 = vrot.slane %v2055, %v2068
        %v2070 = vcombine.low %v2062, %v2069
        %v2071 = vcombine.low %v965, %v969
        %v2072 = vcombine.low %v973, %v977
        %v2073 = vcombine.low %v981, %v985
        %v2074 = vcombine.low %v989, %v993
        %v2076 = vunpack.c.l.s4 1966171168
        %v2077 = vunpack.c.0.s8 %v2076
        %v2078 = vlaneseq
        %v2079 = vshrl.u32 %v2078, 7
        %v2080 = vsub.s32 %v2077, %v2079
        %v2081 = vrot.slane %v2071, %v2080
        %v2083 = vunpack.c.l.s4 1966171168
        %v2084 = vunpack.c.0.s8 %v2083
        %v2085 = vlaneseq
        %v2086 = vshrl.u32 %v2085, 7
        %v2087 = vsub.s32 %v2084, %v2086
        %v2088 = vrot.slane %v2072, %v2087
        %v2090 = vunpack.c.l.s4 1966171168
        %v2091 = vunpack.c.0.s8 %v2090
        %v2092 = vlaneseq
        %v2093 = vshrl.u32 %v2092, 7
        %v2094 = vsub.s32 %v2091, %v2093
        %v2095 = vrot.slane %v2073, %v2094
        %v2097 = vunpack.c.l.s4 1966171168
        %v2098 = vunpack.c.0.s8 %v2097
        %v2099 = vlaneseq
        %v2100 = vshrl.u32 %v2099, 7
        %v2101 = vsub.s32 %v2098, %v2100
        %v2102 = vrot.slane %v2074, %v2101
        %v2103 = vcombine.low %v2081, %v2088
        %v2104 = vcombine.low %v2095, %v2102
        %v2106 = vunpack.c.l.s4 1966171168
        %v2107 = vunpack.c.0.s8 %v2106
        %v2108 = vlaneseq
        %v2109 = vshrl.u32 %v2108, 7
        %v2110 = vsub.s32 %v2107, %v2109
        %v2111 = vrot.slane %v2103, %v2110
        %v2113 = vunpack.c.l.s4 1966171168
        %v2114 = vunpack.c.0.s8 %v2113
        %v2115 = vlaneseq
        %v2116 = vshrl.u32 %v2115, 7
        %v2117 = vsub.s32 %v2114, %v2116
        %v2118 = vrot.slane %v2104, %v2117
        %v2119 = vcombine.low %v2111, %v2118
        %v2120 = vcombine.low %v997, %v1001
        %v2121 = vcombine.low %v1005, %v1009
        %v2122 = vcombine.low %v1013, %v1017
        %v2123 = vcombine.low %v1021, %v1025
        %v2125 = vunpack.c.l.s4 1966171168
        %v2126 = vunpack.c.0.s8 %v2125
        %v2127 = vlaneseq
        %v2128 = vshrl.u32 %v2127, 7
        %v2129 = vsub.s32 %v2126, %v2128
        %v2130 = vrot.slane %v2120, %v2129
        %v2132 = vunpack.c.l.s4 1966171168
        %v2133 = vunpack.c.0.s8 %v2132
        %v2134 = vlaneseq
        %v2135 = vshrl.u32 %v2134, 7
        %v2136 = vsub.s32 %v2133, %v2135
        %v2137 = vrot.slane %v2121, %v2136
        %v2139 = vunpack.c.l.s4 1966171168
        %v2140 = vunpack.c.0.s8 %v2139
        %v2141 = vlaneseq
        %v2142 = vshrl.u32 %v2141, 7
        %v2143 = vsub.s32 %v2140, %v2142
        %v2144 = vrot.slane %v2122, %v2143
        %v2146 = vunpack.c.l.s4 1966171168
        %v2147 = vunpack.c.0.s8 %v2146
        %v2148 = vlaneseq
        %v2149 = vshrl.u32 %v2148, 7
        %v2150 = vsub.s32 %v2147, %v2149
        %v2151 = vrot.slane %v2123, %v2150
        %v2152 = vcombine.low %v2130, %v2137
        %v2153 = vcombine.low %v2144, %v2151
        %v2155 = vunpack.c.l.s4 1966171168
        %v2156 = vunpack.c.0.s8 %v2155
        %v2157 = vlaneseq
        %v2158 = vshrl.u32 %v2157, 7
        %v2159 = vsub.s32 %v2156, %v2158
        %v2160 = vrot.slane %v2152, %v2159
        %v2162 = vunpack.c.l.s4 1966171168
        %v2163 = vunpack.c.0.s8 %v2162
        %v2164 = vlaneseq
        %v2165 = vshrl.u32 %v2164, 7
        %v2166 = vsub.s32 %v2163, %v2165
        %v2167 = vrot.slane %v2153, %v2166
        %v2168 = vcombine.low %v2160, %v2167
        %v2169 = vcombine.low %v1029, %v1033
        %v2170 = vcombine.low %v1037, %v1041
        %v2171 = vcombine.low %v1045, %v1049
        %v2172 = vcombine.low %v1053, %v1057
        %v2174 = vunpack.c.l.s4 1966171168
        %v2175 = vunpack.c.0.s8 %v2174
        %v2176 = vlaneseq
        %v2177 = vshrl.u32 %v2176, 7
        %v2178 = vsub.s32 %v2175, %v2177
        %v2179 = vrot.slane %v2169, %v2178
        %v2181 = vunpack.c.l.s4 1966171168
        %v2182 = vunpack.c.0.s8 %v2181
        %v2183 = vlaneseq
        %v2184 = vshrl.u32 %v2183, 7
        %v2185 = vsub.s32 %v2182, %v2184
        %v2186 = vrot.slane %v2170, %v2185
        %v2188 = vunpack.c.l.s4 1966171168
        %v2189 = vunpack.c.0.s8 %v2188
        %v2190 = vlaneseq
        %v2191 = vshrl.u32 %v2190, 7
        %v2192 = vsub.s32 %v2189, %v2191
        %v2193 = vrot.slane %v2171, %v2192
        %v2195 = vunpack.c.l.s4 1966171168
        %v2196 = vunpack.c.0.s8 %v2195
        %v2197 = vlaneseq
        %v2198 = vshrl.u32 %v2197, 7
        %v2199 = vsub.s32 %v2196, %v2198
        %v2200 = vrot.slane %v2172, %v2199
        %v2201 = vcombine.low %v2179, %v2186
        %v2202 = vcombine.low %v2193, %v2200
        %v2204 = vunpack.c.l.s4 1966171168
        %v2205 = vunpack.c.0.s8 %v2204
        %v2206 = vlaneseq
        %v2207 = vshrl.u32 %v2206, 7
        %v2208 = vsub.s32 %v2205, %v2207
        %v2209 = vrot.slane %v2201, %v2208
        %v2211 = vunpack.c.l.s4 1966171168
        %v2212 = vunpack.c.0.s8 %v2211
        %v2213 = vlaneseq
        %v2214 = vshrl.u32 %v2213, 7
        %v2215 = vsub.s32 %v2212, %v2214
        %v2216 = vrot.slane %v2202, %v2215
        %v2217 = vcombine.low %v2209, %v2216
        %v2218 = vcombine.low %v1061, %v1065
        %v2219 = vcombine.low %v1069, %v1073
        %v2220 = vcombine.low %v1077, %v1081
        %v2221 = vcombine.low %v1085, %v1089
        %v2223 = vunpack.c.l.s4 1966171168
        %v2224 = vunpack.c.0.s8 %v2223
        %v2225 = vlaneseq
        %v2226 = vshrl.u32 %v2225, 7
        %v2227 = vsub.s32 %v2224, %v2226
        %v2228 = vrot.slane %v2218, %v2227
        %v2230 = vunpack.c.l.s4 1966171168
        %v2231 = vunpack.c.0.s8 %v2230
        %v2232 = vlaneseq
        %v2233 = vshrl.u32 %v2232, 7
        %v2234 = vsub.s32 %v2231, %v2233
        %v2235 = vrot.slane %v2219, %v2234
        %v2237 = vunpack.c.l.s4 1966171168
        %v2238 = vunpack.c.0.s8 %v2237
        %v2239 = vlaneseq
        %v2240 = vshrl.u32 %v2239, 7
        %v2241 = vsub.s32 %v2238, %v2240
        %v2242 = vrot.slane %v2220, %v2241
        %v2244 = vunpack.c.l.s4 1966171168
        %v2245 = vunpack.c.0.s8 %v2244
        %v2246 = vlaneseq
        %v2247 = vshrl.u32 %v2246, 7
        %v2248 = vsub.s32 %v2245, %v2247
        %v2249 = vrot.slane %v2221, %v2248
        %v2250 = vcombine.low %v2228, %v2235
        %v2251 = vcombine.low %v2242, %v2249
        %v2253 = vunpack.c.l.s4 1966171168
        %v2254 = vunpack.c.0.s8 %v2253
        %v2255 = vlaneseq
        %v2256 = vshrl.u32 %v2255, 7
        %v2257 = vsub.s32 %v2254, %v2256
        %v2258 = vrot.slane %v2250, %v2257
        %v2260 = vunpack.c.l.s4 1966171168
        %v2261 = vunpack.c.0.s8 %v2260
        %v2262 = vlaneseq
        %v2263 = vshrl.u32 %v2262, 7
        %v2264 = vsub.s32 %v2261, %v2263
        %v2265 = vrot.slane %v2251, %v2264
        %v2266 = vcombine.low %v2258, %v2265
        %v2267 = vcombine.low %v1093, %v1097
        %v2268 = vcombine.low %v1101, %v1105
        %v2269 = vcombine.low %v1109, %v1113
        %v2270 = vcombine.low %v1117, %v1121
        %v2272 = vunpack.c.l.s4 1966171168
        %v2273 = vunpack.c.0.s8 %v2272
        %v2274 = vlaneseq
        %v2275 = vshrl.u32 %v2274, 7
        %v2276 = vsub.s32 %v2273, %v2275
        %v2277 = vrot.slane %v2267, %v2276
        %v2279 = vunpack.c.l.s4 1966171168
        %v2280 = vunpack.c.0.s8 %v2279
        %v2281 = vlaneseq
        %v2282 = vshrl.u32 %v2281, 7
        %v2283 = vsub.s32 %v2280, %v2282
        %v2284 = vrot.slane %v2268, %v2283
        %v2286 = vunpack.c.l.s4 1966171168
        %v2287 = vunpack.c.0.s8 %v2286
        %v2288 = vlaneseq
        %v2289 = vshrl.u32 %v2288, 7
        %v2290 = vsub.s32 %v2287, %v2289
        %v2291 = vrot.slane %v2269, %v2290
        %v2293 = vunpack.c.l.s4 1966171168
        %v2294 = vunpack.c.0.s8 %v2293
        %v2295 = vlaneseq
        %v2296 = vshrl.u32 %v2295, 7
        %v2297 = vsub.s32 %v2294, %v2296
        %v2298 = vrot.slane %v2270, %v2297
        %v2299 = vcombine.low %v2277, %v2284
        %v2300 = vcombine.low %v2291, %v2298
        %v2302 = vunpack.c.l.s4 1966171168
        %v2303 = vunpack.c.0.s8 %v2302
        %v2304 = vlaneseq
        %v2305 = vshrl.u32 %v2304, 7
        %v2306 = vsub.s32 %v2303, %v2305
        %v2307 = vrot.slane %v2299, %v2306
        %v2309 = vunpack.c.l.s4 1966171168
        %v2310 = vunpack.c.0.s8 %v2309
        %v2311 = vlaneseq
        %v2312 = vshrl.u32 %v2311, 7
        %v2313 = vsub.s32 %v2310, %v2312
        %v2314 = vrot.slane %v2300, %v2313
        %v2315 = vcombine.low %v2307, %v2314
        %v2316 = vcombine.low %v1125, %v1129
        %v2317 = vcombine.low %v1133, %v1137
        %v2318 = vcombine.low %v1141, %v1145
        %v2319 = vcombine.low %v1149, %v1153
        %v2321 = vunpack.c.l.s4 1966171168
        %v2322 = vunpack.c.0.s8 %v2321
        %v2323 = vlaneseq
        %v2324 = vshrl.u32 %v2323, 7
        %v2325 = vsub.s32 %v2322, %v2324
        %v2326 = vrot.slane %v2316, %v2325
        %v2328 = vunpack.c.l.s4 1966171168
        %v2329 = vunpack.c.0.s8 %v2328
        %v2330 = vlaneseq
        %v2331 = vshrl.u32 %v2330, 7
        %v2332 = vsub.s32 %v2329, %v2331
        %v2333 = vrot.slane %v2317, %v2332
        %v2335 = vunpack.c.l.s4 1966171168
        %v2336 = vunpack.c.0.s8 %v2335
        %v2337 = vlaneseq
        %v2338 = vshrl.u32 %v2337, 7
        %v2339 = vsub.s32 %v2336, %v2338
        %v2340 = vrot.slane %v2318, %v2339
        %v2342 = vunpack.c.l.s4 1966171168
        %v2343 = vunpack.c.0.s8 %v2342
        %v2344 = vlaneseq
        %v2345 = vshrl.u32 %v2344, 7
        %v2346 = vsub.s32 %v2343, %v2345
        %v2347 = vrot.slane %v2319, %v2346
        %v2348 = vcombine.low %v2326, %v2333
        %v2349 = vcombine.low %v2340, %v2347
        %v2351 = vunpack.c.l.s4 1966171168
        %v2352 = vunpack.c.0.s8 %v2351
        %v2353 = vlaneseq
        %v2354 = vshrl.u32 %v2353, 7
        %v2355 = vsub.s32 %v2352, %v2354
        %v2356 = vrot.slane %v2348, %v2355
        %v2358 = vunpack.c.l.s4 1966171168
        %v2359 = vunpack.c.0.s8 %v2358
        %v2360 = vlaneseq
        %v2361 = vshrl.u32 %v2360, 7
        %v2362 = vsub.s32 %v2359, %v2361
        %v2363 = vrot.slane %v2349, %v2362
        %v2364 = vcombine.low %v2356, %v2363
        %v2365 = vcombine.low %v1157, %v1161
        %v2366 = vcombine.low %v1165, %v1169
        %v2367 = vcombine.low %v1173, %v1177
        %v2368 = vcombine.low %v1181, %v1185
        %v2370 = vunpack.c.l.s4 1966171168
        %v2371 = vunpack.c.0.s8 %v2370
        %v2372 = vlaneseq
        %v2373 = vshrl.u32 %v2372, 7
        %v2374 = vsub.s32 %v2371, %v2373
        %v2375 = vrot.slane %v2365, %v2374
        %v2377 = vunpack.c.l.s4 1966171168
        %v2378 = vunpack.c.0.s8 %v2377
        %v2379 = vlaneseq
        %v2380 = vshrl.u32 %v2379, 7
        %v2381 = vsub.s32 %v2378, %v2380
        %v2382 = vrot.slane %v2366, %v2381
        %v2384 = vunpack.c.l.s4 1966171168
        %v2385 = vunpack.c.0.s8 %v2384
        %v2386 = vlaneseq
        %v2387 = vshrl.u32 %v2386, 7
        %v2388 = vsub.s32 %v2385, %v2387
        %v2389 = vrot.slane %v2367, %v2388
        %v2391 = vunpack.c.l.s4 1966171168
        %v2392 = vunpack.c.0.s8 %v2391
        %v2393 = vlaneseq
        %v2394 = vshrl.u32 %v2393, 7
        %v2395 = vsub.s32 %v2392, %v2394
        %v2396 = vrot.slane %v2368, %v2395
        %v2397 = vcombine.low %v2375, %v2382
        %v2398 = vcombine.low %v2389, %v2396
        %v2400 = vunpack.c.l.s4 1966171168
        %v2401 = vunpack.c.0.s8 %v2400
        %v2402 = vlaneseq
        %v2403 = vshrl.u32 %v2402, 7
        %v2404 = vsub.s32 %v2401, %v2403
        %v2405 = vrot.slane %v2397, %v2404
        %v2407 = vunpack.c.l.s4 1966171168
        %v2408 = vunpack.c.0.s8 %v2407
        %v2409 = vlaneseq
        %v2410 = vshrl.u32 %v2409, 7
        %v2411 = vsub.s32 %v2408, %v2410
        %v2412 = vrot.slane %v2398, %v2411
        %v2413 = vcombine.low %v2405, %v2412
        %v2414 = vcombine.low %v1189, %v1193
        %v2415 = vcombine.low %v1197, %v1201
        %v2416 = vcombine.low %v1205, %v1209
        %v2417 = vcombine.low %v1213, %v1217
        %v2419 = vunpack.c.l.s4 1966171168
        %v2420 = vunpack.c.0.s8 %v2419
        %v2421 = vlaneseq
        %v2422 = vshrl.u32 %v2421, 7
        %v2423 = vsub.s32 %v2420, %v2422
        %v2424 = vrot.slane %v2414, %v2423
        %v2426 = vunpack.c.l.s4 1966171168
        %v2427 = vunpack.c.0.s8 %v2426
        %v2428 = vlaneseq
        %v2429 = vshrl.u32 %v2428, 7
        %v2430 = vsub.s32 %v2427, %v2429
        %v2431 = vrot.slane %v2415, %v2430
        %v2433 = vunpack.c.l.s4 1966171168
        %v2434 = vunpack.c.0.s8 %v2433
        %v2435 = vlaneseq
        %v2436 = vshrl.u32 %v2435, 7
        %v2437 = vsub.s32 %v2434, %v2436
        %v2438 = vrot.slane %v2416, %v2437
        %v2440 = vunpack.c.l.s4 1966171168
        %v2441 = vunpack.c.0.s8 %v2440
        %v2442 = vlaneseq
        %v2443 = vshrl.u32 %v2442, 7
        %v2444 = vsub.s32 %v2441, %v2443
        %v2445 = vrot.slane %v2417, %v2444
        %v2446 = vcombine.low %v2424, %v2431
        %v2447 = vcombine.low %v2438, %v2445
        %v2449 = vunpack.c.l.s4 1966171168
        %v2450 = vunpack.c.0.s8 %v2449
        %v2451 = vlaneseq
        %v2452 = vshrl.u32 %v2451, 7
        %v2453 = vsub.s32 %v2450, %v2452
        %v2454 = vrot.slane %v2446, %v2453
        %v2456 = vunpack.c.l.s4 1966171168
        %v2457 = vunpack.c.0.s8 %v2456
        %v2458 = vlaneseq
        %v2459 = vshrl.u32 %v2458, 7
        %v2460 = vsub.s32 %v2457, %v2459
        %v2461 = vrot.slane %v2447, %v2460
        %v2462 = vcombine.low %v2454, %v2461
        %v2463 = vcombine.low %v1221, %v1225
        %v2464 = vcombine.low %v1229, %v1233
        %v2465 = vcombine.low %v1237, %v1241
        %v2466 = vcombine.low %v1245, %v1249
        %v2468 = vunpack.c.l.s4 1966171168
        %v2469 = vunpack.c.0.s8 %v2468
        %v2470 = vlaneseq
        %v2471 = vshrl.u32 %v2470, 7
        %v2472 = vsub.s32 %v2469, %v2471
        %v2473 = vrot.slane %v2463, %v2472
        %v2475 = vunpack.c.l.s4 1966171168
        %v2476 = vunpack.c.0.s8 %v2475
        %v2477 = vlaneseq
        %v2478 = vshrl.u32 %v2477, 7
        %v2479 = vsub.s32 %v2476, %v2478
        %v2480 = vrot.slane %v2464, %v2479
        %v2482 = vunpack.c.l.s4 1966171168
        %v2483 = vunpack.c.0.s8 %v2482
        %v2484 = vlaneseq
        %v2485 = vshrl.u32 %v2484, 7
        %v2486 = vsub.s32 %v2483, %v2485
        %v2487 = vrot.slane %v2465, %v2486
        %v2489 = vunpack.c.l.s4 1966171168
        %v2490 = vunpack.c.0.s8 %v2489
        %v2491 = vlaneseq
        %v2492 = vshrl.u32 %v2491, 7
        %v2493 = vsub.s32 %v2490, %v2492
        %v2494 = vrot.slane %v2466, %v2493
        %v2495 = vcombine.low %v2473, %v2480
        %v2496 = vcombine.low %v2487, %v2494
        %v2498 = vunpack.c.l.s4 1966171168
        %v2499 = vunpack.c.0.s8 %v2498
        %v2500 = vlaneseq
        %v2501 = vshrl.u32 %v2500, 7
        %v2502 = vsub.s32 %v2499, %v2501
        %v2503 = vrot.slane %v2495, %v2502
        %v2505 = vunpack.c.l.s4 1966171168
        %v2506 = vunpack.c.0.s8 %v2505
        %v2507 = vlaneseq
        %v2508 = vshrl.u32 %v2507, 7
        %v2509 = vsub.s32 %v2506, %v2508
        %v2510 = vrot.slane %v2496, %v2509
        %v2511 = vcombine.low %v2503, %v2510
        %v2512 = vcombine.low %v1253, %v1257
        %v2513 = vcombine.low %v1261, %v1265
        %v2514 = vcombine.low %v1269, %v1273
        %v2515 = vcombine.low %v1277, %v1281
        %v2517 = vunpack.c.l.s4 1966171168
        %v2518 = vunpack.c.0.s8 %v2517
        %v2519 = vlaneseq
        %v2520 = vshrl.u32 %v2519, 7
        %v2521 = vsub.s32 %v2518, %v2520
        %v2522 = vrot.slane %v2512, %v2521
        %v2524 = vunpack.c.l.s4 1966171168
        %v2525 = vunpack.c.0.s8 %v2524
        %v2526 = vlaneseq
        %v2527 = vshrl.u32 %v2526, 7
        %v2528 = vsub.s32 %v2525, %v2527
        %v2529 = vrot.slane %v2513, %v2528
        %v2531 = vunpack.c.l.s4 1966171168
        %v2532 = vunpack.c.0.s8 %v2531
        %v2533 = vlaneseq
        %v2534 = vshrl.u32 %v2533, 7
        %v2535 = vsub.s32 %v2532, %v2534
        %v2536 = vrot.slane %v2514, %v2535
        %v2538 = vunpack.c.l.s4 1966171168
        %v2539 = vunpack.c.0.s8 %v2538
        %v2540 = vlaneseq
        %v2541 = vshrl.u32 %v2540, 7
        %v2542 = vsub.s32 %v2539, %v2541
        %v2543 = vrot.slane %v2515, %v2542
        %v2544 = vcombine.low %v2522, %v2529
        %v2545 = vcombine.low %v2536, %v2543
        %v2547 = vunpack.c.l.s4 1966171168
        %v2548 = vunpack.c.0.s8 %v2547
        %v2549 = vlaneseq
        %v2550 = vshrl.u32 %v2549, 7
        %v2551 = vsub.s32 %v2548, %v2550
        %v2552 = vrot.slane %v2544, %v2551
        %v2554 = vunpack.c.l.s4 1966171168
        %v2555 = vunpack.c.0.s8 %v2554
        %v2556 = vlaneseq
        %v2557 = vshrl.u32 %v2556, 7
        %v2558 = vsub.s32 %v2555, %v2557
        %v2559 = vrot.slane %v2545, %v2558
        %v2560 = vcombine.low %v2552, %v2559
        %v2561 = vcombine.low %v1285, %v1289
        %v2562 = vcombine.low %v1293, %v1297
        %v2563 = vcombine.low %v1301, %v1305
        %v2564 = vcombine.low %v1309, %v1313
        %v2566 = vunpack.c.l.s4 1966171168
        %v2567 = vunpack.c.0.s8 %v2566
        %v2568 = vlaneseq
        %v2569 = vshrl.u32 %v2568, 7
        %v2570 = vsub.s32 %v2567, %v2569
        %v2571 = vrot.slane %v2561, %v2570
        %v2573 = vunpack.c.l.s4 1966171168
        %v2574 = vunpack.c.0.s8 %v2573
        %v2575 = vlaneseq
        %v2576 = vshrl.u32 %v2575, 7
        %v2577 = vsub.s32 %v2574, %v2576
        %v2578 = vrot.slane %v2562, %v2577
        %v2580 = vunpack.c.l.s4 1966171168
        %v2581 = vunpack.c.0.s8 %v2580
        %v2582 = vlaneseq
        %v2583 = vshrl.u32 %v2582, 7
        %v2584 = vsub.s32 %v2581, %v2583
        %v2585 = vrot.slane %v2563, %v2584
        %v2587 = vunpack.c.l.s4 1966171168
        %v2588 = vunpack.c.0.s8 %v2587
        %v2589 = vlaneseq
        %v2590 = vshrl.u32 %v2589, 7
        %v2591 = vsub.s32 %v2588, %v2590
        %v2592 = vrot.slane %v2564, %v2591
        %v2593 = vcombine.low %v2571, %v2578
        %v2594 = vcombine.low %v2585, %v2592
        %v2596 = vunpack.c.l.s4 1966171168
        %v2597 = vunpack.c.0.s8 %v2596
        %v2598 = vlaneseq
        %v2599 = vshrl.u32 %v2598, 7
        %v2600 = vsub.s32 %v2597, %v2599
        %v2601 = vrot.slane %v2593, %v2600
        %v2603 = vunpack.c.l.s4 1966171168
        %v2604 = vunpack.c.0.s8 %v2603
        %v2605 = vlaneseq
        %v2606 = vshrl.u32 %v2605, 7
        %v2607 = vsub.s32 %v2604, %v2606
        %v2608 = vrot.slane %v2594, %v2607
        %v2609 = vcombine.low %v2601, %v2608
        %v2610 = vcombine.low %v1317, %v1321
        %v2611 = vcombine.low %v1325, %v1329
        %v2612 = vcombine.low %v1333, %v1337
        %v2613 = vcombine.low %v1341, %v1345
        %v2615 = vunpack.c.l.s4 1966171168
        %v2616 = vunpack.c.0.s8 %v2615
        %v2617 = vlaneseq
        %v2618 = vshrl.u32 %v2617, 7
        %v2619 = vsub.s32 %v2616, %v2618
        %v2620 = vrot.slane %v2610, %v2619
        %v2622 = vunpack.c.l.s4 1966171168
        %v2623 = vunpack.c.0.s8 %v2622
        %v2624 = vlaneseq
        %v2625 = vshrl.u32 %v2624, 7
        %v2626 = vsub.s32 %v2623, %v2625
        %v2627 = vrot.slane %v2611, %v2626
        %v2629 = vunpack.c.l.s4 1966171168
        %v2630 = vunpack.c.0.s8 %v2629
        %v2631 = vlaneseq
        %v2632 = vshrl.u32 %v2631, 7
        %v2633 = vsub.s32 %v2630, %v2632
        %v2634 = vrot.slane %v2612, %v2633
        %v2636 = vunpack.c.l.s4 1966171168
        %v2637 = vunpack.c.0.s8 %v2636
        %v2638 = vlaneseq
        %v2639 = vshrl.u32 %v2638, 7
        %v2640 = vsub.s32 %v2637, %v2639
        %v2641 = vrot.slane %v2613, %v2640
        %v2642 = vcombine.low %v2620, %v2627
        %v2643 = vcombine.low %v2634, %v2641
        %v2645 = vunpack.c.l.s4 1966171168
        %v2646 = vunpack.c.0.s8 %v2645
        %v2647 = vlaneseq
        %v2648 = vshrl.u32 %v2647, 7
        %v2649 = vsub.s32 %v2646, %v2648
        %v2650 = vrot.slane %v2642, %v2649
        %v2652 = vunpack.c.l.s4 1966171168
        %v2653 = vunpack.c.0.s8 %v2652
        %v2654 = vlaneseq
        %v2655 = vshrl.u32 %v2654, 7
        %v2656 = vsub.s32 %v2653, %v2655
        %v2657 = vrot.slane %v2643, %v2656
        %v2658 = vcombine.low %v2650, %v2657
        %v2659 = vcombine.low %v1349, %v1353
        %v2660 = vcombine.low %v1357, %v1361
        %v2661 = vcombine.low %v1365, %v1369
        %v2662 = vcombine.low %v1373, %v1377
        %v2664 = vunpack.c.l.s4 1966171168
        %v2665 = vunpack.c.0.s8 %v2664
        %v2666 = vlaneseq
        %v2667 = vshrl.u32 %v2666, 7
        %v2668 = vsub.s32 %v2665, %v2667
        %v2669 = vrot.slane %v2659, %v2668
        %v2671 = vunpack.c.l.s4 1966171168
        %v2672 = vunpack.c.0.s8 %v2671
        %v2673 = vlaneseq
        %v2674 = vshrl.u32 %v2673, 7
        %v2675 = vsub.s32 %v2672, %v2674
        %v2676 = vrot.slane %v2660, %v2675
        %v2678 = vunpack.c.l.s4 1966171168
        %v2679 = vunpack.c.0.s8 %v2678
        %v2680 = vlaneseq
        %v2681 = vshrl.u32 %v2680, 7
        %v2682 = vsub.s32 %v2679, %v2681
        %v2683 = vrot.slane %v2661, %v2682
        %v2685 = vunpack.c.l.s4 1966171168
        %v2686 = vunpack.c.0.s8 %v2685
        %v2687 = vlaneseq
        %v2688 = vshrl.u32 %v2687, 7
        %v2689 = vsub.s32 %v2686, %v2688
        %v2690 = vrot.slane %v2662, %v2689
        %v2691 = vcombine.low %v2669, %v2676
        %v2692 = vcombine.low %v2683, %v2690
        %v2694 = vunpack.c.l.s4 1966171168
        %v2695 = vunpack.c.0.s8 %v2694
        %v2696 = vlaneseq
        %v2697 = vshrl.u32 %v2696, 7
        %v2698 = vsub.s32 %v2695, %v2697
        %v2699 = vrot.slane %v2691, %v2698
        %v2701 = vunpack.c.l.s4 1966171168
        %v2702 = vunpack.c.0.s8 %v2701
        %v2703 = vlaneseq
        %v2704 = vshrl.u32 %v2703, 7
        %v2705 = vsub.s32 %v2702, %v2704
        %v2706 = vrot.slane %v2692, %v2705
        %v2707 = vcombine.low %v2699, %v2706
        %v2708 = vcombine.low %v1381, %v1385
        %v2709 = vcombine.low %v1389, %v1393
        %v2710 = vcombine.low %v1397, %v1401
        %v2711 = vcombine.low %v1405, %v1409
        %v2713 = vunpack.c.l.s4 1966171168
        %v2714 = vunpack.c.0.s8 %v2713
        %v2715 = vlaneseq
        %v2716 = vshrl.u32 %v2715, 7
        %v2717 = vsub.s32 %v2714, %v2716
        %v2718 = vrot.slane %v2708, %v2717
        %v2720 = vunpack.c.l.s4 1966171168
        %v2721 = vunpack.c.0.s8 %v2720
        %v2722 = vlaneseq
        %v2723 = vshrl.u32 %v2722, 7
        %v2724 = vsub.s32 %v2721, %v2723
        %v2725 = vrot.slane %v2709, %v2724
        %v2727 = vunpack.c.l.s4 1966171168
        %v2728 = vunpack.c.0.s8 %v2727
        %v2729 = vlaneseq
        %v2730 = vshrl.u32 %v2729, 7
        %v2731 = vsub.s32 %v2728, %v2730
        %v2732 = vrot.slane %v2710, %v2731
        %v2734 = vunpack.c.l.s4 1966171168
        %v2735 = vunpack.c.0.s8 %v2734
        %v2736 = vlaneseq
        %v2737 = vshrl.u32 %v2736, 7
        %v2738 = vsub.s32 %v2735, %v2737
        %v2739 = vrot.slane %v2711, %v2738
        %v2740 = vcombine.low %v2718, %v2725
        %v2741 = vcombine.low %v2732, %v2739
        %v2743 = vunpack.c.l.s4 1966171168
        %v2744 = vunpack.c.0.s8 %v2743
        %v2745 = vlaneseq
        %v2746 = vshrl.u32 %v2745, 7
        %v2747 = vsub.s32 %v2744, %v2746
        %v2748 = vrot.slane %v2740, %v2747
        %v2750 = vunpack.c.l.s4 1966171168
        %v2751 = vunpack.c.0.s8 %v2750
        %v2752 = vlaneseq
        %v2753 = vshrl.u32 %v2752, 7
        %v2754 = vsub.s32 %v2751, %v2753
        %v2755 = vrot.slane %v2741, %v2754
        %v2756 = vcombine.low %v2748, %v2755
        %v2757 = vcombine.low %v1413, %v1417
        %v2758 = vcombine.low %v1421, %v1425
        %v2759 = vcombine.low %v1429, %v1433
        %v2760 = vcombine.low %v1437, %v1441
        %v2762 = vunpack.c.l.s4 1966171168
        %v2763 = vunpack.c.0.s8 %v2762
        %v2764 = vlaneseq
        %v2765 = vshrl.u32 %v2764, 7
        %v2766 = vsub.s32 %v2763, %v2765
        %v2767 = vrot.slane %v2757, %v2766
        %v2769 = vunpack.c.l.s4 1966171168
        %v2770 = vunpack.c.0.s8 %v2769
        %v2771 = vlaneseq
        %v2772 = vshrl.u32 %v2771, 7
        %v2773 = vsub.s32 %v2770, %v2772
        %v2774 = vrot.slane %v2758, %v2773
        %v2776 = vunpack.c.l.s4 1966171168
        %v2777 = vunpack.c.0.s8 %v2776
        %v2778 = vlaneseq
        %v2779 = vshrl.u32 %v2778, 7
        %v2780 = vsub.s32 %v2777, %v2779
        %v2781 = vrot.slane %v2759, %v2780
        %v2783 = vunpack.c.l.s4 1966171168
        %v2784 = vunpack.c.0.s8 %v2783
        %v2785 = vlaneseq
        %v2786 = vshrl.u32 %v2785, 7
        %v2787 = vsub.s32 %v2784, %v2786
        %v2788 = vrot.slane %v2760, %v2787
        %v2789 = vcombine.low %v2767, %v2774
        %v2790 = vcombine.low %v2781, %v2788
        %v2792 = vunpack.c.l.s4 1966171168
        %v2793 = vunpack.c.0.s8 %v2792
        %v2794 = vlaneseq
        %v2795 = vshrl.u32 %v2794, 7
        %v2796 = vsub.s32 %v2793, %v2795
        %v2797 = vrot.slane %v2789, %v2796
        %v2799 = vunpack.c.l.s4 1966171168
        %v2800 = vunpack.c.0.s8 %v2799
        %v2801 = vlaneseq
        %v2802 = vshrl.u32 %v2801, 7
        %v2803 = vsub.s32 %v2800, %v2802
        %v2804 = vrot.slane %v2790, %v2803
        %v2805 = vcombine.low %v2797, %v2804
        %v2806 = vcombine.low %v1445, %v1449
        %v2807 = vcombine.low %v1453, %v1457
        %v2808 = vcombine.low %v1461, %v1465
        %v2809 = vcombine.low %v1469, %v1473
        %v2811 = vunpack.c.l.s4 1966171168
        %v2812 = vunpack.c.0.s8 %v2811
        %v2813 = vlaneseq
        %v2814 = vshrl.u32 %v2813, 7
        %v2815 = vsub.s32 %v2812, %v2814
        %v2816 = vrot.slane %v2806, %v2815
        %v2818 = vunpack.c.l.s4 1966171168
        %v2819 = vunpack.c.0.s8 %v2818
        %v2820 = vlaneseq
        %v2821 = vshrl.u32 %v2820, 7
        %v2822 = vsub.s32 %v2819, %v2821
        %v2823 = vrot.slane %v2807, %v2822
        %v2825 = vunpack.c.l.s4 1966171168
        %v2826 = vunpack.c.0.s8 %v2825
        %v2827 = vlaneseq
        %v2828 = vshrl.u32 %v2827, 7
        %v2829 = vsub.s32 %v2826, %v2828
        %v2830 = vrot.slane %v2808, %v2829
        %v2832 = vunpack.c.l.s4 1966171168
        %v2833 = vunpack.c.0.s8 %v2832
        %v2834 = vlaneseq
        %v2835 = vshrl.u32 %v2834, 7
        %v2836 = vsub.s32 %v2833, %v2835
        %v2837 = vrot.slane %v2809, %v2836
        %v2838 = vcombine.low %v2816, %v2823
        %v2839 = vcombine.low %v2830, %v2837
        %v2841 = vunpack.c.l.s4 1966171168
        %v2842 = vunpack.c.0.s8 %v2841
        %v2843 = vlaneseq
        %v2844 = vshrl.u32 %v2843, 7
        %v2845 = vsub.s32 %v2842, %v2844
        %v2846 = vrot.slane %v2838, %v2845
        %v2848 = vunpack.c.l.s4 1966171168
        %v2849 = vunpack.c.0.s8 %v2848
        %v2850 = vlaneseq
        %v2851 = vshrl.u32 %v2850, 7
        %v2852 = vsub.s32 %v2849, %v2851
        %v2853 = vrot.slane %v2839, %v2852
        %v2854 = vcombine.low %v2846, %v2853
        %v2855 = vcombine.low %v1477, %v1481
        %v2856 = vcombine.low %v1485, %v1489
        %v2857 = vcombine.low %v1493, %v1497
        %v2858 = vcombine.low %v1501, %v1505
        %v2860 = vunpack.c.l.s4 1966171168
        %v2861 = vunpack.c.0.s8 %v2860
        %v2862 = vlaneseq
        %v2863 = vshrl.u32 %v2862, 7
        %v2864 = vsub.s32 %v2861, %v2863
        %v2865 = vrot.slane %v2855, %v2864
        %v2867 = vunpack.c.l.s4 1966171168
        %v2868 = vunpack.c.0.s8 %v2867
        %v2869 = vlaneseq
        %v2870 = vshrl.u32 %v2869, 7
        %v2871 = vsub.s32 %v2868, %v2870
        %v2872 = vrot.slane %v2856, %v2871
        %v2874 = vunpack.c.l.s4 1966171168
        %v2875 = vunpack.c.0.s8 %v2874
        %v2876 = vlaneseq
        %v2877 = vshrl.u32 %v2876, 7
        %v2878 = vsub.s32 %v2875, %v2877
        %v2879 = vrot.slane %v2857, %v2878
        %v2881 = vunpack.c.l.s4 1966171168
        %v2882 = vunpack.c.0.s8 %v2881
        %v2883 = vlaneseq
        %v2884 = vshrl.u32 %v2883, 7
        %v2885 = vsub.s32 %v2882, %v2884
        %v2886 = vrot.slane %v2858, %v2885
        %v2887 = vcombine.low %v2865, %v2872
        %v2888 = vcombine.low %v2879, %v2886
        %v2890 = vunpack.c.l.s4 1966171168
        %v2891 = vunpack.c.0.s8 %v2890
        %v2892 = vlaneseq
        %v2893 = vshrl.u32 %v2892, 7
        %v2894 = vsub.s32 %v2891, %v2893
        %v2895 = vrot.slane %v2887, %v2894
        %v2897 = vunpack.c.l.s4 1966171168
        %v2898 = vunpack.c.0.s8 %v2897
        %v2899 = vlaneseq
        %v2900 = vshrl.u32 %v2899, 7
        %v2901 = vsub.s32 %v2898, %v2900
        %v2902 = vrot.slane %v2888, %v2901
        %v2903 = vcombine.low %v2895, %v2902
        %v2904 = vcombine.low %v1509, %v1513
        %v2905 = vcombine.low %v1517, %v1521
        %v2906 = vcombine.low %v1525, %v1529
        %v2907 = vcombine.low %v1533, %v1537
        %v2909 = vunpack.c.l.s4 1966171168
        %v2910 = vunpack.c.0.s8 %v2909
        %v2911 = vlaneseq
        %v2912 = vshrl.u32 %v2911, 7
        %v2913 = vsub.s32 %v2910, %v2912
        %v2914 = vrot.slane %v2904, %v2913
        %v2916 = vunpack.c.l.s4 1966171168
        %v2917 = vunpack.c.0.s8 %v2916
        %v2918 = vlaneseq
        %v2919 = vshrl.u32 %v2918, 7
        %v2920 = vsub.s32 %v2917, %v2919
        %v2921 = vrot.slane %v2905, %v2920
        %v2923 = vunpack.c.l.s4 1966171168
        %v2924 = vunpack.c.0.s8 %v2923
        %v2925 = vlaneseq
        %v2926 = vshrl.u32 %v2925, 7
        %v2927 = vsub.s32 %v2924, %v2926
        %v2928 = vrot.slane %v2906, %v2927
        %v2930 = vunpack.c.l.s4 1966171168
        %v2931 = vunpack.c.0.s8 %v2930
        %v2932 = vlaneseq
        %v2933 = vshrl.u32 %v2932, 7
        %v2934 = vsub.s32 %v2931, %v2933
        %v2935 = vrot.slane %v2907, %v2934
        %v2936 = vcombine.low %v2914, %v2921
        %v2937 = vcombine.low %v2928, %v2935
        %v2939 = vunpack.c.l.s4 1966171168
        %v2940 = vunpack.c.0.s8 %v2939
        %v2941 = vlaneseq
        %v2942 = vshrl.u32 %v2941, 7
        %v2943 = vsub.s32 %v2940, %v2942
        %v2944 = vrot.slane %v2936, %v2943
        %v2946 = vunpack.c.l.s4 1966171168
        %v2947 = vunpack.c.0.s8 %v2946
        %v2948 = vlaneseq
        %v2949 = vshrl.u32 %v2948, 7
        %v2950 = vsub.s32 %v2947, %v2949
        %v2951 = vrot.slane %v2937, %v2950
        %v2952 = vcombine.low %v2944, %v2951
        %v2953 = vcombine.low %v1541, %v1545
        %v2954 = vcombine.low %v1549, %v1553
        %v2955 = vcombine.low %v1557, %v1561
        %v2956 = vcombine.low %v1565, %v1569
        %v2958 = vunpack.c.l.s4 1966171168
        %v2959 = vunpack.c.0.s8 %v2958
        %v2960 = vlaneseq
        %v2961 = vshrl.u32 %v2960, 7
        %v2962 = vsub.s32 %v2959, %v2961
        %v2963 = vrot.slane %v2953, %v2962
        %v2965 = vunpack.c.l.s4 1966171168
        %v2966 = vunpack.c.0.s8 %v2965
        %v2967 = vlaneseq
        %v2968 = vshrl.u32 %v2967, 7
        %v2969 = vsub.s32 %v2966, %v2968
        %v2970 = vrot.slane %v2954, %v2969
        %v2972 = vunpack.c.l.s4 1966171168
        %v2973 = vunpack.c.0.s8 %v2972
        %v2974 = vlaneseq
        %v2975 = vshrl.u32 %v2974, 7
        %v2976 = vsub.s32 %v2973, %v2975
        %v2977 = vrot.slane %v2955, %v2976
        %v2979 = vunpack.c.l.s4 1966171168
        %v2980 = vunpack.c.0.s8 %v2979
        %v2981 = vlaneseq
        %v2982 = vshrl.u32 %v2981, 7
        %v2983 = vsub.s32 %v2980, %v2982
        %v2984 = vrot.slane %v2956, %v2983
        %v2985 = vcombine.low %v2963, %v2970
        %v2986 = vcombine.low %v2977, %v2984
        %v2988 = vunpack.c.l.s4 1966171168
        %v2989 = vunpack.c.0.s8 %v2988
        %v2990 = vlaneseq
        %v2991 = vshrl.u32 %v2990, 7
        %v2992 = vsub.s32 %v2989, %v2991
        %v2993 = vrot.slane %v2985, %v2992
        %v2995 = vunpack.c.l.s4 1966171168
        %v2996 = vunpack.c.0.s8 %v2995
        %v2997 = vlaneseq
        %v2998 = vshrl.u32 %v2997, 7
        %v2999 = vsub.s32 %v2996, %v2998
        %v3000 = vrot.slane %v2986, %v2999
        %v3001 = vcombine.low %v2993, %v3000
        %v3002 = vcombine.low %v1573, %v1577
        %v3003 = vcombine.low %v1581, %v1585
        %v3004 = vcombine.low %v1589, %v1593
        %v3005 = vcombine.low %v1597, %v1601
        %v3007 = vunpack.c.l.s4 1966171168
        %v3008 = vunpack.c.0.s8 %v3007
        %v3009 = vlaneseq
        %v3010 = vshrl.u32 %v3009, 7
        %v3011 = vsub.s32 %v3008, %v3010
        %v3012 = vrot.slane %v3002, %v3011
        %v3014 = vunpack.c.l.s4 1966171168
        %v3015 = vunpack.c.0.s8 %v3014
        %v3016 = vlaneseq
        %v3017 = vshrl.u32 %v3016, 7
        %v3018 = vsub.s32 %v3015, %v3017
        %v3019 = vrot.slane %v3003, %v3018
        %v3021 = vunpack.c.l.s4 1966171168
        %v3022 = vunpack.c.0.s8 %v3021
        %v3023 = vlaneseq
        %v3024 = vshrl.u32 %v3023, 7
        %v3025 = vsub.s32 %v3022, %v3024
        %v3026 = vrot.slane %v3004, %v3025
        %v3028 = vunpack.c.l.s4 1966171168
        %v3029 = vunpack.c.0.s8 %v3028
        %v3030 = vlaneseq
        %v3031 = vshrl.u32 %v3030, 7
        %v3032 = vsub.s32 %v3029, %v3031
        %v3033 = vrot.slane %v3005, %v3032
        %v3034 = vcombine.low %v3012, %v3019
        %v3035 = vcombine.low %v3026, %v3033
        %v3037 = vunpack.c.l.s4 1966171168
        %v3038 = vunpack.c.0.s8 %v3037
        %v3039 = vlaneseq
        %v3040 = vshrl.u32 %v3039, 7
        %v3041 = vsub.s32 %v3038, %v3040
        %v3042 = vrot.slane %v3034, %v3041
        %v3044 = vunpack.c.l.s4 1966171168
        %v3045 = vunpack.c.0.s8 %v3044
        %v3046 = vlaneseq
        %v3047 = vshrl.u32 %v3046, 7
        %v3048 = vsub.s32 %v3045, %v3047
        %v3049 = vrot.slane %v3035, %v3048
        %v3050 = vcombine.low %v3042, %v3049
        %v3051 = vcombine.low %v1605, %v1609
        %v3052 = vcombine.low %v1613, %v1617
        %v3053 = vcombine.low %v1621, %v1625
        %v3054 = vcombine.low %v1629, %v1633
        %v3056 = vunpack.c.l.s4 1966171168
        %v3057 = vunpack.c.0.s8 %v3056
        %v3058 = vlaneseq
        %v3059 = vshrl.u32 %v3058, 7
        %v3060 = vsub.s32 %v3057, %v3059
        %v3061 = vrot.slane %v3051, %v3060
        %v3063 = vunpack.c.l.s4 1966171168
        %v3064 = vunpack.c.0.s8 %v3063
        %v3065 = vlaneseq
        %v3066 = vshrl.u32 %v3065, 7
        %v3067 = vsub.s32 %v3064, %v3066
        %v3068 = vrot.slane %v3052, %v3067
        %v3070 = vunpack.c.l.s4 1966171168
        %v3071 = vunpack.c.0.s8 %v3070
        %v3072 = vlaneseq
        %v3073 = vshrl.u32 %v3072, 7
        %v3074 = vsub.s32 %v3071, %v3073
        %v3075 = vrot.slane %v3053, %v3074
        %v3077 = vunpack.c.l.s4 1966171168
        %v3078 = vunpack.c.0.s8 %v3077
        %v3079 = vlaneseq
        %v3080 = vshrl.u32 %v3079, 7
        %v3081 = vsub.s32 %v3078, %v3080
        %v3082 = vrot.slane %v3054, %v3081
        %v3083 = vcombine.low %v3061, %v3068
        %v3084 = vcombine.low %v3075, %v3082
        %v3086 = vunpack.c.l.s4 1966171168
        %v3087 = vunpack.c.0.s8 %v3086
        %v3088 = vlaneseq
        %v3089 = vshrl.u32 %v3088, 7
        %v3090 = vsub.s32 %v3087, %v3089
        %v3091 = vrot.slane %v3083, %v3090
        %v3093 = vunpack.c.l.s4 1966171168
        %v3094 = vunpack.c.0.s8 %v3093
        %v3095 = vlaneseq
        %v3096 = vshrl.u32 %v3095, 7
        %v3097 = vsub.s32 %v3094, %v3096
        %v3098 = vrot.slane %v3084, %v3097
        %v3099 = vcombine.low %v3091, %v3098
        %v3100 = vcombine.low %v1637, %v1641
        %v3101 = vcombine.low %v1645, %v1649
        %v3102 = vcombine.low %v1653, %v1657
        %v3103 = vcombine.low %v1661, %v1665
        %v3105 = vunpack.c.l.s4 1966171168
        %v3106 = vunpack.c.0.s8 %v3105
        %v3107 = vlaneseq
        %v3108 = vshrl.u32 %v3107, 7
        %v3109 = vsub.s32 %v3106, %v3108
        %v3110 = vrot.slane %v3100, %v3109
        %v3112 = vunpack.c.l.s4 1966171168
        %v3113 = vunpack.c.0.s8 %v3112
        %v3114 = vlaneseq
        %v3115 = vshrl.u32 %v3114, 7
        %v3116 = vsub.s32 %v3113, %v3115
        %v3117 = vrot.slane %v3101, %v3116
        %v3119 = vunpack.c.l.s4 1966171168
        %v3120 = vunpack.c.0.s8 %v3119
        %v3121 = vlaneseq
        %v3122 = vshrl.u32 %v3121, 7
        %v3123 = vsub.s32 %v3120, %v3122
        %v3124 = vrot.slane %v3102, %v3123
        %v3126 = vunpack.c.l.s4 1966171168
        %v3127 = vunpack.c.0.s8 %v3126
        %v3128 = vlaneseq
        %v3129 = vshrl.u32 %v3128, 7
        %v3130 = vsub.s32 %v3127, %v3129
        %v3131 = vrot.slane %v3103, %v3130
        %v3132 = vcombine.low %v3110, %v3117
        %v3133 = vcombine.low %v3124, %v3131
        %v3135 = vunpack.c.l.s4 1966171168
        %v3136 = vunpack.c.0.s8 %v3135
        %v3137 = vlaneseq
        %v3138 = vshrl.u32 %v3137, 7
        %v3139 = vsub.s32 %v3136, %v3138
        %v3140 = vrot.slane %v3132, %v3139
        %v3142 = vunpack.c.l.s4 1966171168
        %v3143 = vunpack.c.0.s8 %v3142
        %v3144 = vlaneseq
        %v3145 = vshrl.u32 %v3144, 7
        %v3146 = vsub.s32 %v3143, %v3145
        %v3147 = vrot.slane %v3133, %v3146
        %v3148 = vcombine.low %v3140, %v3147
        %v3149 = vcombine.low %v1669, %v1673
        %v3150 = vcombine.low %v1677, %v1681
        %v3151 = vcombine.low %v1685, %v1689
        %v3152 = vcombine.low %v1693, %v1697
        %v3154 = vunpack.c.l.s4 1966171168
        %v3155 = vunpack.c.0.s8 %v3154
        %v3156 = vlaneseq
        %v3157 = vshrl.u32 %v3156, 7
        %v3158 = vsub.s32 %v3155, %v3157
        %v3159 = vrot.slane %v3149, %v3158
        %v3161 = vunpack.c.l.s4 1966171168
        %v3162 = vunpack.c.0.s8 %v3161
        %v3163 = vlaneseq
        %v3164 = vshrl.u32 %v3163, 7
        %v3165 = vsub.s32 %v3162, %v3164
        %v3166 = vrot.slane %v3150, %v3165
        %v3168 = vunpack.c.l.s4 1966171168
        %v3169 = vunpack.c.0.s8 %v3168
        %v3170 = vlaneseq
        %v3171 = vshrl.u32 %v3170, 7
        %v3172 = vsub.s32 %v3169, %v3171
        %v3173 = vrot.slane %v3151, %v3172
        %v3175 = vunpack.c.l.s4 1966171168
        %v3176 = vunpack.c.0.s8 %v3175
        %v3177 = vlaneseq
        %v3178 = vshrl.u32 %v3177, 7
        %v3179 = vsub.s32 %v3176, %v3178
        %v3180 = vrot.slane %v3152, %v3179
        %v3181 = vcombine.low %v3159, %v3166
        %v3182 = vcombine.low %v3173, %v3180
        %v3184 = vunpack.c.l.s4 1966171168
        %v3185 = vunpack.c.0.s8 %v3184
        %v3186 = vlaneseq
        %v3187 = vshrl.u32 %v3186, 7
        %v3188 = vsub.s32 %v3185, %v3187
        %v3189 = vrot.slane %v3181, %v3188
        %v3191 = vunpack.c.l.s4 1966171168
        %v3192 = vunpack.c.0.s8 %v3191
        %v3193 = vlaneseq
        %v3194 = vshrl.u32 %v3193, 7
        %v3195 = vsub.s32 %v3192, %v3194
        %v3196 = vrot.slane %v3182, %v3195
        %v3197 = vcombine.low %v3189, %v3196
        %v3198 = vcombine.low %v1701, %v1705
        %v3199 = vcombine.low %v1709, %v1713
        %v3200 = vcombine.low %v1717, %v1721
        %v3201 = vcombine.low %v1725, %v1729
        %v3203 = vunpack.c.l.s4 1966171168
        %v3204 = vunpack.c.0.s8 %v3203
        %v3205 = vlaneseq
        %v3206 = vshrl.u32 %v3205, 7
        %v3207 = vsub.s32 %v3204, %v3206
        %v3208 = vrot.slane %v3198, %v3207
        %v3210 = vunpack.c.l.s4 1966171168
        %v3211 = vunpack.c.0.s8 %v3210
        %v3212 = vlaneseq
        %v3213 = vshrl.u32 %v3212, 7
        %v3214 = vsub.s32 %v3211, %v3213
        %v3215 = vrot.slane %v3199, %v3214
        %v3217 = vunpack.c.l.s4 1966171168
        %v3218 = vunpack.c.0.s8 %v3217
        %v3219 = vlaneseq
        %v3220 = vshrl.u32 %v3219, 7
        %v3221 = vsub.s32 %v3218, %v3220
        %v3222 = vrot.slane %v3200, %v3221
        %v3224 = vunpack.c.l.s4 1966171168
        %v3225 = vunpack.c.0.s8 %v3224
        %v3226 = vlaneseq
        %v3227 = vshrl.u32 %v3226, 7
        %v3228 = vsub.s32 %v3225, %v3227
        %v3229 = vrot.slane %v3201, %v3228
        %v3230 = vcombine.low %v3208, %v3215
        %v3231 = vcombine.low %v3222, %v3229
        %v3233 = vunpack.c.l.s4 1966171168
        %v3234 = vunpack.c.0.s8 %v3233
        %v3235 = vlaneseq
        %v3236 = vshrl.u32 %v3235, 7
        %v3237 = vsub.s32 %v3234, %v3236
        %v3238 = vrot.slane %v3230, %v3237
        %v3240 = vunpack.c.l.s4 1966171168
        %v3241 = vunpack.c.0.s8 %v3240
        %v3242 = vlaneseq
        %v3243 = vshrl.u32 %v3242, 7
        %v3244 = vsub.s32 %v3241, %v3243
        %v3245 = vrot.slane %v3231, %v3244
        %v3246 = vcombine.low %v3238, %v3245
        %v3247 = vcombine.low %v1733, %v1737
        %v3248 = vcombine.low %v1741, %v1745
        %v3249 = vcombine.low %v1749, %v1753
        %v3250 = vcombine.low %v1757, %v1761
        %v3252 = vunpack.c.l.s4 1966171168
        %v3253 = vunpack.c.0.s8 %v3252
        %v3254 = vlaneseq
        %v3255 = vshrl.u32 %v3254, 7
        %v3256 = vsub.s32 %v3253, %v3255
        %v3257 = vrot.slane %v3247, %v3256
        %v3259 = vunpack.c.l.s4 1966171168
        %v3260 = vunpack.c.0.s8 %v3259
        %v3261 = vlaneseq
        %v3262 = vshrl.u32 %v3261, 7
        %v3263 = vsub.s32 %v3260, %v3262
        %v3264 = vrot.slane %v3248, %v3263
        %v3266 = vunpack.c.l.s4 1966171168
        %v3267 = vunpack.c.0.s8 %v3266
        %v3268 = vlaneseq
        %v3269 = vshrl.u32 %v3268, 7
        %v3270 = vsub.s32 %v3267, %v3269
        %v3271 = vrot.slane %v3249, %v3270
        %v3273 = vunpack.c.l.s4 1966171168
        %v3274 = vunpack.c.0.s8 %v3273
        %v3275 = vlaneseq
        %v3276 = vshrl.u32 %v3275, 7
        %v3277 = vsub.s32 %v3274, %v3276
        %v3278 = vrot.slane %v3250, %v3277
        %v3279 = vcombine.low %v3257, %v3264
        %v3280 = vcombine.low %v3271, %v3278
        %v3282 = vunpack.c.l.s4 1966171168
        %v3283 = vunpack.c.0.s8 %v3282
        %v3284 = vlaneseq
        %v3285 = vshrl.u32 %v3284, 7
        %v3286 = vsub.s32 %v3283, %v3285
        %v3287 = vrot.slane %v3279, %v3286
        %v3289 = vunpack.c.l.s4 1966171168
        %v3290 = vunpack.c.0.s8 %v3289
        %v3291 = vlaneseq
        %v3292 = vshrl.u32 %v3291, 7
        %v3293 = vsub.s32 %v3290, %v3292
        %v3294 = vrot.slane %v3280, %v3293
        %v3295 = vcombine.low %v3287, %v3294
        %v3296 = vcombine.low %v1765, %v1769
        %v3297 = vcombine.low %v1773, %v1777
        %v3298 = vcombine.low %v1781, %v1785
        %v3299 = vcombine.low %v1789, %v1793
        %v3301 = vunpack.c.l.s4 1966171168
        %v3302 = vunpack.c.0.s8 %v3301
        %v3303 = vlaneseq
        %v3304 = vshrl.u32 %v3303, 7
        %v3305 = vsub.s32 %v3302, %v3304
        %v3306 = vrot.slane %v3296, %v3305
        %v3308 = vunpack.c.l.s4 1966171168
        %v3309 = vunpack.c.0.s8 %v3308
        %v3310 = vlaneseq
        %v3311 = vshrl.u32 %v3310, 7
        %v3312 = vsub.s32 %v3309, %v3311
        %v3313 = vrot.slane %v3297, %v3312
        %v3315 = vunpack.c.l.s4 1966171168
        %v3316 = vunpack.c.0.s8 %v3315
        %v3317 = vlaneseq
        %v3318 = vshrl.u32 %v3317, 7
        %v3319 = vsub.s32 %v3316, %v3318
        %v3320 = vrot.slane %v3298, %v3319
        %v3322 = vunpack.c.l.s4 1966171168
        %v3323 = vunpack.c.0.s8 %v3322
        %v3324 = vlaneseq
        %v3325 = vshrl.u32 %v3324, 7
        %v3326 = vsub.s32 %v3323, %v3325
        %v3327 = vrot.slane %v3299, %v3326
        %v3328 = vcombine.low %v3306, %v3313
        %v3329 = vcombine.low %v3320, %v3327
        %v3331 = vunpack.c.l.s4 1966171168
        %v3332 = vunpack.c.0.s8 %v3331
        %v3333 = vlaneseq
        %v3334 = vshrl.u32 %v3333, 7
        %v3335 = vsub.s32 %v3332, %v3334
        %v3336 = vrot.slane %v3328, %v3335
        %v3338 = vunpack.c.l.s4 1966171168
        %v3339 = vunpack.c.0.s8 %v3338
        %v3340 = vlaneseq
        %v3341 = vshrl.u32 %v3340, 7
        %v3342 = vsub.s32 %v3339, %v3341
        %v3343 = vrot.slane %v3329, %v3342
        %v3344 = vcombine.low %v3336, %v3343
        %v3345 = vcombine.low %v1797, %v1801
        %v3346 = vcombine.low %v1805, %v1809
        %v3347 = vcombine.low %v1813, %v1817
        %v3348 = vcombine.low %v1821, %v1825
        %v3350 = vunpack.c.l.s4 1966171168
        %v3351 = vunpack.c.0.s8 %v3350
        %v3352 = vlaneseq
        %v3353 = vshrl.u32 %v3352, 7
        %v3354 = vsub.s32 %v3351, %v3353
        %v3355 = vrot.slane %v3345, %v3354
        %v3357 = vunpack.c.l.s4 1966171168
        %v3358 = vunpack.c.0.s8 %v3357
        %v3359 = vlaneseq
        %v3360 = vshrl.u32 %v3359, 7
        %v3361 = vsub.s32 %v3358, %v3360
        %v3362 = vrot.slane %v3346, %v3361
        %v3364 = vunpack.c.l.s4 1966171168
        %v3365 = vunpack.c.0.s8 %v3364
        %v3366 = vlaneseq
        %v3367 = vshrl.u32 %v3366, 7
        %v3368 = vsub.s32 %v3365, %v3367
        %v3369 = vrot.slane %v3347, %v3368
        %v3371 = vunpack.c.l.s4 1966171168
        %v3372 = vunpack.c.0.s8 %v3371
        %v3373 = vlaneseq
        %v3374 = vshrl.u32 %v3373, 7
        %v3375 = vsub.s32 %v3372, %v3374
        %v3376 = vrot.slane %v3348, %v3375
        %v3377 = vcombine.low %v3355, %v3362
        %v3378 = vcombine.low %v3369, %v3376
        %v3380 = vunpack.c.l.s4 1966171168
        %v3381 = vunpack.c.0.s8 %v3380
        %v3382 = vlaneseq
        %v3383 = vshrl.u32 %v3382, 7
        %v3384 = vsub.s32 %v3381, %v3383
        %v3385 = vrot.slane %v3377, %v3384
        %v3387 = vunpack.c.l.s4 1966171168
        %v3388 = vunpack.c.0.s8 %v3387
        %v3389 = vlaneseq
        %v3390 = vshrl.u32 %v3389, 7
        %v3391 = vsub.s32 %v3388, %v3390
        %v3392 = vrot.slane %v3378, %v3391
        %v3393 = vcombine.low %v3385, %v3392
        %3394 = vset.pattern.permute.xlu0 0
        %3395 = vperm.xlu0 %3394, %v1874
        %v3396 = vpop.permute.xlu0 %3395
        %3397 = vset.pattern.permute.xlu0 0
        %3398 = vperm.xlu0 %3397, %v1923
        %v3399 = vpop.permute.xlu0 %3398
        %3400 = vset.pattern.permute.xlu0 0
        %3401 = vperm.xlu0 %3400, %v1972
        %v3402 = vpop.permute.xlu0 %3401
        %3403 = vset.pattern.permute.xlu0 0
        %3404 = vperm.xlu0 %3403, %v2021
        %v3405 = vpop.permute.xlu0 %3404
        %3406 = vset.pattern.permute.xlu0 0
        %3407 = vperm.xlu0 %3406, %v2070
        %v3408 = vpop.permute.xlu0 %3407
        %3409 = vset.pattern.permute.xlu0 0
        %3410 = vperm.xlu0 %3409, %v2119
        %v3411 = vpop.permute.xlu0 %3410
        %3412 = vset.pattern.permute.xlu0 0
        %3413 = vperm.xlu0 %3412, %v2168
        %v3414 = vpop.permute.xlu0 %3413
        %3415 = vset.pattern.permute.xlu0 0
        %3416 = vperm.xlu0 %3415, %v2217
        %v3417 = vpop.permute.xlu0 %3416
        %3418 = vset.pattern.permute.xlu0 0
        %3419 = vperm.xlu0 %3418, %v2266
        %v3420 = vpop.permute.xlu0 %3419
        %3421 = vset.pattern.permute.xlu0 0
        %3422 = vperm.xlu0 %3421, %v2315
        %v3423 = vpop.permute.xlu0 %3422
        %3424 = vset.pattern.permute.xlu0 0
        %3425 = vperm.xlu0 %3424, %v2364
        %v3426 = vpop.permute.xlu0 %3425
        %3427 = vset.pattern.permute.xlu0 0
        %3428 = vperm.xlu0 %3427, %v2413
        %v3429 = vpop.permute.xlu0 %3428
        %3430 = vset.pattern.permute.xlu0 0
        %3431 = vperm.xlu0 %3430, %v2462
        %v3432 = vpop.permute.xlu0 %3431
        %3433 = vset.pattern.permute.xlu0 0
        %3434 = vperm.xlu0 %3433, %v2511
        %v3435 = vpop.permute.xlu0 %3434
        %3436 = vset.pattern.permute.xlu0 0
        %3437 = vperm.xlu0 %3436, %v2560
        %v3438 = vpop.permute.xlu0 %3437
        %3439 = vset.pattern.permute.xlu0 0
        %3440 = vperm.xlu0 %3439, %v2609
        %v3441 = vpop.permute.xlu0 %3440
        %3442 = vset.pattern.permute.xlu0 0
        %3443 = vperm.xlu0 %3442, %v2658
        %v3444 = vpop.permute.xlu0 %3443
        %3445 = vset.pattern.permute.xlu0 0
        %3446 = vperm.xlu0 %3445, %v2707
        %v3447 = vpop.permute.xlu0 %3446
        %3448 = vset.pattern.permute.xlu0 0
        %3449 = vperm.xlu0 %3448, %v2756
        %v3450 = vpop.permute.xlu0 %3449
        %3451 = vset.pattern.permute.xlu0 0
        %3452 = vperm.xlu0 %3451, %v2805
        %v3453 = vpop.permute.xlu0 %3452
        %3454 = vset.pattern.permute.xlu0 0
        %3455 = vperm.xlu0 %3454, %v2854
        %v3456 = vpop.permute.xlu0 %3455
        %3457 = vset.pattern.permute.xlu0 0
        %3458 = vperm.xlu0 %3457, %v2903
        %v3459 = vpop.permute.xlu0 %3458
        %3460 = vset.pattern.permute.xlu0 0
        %3461 = vperm.xlu0 %3460, %v2952
        %v3462 = vpop.permute.xlu0 %3461
        %3463 = vset.pattern.permute.xlu0 0
        %3464 = vperm.xlu0 %3463, %v3001
        %v3465 = vpop.permute.xlu0 %3464
        %3466 = vset.pattern.permute.xlu0 0
        %3467 = vperm.xlu0 %3466, %v3050
        %v3468 = vpop.permute.xlu0 %3467
        %3469 = vset.pattern.permute.xlu0 0
        %3470 = vperm.xlu0 %3469, %v3099
        %v3471 = vpop.permute.xlu0 %3470
        %3472 = vset.pattern.permute.xlu0 0
        %3473 = vperm.xlu0 %3472, %v3148
        %v3474 = vpop.permute.xlu0 %3473
        %3475 = vset.pattern.permute.xlu0 0
        %3476 = vperm.xlu0 %3475, %v3197
        %v3477 = vpop.permute.xlu0 %3476
        %3478 = vset.pattern.permute.xlu0 0
        %3479 = vperm.xlu0 %3478, %v3246
        %v3480 = vpop.permute.xlu0 %3479
        %3481 = vset.pattern.permute.xlu0 0
        %3482 = vperm.xlu0 %3481, %v3295
        %v3483 = vpop.permute.xlu0 %3482
        %3484 = vset.pattern.permute.xlu0 0
        %3485 = vperm.xlu0 %3484, %v3344
        %v3486 = vpop.permute.xlu0 %3485
        %3487 = vset.pattern.permute.xlu0 0
        %3488 = vperm.xlu0 %3487, %v3393
        %v3489 = vpop.permute.xlu0 %3488
        %v3490 = vlaneseq
        %v3491 = vand.u32 %v3490, 127
        %v3492 = vlaneseq
        %v3493 = vshrl.u32 %v3492, 7
        %v3494 = vsub.s32 %v3491, %v3493
        %v3495 = vrot.slane %v3396, %v3494
        %v3496 = vadd.s32 %v3491, 4294967288
        %v3497 = vlaneseq
        %v3498 = vshrl.u32 %v3497, 7
        %v3499 = vsub.s32 %v3496, %v3498
        %v3500 = vrot.slane %v3399, %v3499
        %vm3501 = vcmask 130112
        %v3502 = vsel %vm3501, %v3500, %v3495
        %v3503 = vadd.s32 %v3491, 4294967280
        %v3504 = vlaneseq
        %v3505 = vshrl.u32 %v3504, 7
        %v3506 = vsub.s32 %v3503, %v3505
        %v3507 = vrot.slane %v3402, %v3506
        %vm3508 = vcmask 195712
        %v3509 = vsel %vm3508, %v3507, %v3502
        %v3510 = vadd.s32 %v3491, 4294967272
        %v3511 = vlaneseq
        %v3512 = vshrl.u32 %v3511, 7
        %v3513 = vsub.s32 %v3510, %v3512
        %v3514 = vrot.slane %v3405, %v3513
        %vm3515 = vcmask 261312
        %v3516 = vsel %vm3515, %v3514, %v3509
        %v3517 = vadd.s32 %v3491, 4294967264
        %v3518 = vlaneseq
        %v3519 = vshrl.u32 %v3518, 7
        %v3520 = vsub.s32 %v3517, %v3519
        %v3521 = vrot.slane %v3408, %v3520
        %vm3522 = vcmask 326912
        %v3523 = vsel %vm3522, %v3521, %v3516
        %v3524 = vadd.s32 %v3491, 4294967256
        %v3525 = vlaneseq
        %v3526 = vshrl.u32 %v3525, 7
        %v3527 = vsub.s32 %v3524, %v3526
        %v3528 = vrot.slane %v3411, %v3527
        %vm3529 = vcmask 392512
        %v3530 = vsel %vm3529, %v3528, %v3523
        %v3531 = vadd.s32 %v3491, 4294967248
        %v3532 = vlaneseq
        %v3533 = vshrl.u32 %v3532, 7
        %v3534 = vsub.s32 %v3531, %v3533
        %v3535 = vrot.slane %v3414, %v3534
        %vm3536 = vcmask 458112
        %v3537 = vsel %vm3536, %v3535, %v3530
        %v3538 = vadd.s32 %v3491, 4294967240
        %v3539 = vlaneseq
        %v3540 = vshrl.u32 %v3539, 7
        %v3541 = vsub.s32 %v3538, %v3540
        %v3542 = vrot.slane %v3417, %v3541
        %vm3543 = vcmask 523712
        %v3544 = vsel %vm3543, %v3542, %v3537
        %v3545 = vadd.s32 %v3491, 4294967232
        %v3546 = vlaneseq
        %v3547 = vshrl.u32 %v3546, 7
        %v3548 = vsub.s32 %v3545, %v3547
        %v3549 = vrot.slane %v3420, %v3548
        %vm3550 = vcmask 589312
        %v3551 = vsel %vm3550, %v3549, %v3544
        %v3552 = vadd.s32 %v3491, 4294967224
        %v3553 = vlaneseq
        %v3554 = vshrl.u32 %v3553, 7
        %v3555 = vsub.s32 %v3552, %v3554
        %v3556 = vrot.slane %v3423, %v3555
        %vm3557 = vcmask 654912
        %v3558 = vsel %vm3557, %v3556, %v3551
        %v3559 = vadd.s32 %v3491, 4294967216
        %v3560 = vlaneseq
        %v3561 = vshrl.u32 %v3560, 7
        %v3562 = vsub.s32 %v3559, %v3561
        %v3563 = vrot.slane %v3426, %v3562
        %vm3564 = vcmask 720512
        %v3565 = vsel %vm3564, %v3563, %v3558
        %v3566 = vadd.s32 %v3491, 4294967208
        %v3567 = vlaneseq
        %v3568 = vshrl.u32 %v3567, 7
        %v3569 = vsub.s32 %v3566, %v3568
        %v3570 = vrot.slane %v3429, %v3569
        %vm3571 = vcmask 786112
        %v3572 = vsel %vm3571, %v3570, %v3565
        %v3573 = vadd.s32 %v3491, 4294967200
        %v3574 = vlaneseq
        %v3575 = vshrl.u32 %v3574, 7
        %v3576 = vsub.s32 %v3573, %v3575
        %v3577 = vrot.slane %v3432, %v3576
        %vm3578 = vcmask 851712
        %v3579 = vsel %vm3578, %v3577, %v3572
        %v3580 = vadd.s32 %v3491, 4294967192
        %v3581 = vlaneseq
        %v3582 = vshrl.u32 %v3581, 7
        %v3583 = vsub.s32 %v3580, %v3582
        %v3584 = vrot.slane %v3435, %v3583
        %vm3585 = vcmask 917312
        %v3586 = vsel %vm3585, %v3584, %v3579
        %v3587 = vadd.s32 %v3491, 4294967184
        %v3588 = vlaneseq
        %v3589 = vshrl.u32 %v3588, 7
        %v3590 = vsub.s32 %v3587, %v3589
        %v3591 = vrot.slane %v3438, %v3590
        %vm3592 = vcmask 982912
        %v3593 = vsel %vm3592, %v3591, %v3586
        %v3594 = vadd.s32 %v3491, 4294967176
        %v3595 = vlaneseq
        %v3596 = vshrl.u32 %v3595, 7
        %v3597 = vsub.s32 %v3594, %v3596
        %v3598 = vrot.slane %v3441, %v3597
        %vm3599 = vcmask 1048512
        %v3600 = vsel %vm3599, %v3598, %v3593
        %v3601 = vlaneseq
        %v3602 = vshrl.u32 %v3601, 7
        %v3603 = vsub.s32 %v3491, %v3602
        %v3604 = vrot.slane %v3444, %v3603
        %v3605 = vlaneseq
        %v3606 = vshrl.u32 %v3605, 7
        %v3607 = vsub.s32 %v3496, %v3606
        %v3608 = vrot.slane %v3447, %v3607
        %v3609 = vsel %vm3501, %v3608, %v3604
        %v3610 = vlaneseq
        %v3611 = vshrl.u32 %v3610, 7
        %v3612 = vsub.s32 %v3503, %v3611
        %v3613 = vrot.slane %v3450, %v3612
        %v3614 = vsel %vm3508, %v3613, %v3609
        %v3615 = vlaneseq
        %v3616 = vshrl.u32 %v3615, 7
        %v3617 = vsub.s32 %v3510, %v3616
        %v3618 = vrot.slane %v3453, %v3617
        %v3619 = vsel %vm3515, %v3618, %v3614
        %v3620 = vlaneseq
        %v3621 = vshrl.u32 %v3620, 7
        %v3622 = vsub.s32 %v3517, %v3621
        %v3623 = vrot.slane %v3456, %v3622
        %v3624 = vsel %vm3522, %v3623, %v3619
        %v3625 = vlaneseq
        %v3626 = vshrl.u32 %v3625, 7
        %v3627 = vsub.s32 %v3524, %v3626
        %v3628 = vrot.slane %v3459, %v3627
        %v3629 = vsel %vm3529, %v3628, %v3624
        %v3630 = vlaneseq
        %v3631 = vshrl.u32 %v3630, 7
        %v3632 = vsub.s32 %v3531, %v3631
        %v3633 = vrot.slane %v3462, %v3632
        %v3634 = vsel %vm3536, %v3633, %v3629
        %v3635 = vlaneseq
        %v3636 = vshrl.u32 %v3635, 7
        %v3637 = vsub.s32 %v3538, %v3636
        %v3638 = vrot.slane %v3465, %v3637
        %v3639 = vsel %vm3543, %v3638, %v3634
        %v3640 = vlaneseq
        %v3641 = vshrl.u32 %v3640, 7
        %v3642 = vsub.s32 %v3545, %v3641
        %v3643 = vrot.slane %v3468, %v3642
        %v3644 = vsel %vm3550, %v3643, %v3639
        %v3645 = vlaneseq
        %v3646 = vshrl.u32 %v3645, 7
        %v3647 = vsub.s32 %v3552, %v3646
        %v3648 = vrot.slane %v3471, %v3647
        %v3649 = vsel %vm3557, %v3648, %v3644
        %v3650 = vlaneseq
        %v3651 = vshrl.u32 %v3650, 7
        %v3652 = vsub.s32 %v3559, %v3651
        %v3653 = vrot.slane %v3474, %v3652
        %v3654 = vsel %vm3564, %v3653, %v3649
        %v3655 = vlaneseq
        %v3656 = vshrl.u32 %v3655, 7
        %v3657 = vsub.s32 %v3566, %v3656
        %v3658 = vrot.slane %v3477, %v3657
        %v3659 = vsel %vm3571, %v3658, %v3654
        %v3660 = vlaneseq
        %v3661 = vshrl.u32 %v3660, 7
        %v3662 = vsub.s32 %v3573, %v3661
        %v3663 = vrot.slane %v3480, %v3662
        %v3664 = vsel %vm3578, %v3663, %v3659
        %v3665 = vlaneseq
        %v3666 = vshrl.u32 %v3665, 7
        %v3667 = vsub.s32 %v3580, %v3666
        %v3668 = vrot.slane %v3483, %v3667
        %v3669 = vsel %vm3585, %v3668, %v3664
        %v3670 = vlaneseq
        %v3671 = vshrl.u32 %v3670, 7
        %v3672 = vsub.s32 %v3587, %v3671
        %v3673 = vrot.slane %v3486, %v3672
        %v3674 = vsel %vm3592, %v3673, %v3669
        %v3675 = vlaneseq
        %v3676 = vshrl.u32 %v3675, 7
        %v3677 = vsub.s32 %v3594, %v3676
        %v3678 = vrot.slane %v3489, %v3677
        %v3679 = vsel %vm3599, %v3678, %v3674
        %v3680 = vcombine.low %v3600, %v3679
        %v3682 = vunpack.c.l.s4 1966171168
        %v3683 = vunpack.c.0.s8 %v3682
        %v3684 = vlaneseq
        %v3685 = vshrl.u32 %v3684, 7
        %v3686 = vsub.s32 %v3683, %v3685
        %v3687 = vrot.slane %v3680, %v3686
        %v3689 = vunpack.c.l.s4 1966171168
        %v3690 = vunpack.c.0.s8 %v3689
        %v3691 = vlaneseq
        %v3692 = vshrl.u32 %v3691, 7
        %v3693 = vsub.s32 %v3690, %v3692
        %v3694 = vrot.slane %v3687, %v3693
        %v3695 = vlaneseq
        %vm3696 = vcmp.ge.s32.totalorder %v3695, 0
        %vm3697 = vcmp.lt.s32.totalorder %v3695, 256
        %vm3698 = vmand %vm3696, %vm3697
        %3699 = vst.msk [vmem:[%s215] sm:$0x3] %vm3698, %v3694
        %s3700 = sand.u32 %s97, 1
        %s3701 = scalar_lea.sflag [#allocation4], %s3700
        %s3702 = sand.u32 %s97, 1
        %s3703 = smul.addr %s3702, 2
        %s3704 = scalar_lea.vmem [#allocation8], %s3703
        // Predicated region
        $region45: #{tpu_custom_call.1} parent=31 // pred_check
          %p3705 = pneg %p107
        $region46: #{tpu_custom_call.1} parent=31 // pred_check_branch
          %3707 = sbr.rel (%p3705) target = $region48
        $region47: #{tpu_custom_call.1} parent=31 // pred_region
          %s3709 = ssub.s32 32, 32
          %3710 = vsyncadd %s3701, %s3709
          %s3711 = smul.addr %s21, 2
          %s3712 = smul.addr %s3711, 16
          %s3713 = scalar_lea.hbm %s3, %s3712
          %s3715 = sshll.u32 %s3704, 4
          %s3716 = int_to_ptr.vmem [resolvable:$true] %s3715
          %3718 = dma.vmem_to_hbm [thread:$0]  %s3716, 32, %s3713, %s3701
        $region48: #{tpu_custom_call.1} parent=31 // pred_fallthru
          _
      $region32: #{tpu_custom_call.1} parent=5 // pred_fallthru
        _
      %p3719 = scmp.le.s32.totalorder 2, %s16
      // Predicated region
      $region49: #{tpu_custom_call.1} parent=5 // pred_check
        %p3720 = pneg %p3719
      $region50: #{tpu_custom_call.1} parent=5 // pred_check_branch
        %3722 = sbr.rel (%p3720) target = $region52
      $region51: #{tpu_custom_call.1} parent=5 // pred_region
        %s3723 = ssub.s32 %s16, 2
        // Predicated region
        $region53: #{tpu_custom_call.1} parent=51 // pred_check
          %p3724 = pneg %p113
        $region54: #{tpu_custom_call.1} parent=51 // pred_check_branch
          %3726 = sbr.rel (%p3724) target = $region56
        $region55: #{tpu_custom_call.1} parent=51 // pred_region
          %s3727 = sand.u32 %s98, 1
          %s3728 = scalar_lea.sflag [#allocation4], %s3727
          %s3729 = sand.u32 %s98, 1
          %s3730 = smul.addr %s3729, 2
          %s3731 = scalar_lea.vmem [#allocation8], %s3730
          %3732 = dma.done %s3728, 32
        $region56: #{tpu_custom_call.1} parent=51 // pred_fallthru
          _
      $region52: #{tpu_custom_call.1} parent=5 // pred_fallthru
        _
    $region6: #{tpu_custom_call.1} parent=1 // loop_footer
      %s20 = sadd.s32 1, %s16
    $region7: #{tpu_custom_call.1} parent=1 // loop_footer_branch
      %15 = sbr.rel target = $region3
    $region8: #{tpu_custom_call.1} parent=1 // loop_exit
      _
    %3733 = vsyncpa [#allocation3], 1
    %s3734 = scalar_lea.sflag [#allocation3], 1
    %3735 = vsyncpa %s3734, 1
    %3736 = vsyncpa [#allocation6], 1
    %3737 = vsyncpa [#allocation4], 1
    %s3738 = scalar_lea.sflag [#allocation4], 1
    %3739 = vsyncpa %s3738, 1

// kernel: tpu_custom_call.1
$region0: #{tpu_custom_call.1}
  #allocation0 [shape = 'u32[]', space=smem, size = 0x4, offset = 0x4, fixed_abs, tag = 'smem constant byte address 0x4 - core index']
  #allocation1 [shape = 'u32[144,128]{1,0:T(1,128)}', space=vmem, size = 0x12000, scoped, tag = 'internal scratch']
  %s0 = inlined_call_operand.hbm [shape: bf16[512,128], index: 0, kind: input, shape index: {}]
  %s1 = inlined_call_operand.hbm [shape: bf16[128,128], index: 1, kind: input, shape index: {}]
  %s2 = inlined_call_operand.hbm [shape: f32[1,128], index: 2, kind: input, shape index: {}]
  %s3 = inlined_call_operand.hbm [shape: s32[2,1,256], index: 3, kind: output, shape index: {}]
  %s4 = sld [smem:[#allocation0]]
  $region57: #{tpu_custom_call.1} parent=0
    _
  %s6 = ssub.s32 1, %s4
  %s7 = scalar_select 0, %s6, %s4
  $region1: #{tpu_custom_call.1} parent=0
    #allocation2 [shape = 'u8[131072]{0}', space=vmem, size = 0x20000, scoped, tag = 'input window, operand 0']
    #allocation3 [shape = 's32[2]{0}', space=sflag, size = 0x8, scoped, tag = 'scoped memory for tpu_custom_call.1']
    #allocation4 [shape = 's32[2]{0}', space=sflag, size = 0x8, scoped, tag = 'scoped memory for tpu_custom_call.1']
    #allocation5 [shape = 'u8[32768]{0}', space=vmem, size = 0x8000, scoped, tag = 'input window, operand 1, single buffered']
    #allocation6 [shape = 's32[1]{0}', space=sflag, size = 0x4, scoped, tag = 'scoped memory for tpu_custom_call.1']
    #allocation7 [shape = 'u8[512]{0}', space=vmem, size = 0x400, scoped, tag = 'input window, operand 2, single buffered']
    #allocation8 [shape = 'u8[2048]{0}', space=vmem, size = 0x800, scoped, tag = 'output window, operand 0']
    %8 = vsyncpa [#allocation3], 0
    %s9 = scalar_lea.sflag [#allocation3], 1
    %10 = vsyncpa %s9, 0
    %11 = vsyncpa [#allocation6], 0
    %12 = vsyncpa [#allocation4], 0
    %s13 = scalar_lea.sflag [#allocation4], 1
    %14 = vsyncpa %s13, 0
    loop: start=0, step=1, limit=4
    $region2: #{tpu_custom_call.1} parent=1 // loop_pre_header
      _
    $region3: #{tpu_custom_call.1} parent=1 // loop_header
      %s16 = sphi 0, %s20
      %p17 = scmp.ge.s32.totalorder %s16, 4
      %s26 = sphi 0, %s28
      %s29 = sphi 0, %s26
      %s30 = sphi 0, %s29
      %s46 = sphi 0, %s30
      %s50 = sphi 0, %s50
      %s52 = sphi 0, %s50
      %s53 = sphi 0, %s52
      %s67 = sphi 0, %s53
      %s71 = sphi 0, %s71
      %s73 = sphi 0, %s71
      %s74 = sphi 0, %s73
      %s88 = sphi 0, %s74
      %s94 = sphi 0, %s96
      %s97 = sphi 0, %s94
      %s98 = sphi 0, %s97
      %s114 = sphi 0, %s98
    $region4: #{tpu_custom_call.1} parent=1 // loop_header_branch
      %19 = sbr.rel (%p17) target = $region8
    $region5: #{tpu_custom_call.1} parent=1 // loop_body
      %s21 = ssub.s32 %s16, 1
      %s22 = ssub.s32 %s16, 2
      %s23 = sadd.s32 %s16, 1
      %s24 = ssub.s32 %s16, %s23
      %p25 = scmp.eq.s32.totalorder %s24, 0
      %s27 = sadd.s32 %s26, 1
      %s28 = scalar_select %p25, %s26, %s27
      %p31 = pneg %p25
      %p32 = scmp.eq.s32.totalorder %s16, 1
      %p33 = por %p31, %p32
      %p34 = scmp.ne.s32.totalorder %s26, %s29
      %p35 = scmp.eq.s32.totalorder %s16, 0
      %p36 = por %p34, %p35
      %p37 = scmp.ne.s32.totalorder %s26, %s29
      %p38 = scmp.eq.s32.totalorder %s21, 1
      %p39 = por %p37, %p38
      %p40 = scmp.ne.s32.totalorder %s29, %s30
      %p41 = scmp.eq.s32.totalorder %s21, 0
      %p42 = por %p40, %p41
      %p43 = scmp.ne.s32.totalorder %s29, %s30
      %p44 = scmp.eq.s32.totalorder %s22, 1
      %p45 = por %p43, %p44
      %p47 = scmp.ne.s32.totalorder %s30, %s46
      %p48 = scmp.eq.s32.totalorder %s22, 0
      %p49 = por %p47, %p48
      %s51 = sadd.s32 %s50, 1
      %p54 = scmp.eq.s32.totalorder %s16, 1
      %p55 = scmp.ne.s32.totalorder %s50, %s52
      %p56 = scmp.eq.s32.totalorder %s16, 0
      %p57 = por %p55, %p56
      %p58 = scmp.ne.s32.totalorder %s50, %s52
      %p59 = scmp.eq.s32.totalorder %s21, 1
      %p60 = por %p58, %p59
      %p61 = scmp.ne.s32.totalorder %s52, %s53
      %p62 = scmp.eq.s32.totalorder %s21, 0
      %p63 = por %p61, %p62
      %p64 = scmp.ne.s32.totalorder %s52, %s53
      %p65 = scmp.eq.s32.totalorder %s22, 1
      %p66 = por %p64, %p65
      %p68 = scmp.ne.s32.totalorder %s53, %s67
      %p69 = scmp.eq.s32.totalorder %s22, 0
      %p70 = por %p68, %p69
      %s72 = sadd.s32 %s71, 1
      %p75 = scmp.eq.s32.totalorder %s16, 1
      %p76 = scmp.ne.s32.totalorder %s71, %s73
      %p77 = scmp.eq.s32.totalorder %s16, 0
      %p78 = por %p76, %p77
      %p79 = scmp.ne.s32.totalorder %s71, %s73
      %p80 = scmp.eq.s32.totalorder %s21, 1
      %p81 = por %p79, %p80
      %p82 = scmp.ne.s32.totalorder %s73, %s74
      %p83 = scmp.eq.s32.totalorder %s21, 0
      %p84 = por %p82, %p83
      %p85 = scmp.ne.s32.totalorder %s73, %s74
      %p86 = scmp.eq.s32.totalorder %s22, 1
      %p87 = por %p85, %p86
      %p89 = scmp.ne.s32.totalorder %s74, %s88
      %p90 = scmp.eq.s32.totalorder %s22, 0
      %p91 = por %p89, %p90
      %s92 = ssub.s32 %s16, %s23
      %p93 = scmp.eq.s32.totalorder %s92, 0
      %s95 = sadd.s32 %s94, 1
      %s96 = scalar_select %p93, %s94, %s95
      %p99 = pneg %p93
      %p100 = scmp.eq.s32.totalorder %s16, 1
      %p101 = por %p99, %p100
      %p102 = scmp.ne.s32.totalorder %s94, %s97
      %p103 = scmp.eq.s32.totalorder %s16, 0
      %p104 = por %p102, %p103
      %p105 = scmp.ne.s32.totalorder %s94, %s97
      %p106 = scmp.eq.s32.totalorder %s21, 1
      %p107 = por %p105, %p106
      %p108 = scmp.ne.s32.totalorder %s97, %s98
      %p109 = scmp.eq.s32.totalorder %s21, 0
      %p110 = por %p108, %p109
      %p111 = scmp.ne.s32.totalorder %s97, %s98
      %p112 = scmp.eq.s32.totalorder %s22, 1
      %p113 = por %p111, %p112
      %p115 = scmp.ne.s32.totalorder %s98, %s114
      %p116 = scmp.eq.s32.totalorder %s22, 0
      %p117 = por %p115, %p116
      %p118 = scmp.le.s32.totalorder 1, %s16
      %p119 = scmp.lt.s32.totalorder %s16, 3
      %p120 = pnand %p118, %p119
      %p121 = pneg %p120
      // Predicated region
      $region9: #{tpu_custom_call.1} parent=5 // pred_check
        _
      $region10: #{tpu_custom_call.1} parent=5 // pred_check_branch
        %123 = sbr.rel (%p120) target = $region12
      $region11: #{tpu_custom_call.1} parent=5 // pred_region
        %s124 = ssub.s32 %s16, 1
        // Predicated region
        $region13: #{tpu_custom_call.1} parent=11 // pred_check
          %p125 = pneg %p63
        $region14: #{tpu_custom_call.1} parent=11 // pred_check_branch
          %127 = sbr.rel (%p125) target = $region16
        $region15: #{tpu_custom_call.1} parent=11 // pred_region
          %s129 = ssub.s32 1024, 1024
          %130 = vsyncadd [#allocation6], %s129
          %s131 = sshll.u32 [#allocation5], 4
          %s132 = int_to_ptr.vmem [resolvable:$true] %s131
          %137 = dma.hbm_to_vmem [thread:$0]  %s1, 1024, %s132, [#allocation6], 64, 64, 4
        $region16: #{tpu_custom_call.1} parent=11 // pred_fallthru
          _
        // Predicated region
        $region17: #{tpu_custom_call.1} parent=11 // pred_check
          %p138 = pneg %p84
        $region18: #{tpu_custom_call.1} parent=11 // pred_check_branch
          %140 = sbr.rel (%p138) target = $region20
        $region19: #{tpu_custom_call.1} parent=11 // pred_region
          %s142 = ssub.s32 16, 16
          %143 = vsyncadd [#allocation6], %s142
          %s145 = sshll.u32 [#allocation7], 4
          %s146 = int_to_ptr.vmem [resolvable:$true] %s145
          %148 = dma.hbm_to_vmem [thread:$0]  %s2, 16, %s146, [#allocation6]
        $region20: #{tpu_custom_call.1} parent=11 // pred_fallthru
          _
      $region12: #{tpu_custom_call.1} parent=5 // pred_fallthru
        _
      %p149 = scmp.lt.s32.totalorder %s16, 2
      // Predicated region
      $region21: #{tpu_custom_call.1} parent=5 // pred_check
        %p150 = pneg %p149
      $region22: #{tpu_custom_call.1} parent=5 // pred_check_branch
        %152 = sbr.rel (%p150) target = $region24
      $region23: #{tpu_custom_call.1} parent=5 // pred_region
        // Predicated region
        $region25: #{tpu_custom_call.1} parent=23 // pred_check
          %p153 = pneg %p36
        $region26: #{tpu_custom_call.1} parent=23 // pred_check_branch
          %155 = sbr.rel (%p153) target = $region28
        $region27: #{tpu_custom_call.1} parent=23 // pred_region
          %s156 = sand.u32 %s26, 1
          %s157 = scalar_lea.sflag [#allocation3], %s156
          %s158 = sand.u32 %s26, 1
          %s159 = smul.addr %s158, 128
          %s160 = scalar_lea.vmem [#allocation2], %s159
          %s161 = smul.u32 32, %s16
          %s163 = ssub.s32 2048, 2048
          %164 = vsyncadd %s157, %s163
          %s165 = smul.addr %s161, 64
          %s166 = scalar_lea.hbm %s0, %s165
          %s167 = sshll.u32 %s160, 4
          %s168 = int_to_ptr.vmem [resolvable:$true] %s167
          %173 = dma.hbm_to_vmem [thread:$0]  %s166, 2048, %s168, %s157, 64, 64, 4
        $region28: #{tpu_custom_call.1} parent=23 // pred_fallthru
          _
      $region24: #{tpu_custom_call.1} parent=5 // pred_fallthru
        _
      %p174 = scmp.le.s32.totalorder 1, %s16
      %p175 = scmp.lt.s32.totalorder %s16, 3
      %p176 = pnand %p174, %p175
      %p177 = pneg %p176
      // Predicated region
      $region29: #{tpu_custom_call.1} parent=5 // pred_check
        _
      $region30: #{tpu_custom_call.1} parent=5 // pred_check_branch
        %179 = sbr.rel (%p176) target = $region32
      $region31: #{tpu_custom_call.1} parent=5 // pred_region
        %s180 = ssub.s32 %s16, 1
        %s181 = sand.u32 %s29, 1
        %s182 = scalar_lea.sflag [#allocation3], %s181
        %s183 = sand.u32 %s29, 1
        %s184 = smul.addr %s183, 128
        %s185 = scalar_lea.vmem [#allocation2], %s184
        // Predicated region
        $region33: #{tpu_custom_call.1} parent=31 // pred_check
          %p186 = pneg %p42
        $region34: #{tpu_custom_call.1} parent=31 // pred_check_branch
          %188 = sbr.rel (%p186) target = $region36
        $region35: #{tpu_custom_call.1} parent=31 // pred_region
          %189 = dma.done %s182, 2048
        $region36: #{tpu_custom_call.1} parent=31 // pred_fallthru
          _
        // Predicated region
        $region37: #{tpu_custom_call.1} parent=31 // pred_check
          %p190 = pneg %p63
        $region38: #{tpu_custom_call.1} parent=31 // pred_check_branch
          %192 = sbr.rel (%p190) target = $region40
        $region39: #{tpu_custom_call.1} parent=31 // pred_region
          %193 = dma.done [#allocation6], 1024
        $region40: #{tpu_custom_call.1} parent=31 // pred_fallthru
          _
        // Predicated region
        $region41: #{tpu_custom_call.1} parent=31 // pred_check
          %p194 = pneg %p84
        $region42: #{tpu_custom_call.1} parent=31 // pred_check_branch
          %196 = sbr.rel (%p194) target = $region44
        $region43: #{tpu_custom_call.1} parent=31 // pred_region
          %197 = dma.done [#allocation6], 16
        $region44: #{tpu_custom_call.1} parent=31 // pred_fallthru
          _
        %s198 = sand.u32 %s29, 1
        %s199 = scalar_lea.sflag [#allocation3], %s198
        %s200 = sand.u32 %s29, 1
        %s201 = smul.addr %s200, 128
        %s202 = scalar_lea.vmem [#allocation2], %s201
        %p203 = pneg %p42
        %p204 = pneg %p39
        %p205 = pneg %p63
        %p206 = pneg %p60
        %p207 = pneg %p84
        %p208 = pneg %p81
        %p209 = pneg %p110
        %p210 = pneg %p107
        %s211 = sand.u32 %s97, 1
        %s212 = scalar_lea.sflag [#allocation4], %s211
        %s213 = sand.u32 %s97, 1
        %s214 = smul.addr %s213, 2
        %s215 = scalar_lea.vmem [#allocation8], %s214
        %s216 = smul.u32 32, %s21
        %v218 = vld [vmem:[%s185] sm:$0xf]
        %v219 = vld [vmem:[%s185 + $0x4] sm:$0xf]
        %v220 = vld [vmem:[%s185 + $0x8] sm:$0xf]
        %v221 = vld [vmem:[%s185 + $0xc] sm:$0xf]
        %v222 = vld [vmem:[%s185 + $0x10] sm:$0xf]
        %v223 = vld [vmem:[%s185 + $0x14] sm:$0xf]
        %v224 = vld [vmem:[%s185 + $0x18] sm:$0xf]
        %v225 = vld [vmem:[%s185 + $0x1c] sm:$0xf]
        %v226 = vld [vmem:[%s185 + $0x20] sm:$0xf]
        %v227 = vld [vmem:[%s185 + $0x24] sm:$0xf]
        %v228 = vld [vmem:[%s185 + $0x28] sm:$0xf]
        %v229 = vld [vmem:[%s185 + $0x2c] sm:$0xf]
        %v230 = vld [vmem:[%s185 + $0x30] sm:$0xf]
        %v231 = vld [vmem:[%s185 + $0x34] sm:$0xf]
        %v232 = vld [vmem:[%s185 + $0x38] sm:$0xf]
        %v233 = vld [vmem:[%s185 + $0x3c] sm:$0xf]
        %v234 = vld [vmem:[%s185 + $0x40] sm:$0xf]
        %v235 = vld [vmem:[%s185 + $0x44] sm:$0xf]
        %v236 = vld [vmem:[%s185 + $0x48] sm:$0xf]
        %v237 = vld [vmem:[%s185 + $0x4c] sm:$0xf]
        %v238 = vld [vmem:[%s185 + $0x50] sm:$0xf]
        %v239 = vld [vmem:[%s185 + $0x54] sm:$0xf]
        %v240 = vld [vmem:[%s185 + $0x58] sm:$0xf]
        %v241 = vld [vmem:[%s185 + $0x5c] sm:$0xf]
        %v242 = vld [vmem:[%s185 + $0x60] sm:$0xf]
        %v243 = vld [vmem:[%s185 + $0x64] sm:$0xf]
        %v244 = vld [vmem:[%s185 + $0x68] sm:$0xf]
        %v245 = vld [vmem:[%s185 + $0x6c] sm:$0xf]
        %v246 = vld [vmem:[%s185 + $0x70] sm:$0xf]
        %v247 = vld [vmem:[%s185 + $0x74] sm:$0xf]
        %v248 = vld [vmem:[%s185 + $0x78] sm:$0xf]
        %v249 = vld [vmem:[%s185 + $0x7c] sm:$0xf]
        %v250 = vld [vmem:[#allocation5] sm:$0xf]
        %v251 = vld [vmem:[#allocation5 + $0x4] sm:$0xf]
        %v252 = vld [vmem:[#allocation5 + $0x8] sm:$0xf]
        %v253 = vld [vmem:[#allocation5 + $0xc] sm:$0xf]
        %v254 = vld [vmem:[#allocation5 + $0x10] sm:$0xf]
        %v255 = vld [vmem:[#allocation5 + $0x14] sm:$0xf]
        %v256 = vld [vmem:[#allocation5 + $0x18] sm:$0xf]
        %v257 = vld [vmem:[#allocation5 + $0x1c] sm:$0xf]
        %v258 = vld [vmem:[#allocation5 + $0x20] sm:$0xf]
        %v259 = vld [vmem:[#allocation5 + $0x24] sm:$0xf]
        %v260 = vld [vmem:[#allocation5 + $0x28] sm:$0xf]
        %v261 = vld [vmem:[#allocation5 + $0x2c] sm:$0xf]
        %v262 = vld [vmem:[#allocation5 + $0x30] sm:$0xf]
        %v263 = vld [vmem:[#allocation5 + $0x34] sm:$0xf]
        %v264 = vld [vmem:[#allocation5 + $0x38] sm:$0xf]
        %v265 = vld [vmem:[#allocation5 + $0x3c] sm:$0xf]
        %v298 = vunpack.c.l.b16 %v218
        %v299 = vunpack.c.l.b16 %v219
        %v300 = vunpack.c.l.b16 %v220
        %v301 = vunpack.c.l.b16 %v221
        %v302 = vunpack.c.l.b16 %v222
        %v303 = vunpack.c.l.b16 %v223
        %v304 = vunpack.c.l.b16 %v224
        %v305 = vunpack.c.l.b16 %v225
        %v306 = vunpack.c.l.b16 %v226
        %v307 = vunpack.c.l.b16 %v227
        %v308 = vunpack.c.l.b16 %v228
        %v309 = vunpack.c.l.b16 %v229
        %v310 = vunpack.c.l.b16 %v230
        %v311 = vunpack.c.l.b16 %v231
        %v312 = vunpack.c.l.b16 %v232
        %v313 = vunpack.c.l.b16 %v233
        %v314 = vunpack.c.l.b16 %v234
        %v315 = vunpack.c.l.b16 %v235
        %v316 = vunpack.c.l.b16 %v236
        %v317 = vunpack.c.l.b16 %v237
        %v318 = vunpack.c.l.b16 %v238
        %v319 = vunpack.c.l.b16 %v239
        %v320 = vunpack.c.l.b16 %v240
        %v321 = vunpack.c.l.b16 %v241
        %v322 = vunpack.c.l.b16 %v242
        %v323 = vunpack.c.l.b16 %v243
        %v324 = vunpack.c.l.b16 %v244
        %v325 = vunpack.c.l.b16 %v245
        %v326 = vunpack.c.l.b16 %v246
        %v327 = vunpack.c.l.b16 %v247
        %v328 = vunpack.c.l.b16 %v248
        %v329 = vunpack.c.l.b16 %v249
        %v330 = vpack.c.b16 %v299, %v298
        %v331 = vpack.c.b16 %v301, %v300
        %v332 = vpack.c.b16 %v303, %v302
        %v333 = vpack.c.b16 %v305, %v304
        %v334 = vpack.c.b16 %v307, %v306
        %v335 = vpack.c.b16 %v309, %v308
        %v336 = vpack.c.b16 %v311, %v310
        %v337 = vpack.c.b16 %v313, %v312
        %v338 = vpack.c.b16 %v315, %v314
        %v339 = vpack.c.b16 %v317, %v316
        %v340 = vpack.c.b16 %v319, %v318
        %v341 = vpack.c.b16 %v321, %v320
        %v342 = vpack.c.b16 %v323, %v322
        %v343 = vpack.c.b16 %v325, %v324
        %v344 = vpack.c.b16 %v327, %v326
        %v345 = vpack.c.b16 %v329, %v328
        %v378 = vunpack.c.l.b16 %v250
        %v379 = vunpack.c.l.b16 %v251
        %v380 = vunpack.c.l.b16 %v252
        %v381 = vunpack.c.l.b16 %v253
        %v382 = vunpack.c.l.b16 %v254
        %v383 = vunpack.c.l.b16 %v255
        %v384 = vunpack.c.l.b16 %v256
        %v385 = vunpack.c.l.b16 %v257
        %v386 = vunpack.c.l.b16 %v258
        %v387 = vunpack.c.l.b16 %v259
        %v388 = vunpack.c.l.b16 %v260
        %v389 = vunpack.c.l.b16 %v261
        %v390 = vunpack.c.l.b16 %v262
        %v391 = vunpack.c.l.b16 %v263
        %v392 = vunpack.c.l.b16 %v264
        %v393 = vunpack.c.l.b16 %v265
        %v394 = vpack.c.b16 %v379, %v378
        %v395 = vpack.c.b16 %v381, %v380
        %v396 = vpack.c.b16 %v383, %v382
        %v397 = vpack.c.b16 %v385, %v384
        %v398 = vpack.c.b16 %v387, %v386
        %v399 = vpack.c.b16 %v389, %v388
        %v400 = vpack.c.b16 %v391, %v390
        %v401 = vpack.c.b16 %v393, %v392
        %410 = vmatprep.subr.bf16.mxu0 0
        %411 = vmatpush1.bf16.msra.mxu0 %v394
        %412 = vmatprep.subr.bf16.mxu0 0
        %413 = vmatpush1.bf16.msra.mxu0 %v395
        %414 = vmatprep.subr.bf16.mxu0 0
        %415 = vmatpush1.bf16.msra.mxu0 %v396
        %416 = vmatprep.subr.bf16.mxu0 0
        %417 = vmatpush1.bf16.msra.mxu0 %v397
        %418 = vmatprep.subr.bf16.mxu0 0
        %419 = vmatpush1.bf16.msra.mxu0 %v398
        %420 = vmatprep.subr.bf16.mxu0 0
        %421 = vmatpush1.bf16.msra.mxu0 %v399
        %422 = vmatprep.subr.bf16.mxu0 0
        %423 = vmatpush1.bf16.msra.mxu0 %v400
        %424 = vmatprep.subr.bf16.mxu0 0
        %425 = vmatpush1.bf16.msra.mxu0 %v401
        %426 = vmatprep.subr.bf16.mxu0 0
        %427 = vmatpush1.bf16.msra.mxu0 0
        %428 = vmatprep.subr.bf16.mxu0 0
        %429 = vmatpush1.bf16.msra.mxu0 0
        %430 = vmatprep.subr.bf16.mxu0 0
        %431 = vmatpush1.bf16.msra.mxu0 0
        %432 = vmatprep.subr.bf16.mxu0 0
        %433 = vmatpush1.bf16.msra.mxu0 0
        %434 = vmatprep.subr.bf16.mxu0 0
        %435 = vmatpush1.bf16.msra.mxu0 0
        %436 = vmatprep.subr.bf16.mxu0 0
        %437 = vmatpush1.bf16.msra.mxu0 0
        %438 = vmatprep.subr.bf16.mxu0 0
        %439 = vmatpush1.bf16.msra.mxu0 0
        %440 = vmatprep.subr.bf16.mxu0 0
        %441 = vmatpush1.bf16.msra.mxu0 0
        %442 = vmatprep.mubr.bf16.mxu0 0
        %443 = vmatmul.mubr.bf16.gmra.mrb[0].mxu0 %v330
        %v444 = vpop.f32.mrb[0].mxu0
        %v445 = vadd.f32 0.0, %v444
        %v446 = vpop.f32.mrb[0].mxu0
        %v447 = vpop.f32.mrb[0].mxu0
        %v448 = vadd.f32 0.0, %v447
        %v449 = vpop.f32.mrb[0].mxu0
        %450 = vmatprep.mubr.bf16.mxu0 0
        %451 = vmatmul.mubr.bf16.gmra.mrb[0].mxu0 %v331
        %v452 = vpop.f32.mrb[0].mxu0
        %v453 = vadd.f32 0.0, %v452
        %v454 = vpop.f32.mrb[0].mxu0
        %v455 = vpop.f32.mrb[0].mxu0
        %v456 = vadd.f32 0.0, %v455
        %v457 = vpop.f32.mrb[0].mxu0
        %458 = vmatprep.mubr.bf16.mxu0 0
        %459 = vmatmul.mubr.bf16.gmra.mrb[0].mxu0 %v332
        %v460 = vpop.f32.mrb[0].mxu0
        %v461 = vadd.f32 0.0, %v460
        %v462 = vpop.f32.mrb[0].mxu0
        %v463 = vpop.f32.mrb[0].mxu0
        %v464 = vadd.f32 0.0, %v463
        %v465 = vpop.f32.mrb[0].mxu0
        %466 = vmatprep.mubr.bf16.mxu0 0
        %467 = vmatmul.mubr.bf16.gmra.mrb[0].mxu0 %v333
        %v468 = vpop.f32.mrb[0].mxu0
        %v469 = vadd.f32 0.0, %v468
        %v470 = vpop.f32.mrb[0].mxu0
        %v471 = vpop.f32.mrb[0].mxu0
        %v472 = vadd.f32 0.0, %v471
        %v473 = vpop.f32.mrb[0].mxu0
        %474 = vmatprep.mubr.bf16.mxu0 0
        %475 = vmatmul.mubr.bf16.gmra.mrb[0].mxu0 %v334
        %v476 = vpop.f32.mrb[0].mxu0
        %v477 = vadd.f32 0.0, %v476
        %v478 = vpop.f32.mrb[0].mxu0
        %v479 = vpop.f32.mrb[0].mxu0
        %v480 = vadd.f32 0.0, %v479
        %v481 = vpop.f32.mrb[0].mxu0
        %482 = vmatprep.mubr.bf16.mxu0 0
        %483 = vmatmul.mubr.bf16.gmra.mrb[0].mxu0 %v335
        %v484 = vpop.f32.mrb[0].mxu0
        %v485 = vadd.f32 0.0, %v484
        %v486 = vpop.f32.mrb[0].mxu0
        %v487 = vpop.f32.mrb[0].mxu0
        %v488 = vadd.f32 0.0, %v487
        %v489 = vpop.f32.mrb[0].mxu0
        %490 = vmatprep.mubr.bf16.mxu0 0
        %491 = vmatmul.mubr.bf16.gmra.mrb[0].mxu0 %v336
        %v492 = vpop.f32.mrb[0].mxu0
        %v493 = vadd.f32 0.0, %v492
        %v494 = vpop.f32.mrb[0].mxu0
        %v495 = vpop.f32.mrb[0].mxu0
        %v496 = vadd.f32 0.0, %v495
        %v497 = vpop.f32.mrb[0].mxu0
        %498 = vmatprep.mubr.bf16.mxu0 0
        %499 = vmatmul.mubr.bf16.gmra.mrb[0].mxu0 %v337
        %v500 = vpop.f32.mrb[0].mxu0
        %v501 = vadd.f32 0.0, %v500
        %v502 = vpop.f32.mrb[0].mxu0
        %v503 = vpop.f32.mrb[0].mxu0
        %v504 = vadd.f32 0.0, %v503
        %v505 = vpop.f32.mrb[0].mxu0
        %506 = vmatprep.mubr.bf16.mxu0 0
        %507 = vmatmul.mubr.bf16.gmra.mrb[0].mxu0 %v338
        %v508 = vpop.f32.mrb[0].mxu0
        %v509 = vadd.f32 0.0, %v508
        %v510 = vpop.f32.mrb[0].mxu0
        %v511 = vpop.f32.mrb[0].mxu0
        %v512 = vadd.f32 0.0, %v511
        %v513 = vpop.f32.mrb[0].mxu0
        %514 = vmatprep.mubr.bf16.mxu0 0
        %515 = vmatmul.mubr.bf16.gmra.mrb[0].mxu0 %v339
        %v516 = vpop.f32.mrb[0].mxu0
        %v517 = vadd.f32 0.0, %v516
        %v518 = vpop.f32.mrb[0].mxu0
        %v519 = vpop.f32.mrb[0].mxu0
        %v520 = vadd.f32 0.0, %v519
        %v521 = vpop.f32.mrb[0].mxu0
        %522 = vmatprep.mubr.bf16.mxu0 0
        %523 = vmatmul.mubr.bf16.gmra.mrb[0].mxu0 %v340
        %v524 = vpop.f32.mrb[0].mxu0
        %v525 = vadd.f32 0.0, %v524
        %v526 = vpop.f32.mrb[0].mxu0
        %v527 = vpop.f32.mrb[0].mxu0
        %v528 = vadd.f32 0.0, %v527
        %v529 = vpop.f32.mrb[0].mxu0
        %530 = vmatprep.mubr.bf16.mxu0 0
        %531 = vmatmul.mubr.bf16.gmra.mrb[0].mxu0 %v341
        %v532 = vpop.f32.mrb[0].mxu0
        %v533 = vadd.f32 0.0, %v532
        %v534 = vpop.f32.mrb[0].mxu0
        %v535 = vpop.f32.mrb[0].mxu0
        %v536 = vadd.f32 0.0, %v535
        %v537 = vpop.f32.mrb[0].mxu0
        %538 = vmatprep.mubr.bf16.mxu0 0
        %539 = vmatmul.mubr.bf16.gmra.mrb[0].mxu0 %v342
        %v540 = vpop.f32.mrb[0].mxu0
        %v541 = vadd.f32 0.0, %v540
        %v542 = vpop.f32.mrb[0].mxu0
        %v543 = vpop.f32.mrb[0].mxu0
        %v544 = vadd.f32 0.0, %v543
        %v545 = vpop.f32.mrb[0].mxu0
        %546 = vmatprep.mubr.bf16.mxu0 0
        %547 = vmatmul.mubr.bf16.gmra.mrb[0].mxu0 %v343
        %v548 = vpop.f32.mrb[0].mxu0
        %v549 = vadd.f32 0.0, %v548
        %v550 = vpop.f32.mrb[0].mxu0
        %v551 = vpop.f32.mrb[0].mxu0
        %v552 = vadd.f32 0.0, %v551
        %v553 = vpop.f32.mrb[0].mxu0
        %554 = vmatprep.mubr.bf16.mxu0 0
        %555 = vmatmul.mubr.bf16.gmra.mrb[0].mxu0 %v344
        %v556 = vpop.f32.mrb[0].mxu0
        %v557 = vadd.f32 0.0, %v556
        %v558 = vpop.f32.mrb[0].mxu0
        %v559 = vpop.f32.mrb[0].mxu0
        %v560 = vadd.f32 0.0, %v559
        %v561 = vpop.f32.mrb[0].mxu0
        %562 = vmatprep.mubr.bf16.mxu0 0
        %563 = vmatmul.mubr.bf16.gmra.mrb[0].mxu0 %v345
        %v564 = vpop.f32.mrb[0].mxu0
        %v565 = vadd.f32 0.0, %v564
        %v566 = vpop.f32.mrb[0].mxu0
        %v567 = vpop.f32.mrb[0].mxu0
        %v568 = vadd.f32 0.0, %v567
        %v569 = vpop.f32.mrb[0].mxu0
        %570 = vdwg.mxu0
        %v571 = vld [vmem:[#allocation7] sm:$0x1]
        %v573 = vlaneseq
        %v574 = vshrl.u32 %v573, 7
        %v575 = vsub.s32 0, %v574
        %v576 = vrot.slane %v571, %v575
        %v578 = vsub.f32 %v576, %v445
        %v579 = vsub.f32 %v576, %v448
        %v580 = vsub.f32 %v576, %v453
        %v581 = vsub.f32 %v576, %v456
        %v582 = vsub.f32 %v576, %v461
        %v583 = vsub.f32 %v576, %v464
        %v584 = vsub.f32 %v576, %v469
        %v585 = vsub.f32 %v576, %v472
        %v586 = vsub.f32 %v576, %v477
        %v587 = vsub.f32 %v576, %v480
        %v588 = vsub.f32 %v576, %v485
        %v589 = vsub.f32 %v576, %v488
        %v590 = vsub.f32 %v576, %v493
        %v591 = vsub.f32 %v576, %v496
        %v592 = vsub.f32 %v576, %v501
        %v593 = vsub.f32 %v576, %v504
        %v594 = vsub.f32 %v576, %v509
        %v595 = vsub.f32 %v576, %v512
        %v596 = vsub.f32 %v576, %v517
        %v597 = vsub.f32 %v576, %v520
        %v598 = vsub.f32 %v576, %v525
        %v599 = vsub.f32 %v576, %v528
        %v600 = vsub.f32 %v576, %v533
        %v601 = vsub.f32 %v576, %v536
        %v602 = vsub.f32 %v576, %v541
        %v603 = vsub.f32 %v576, %v544
        %v604 = vsub.f32 %v576, %v549
        %v605 = vsub.f32 %v576, %v552
        %v606 = vsub.f32 %v576, %v557
        %v607 = vsub.f32 %v576, %v560
        %v608 = vsub.f32 %v576, %v565
        %v609 = vsub.f32 %v576, %v568
        %610 = vmin.xlane.f32.xlu0 %v578
        %v611 = vpop.xlane.xlu0 %610
        %612 = vmin.xlane.f32.xlu0 %v579
        %v613 = vpop.xlane.xlu0 %612
        %614 = vmin.xlane.f32.xlu0 %v580
        %v615 = vpop.xlane.xlu0 %614
        %616 = vmin.xlane.f32.xlu0 %v581
        %v617 = vpop.xlane.xlu0 %616
        %618 = vmin.xlane.f32.xlu0 %v582
        %v619 = vpop.xlane.xlu0 %618
        %620 = vmin.xlane.f32.xlu0 %v583
        %v621 = vpop.xlane.xlu0 %620
        %622 = vmin.xlane.f32.xlu0 %v584
        %v623 = vpop.xlane.xlu0 %622
        %624 = vmin.xlane.f32.xlu0 %v585
        %v625 = vpop.xlane.xlu0 %624
        %626 = vmin.xlane.f32.xlu0 %v586
        %v627 = vpop.xlane.xlu0 %626
        %628 = vmin.xlane.f32.xlu0 %v587
        %v629 = vpop.xlane.xlu0 %628
        %630 = vmin.xlane.f32.xlu0 %v588
        %v631 = vpop.xlane.xlu0 %630
        %632 = vmin.xlane.f32.xlu0 %v589
        %v633 = vpop.xlane.xlu0 %632
        %634 = vmin.xlane.f32.xlu0 %v590
        %v635 = vpop.xlane.xlu0 %634
        %636 = vmin.xlane.f32.xlu0 %v591
        %v637 = vpop.xlane.xlu0 %636
        %638 = vmin.xlane.f32.xlu0 %v592
        %v639 = vpop.xlane.xlu0 %638
        %640 = vmin.xlane.f32.xlu0 %v593
        %v641 = vpop.xlane.xlu0 %640
        %642 = vmin.xlane.f32.xlu0 %v594
        %v643 = vpop.xlane.xlu0 %642
        %644 = vmin.xlane.f32.xlu0 %v595
        %v645 = vpop.xlane.xlu0 %644
        %646 = vmin.xlane.f32.xlu0 %v596
        %v647 = vpop.xlane.xlu0 %646
        %648 = vmin.xlane.f32.xlu0 %v597
        %v649 = vpop.xlane.xlu0 %648
        %650 = vmin.xlane.f32.xlu0 %v598
        %v651 = vpop.xlane.xlu0 %650
        %652 = vmin.xlane.f32.xlu0 %v599
        %v653 = vpop.xlane.xlu0 %652
        %654 = vmin.xlane.f32.xlu0 %v600
        %v655 = vpop.xlane.xlu0 %654
        %656 = vmin.xlane.f32.xlu0 %v601
        %v657 = vpop.xlane.xlu0 %656
        %658 = vmin.xlane.f32.xlu0 %v602
        %v659 = vpop.xlane.xlu0 %658
        %660 = vmin.xlane.f32.xlu0 %v603
        %v661 = vpop.xlane.xlu0 %660
        %662 = vmin.xlane.f32.xlu0 %v604
        %v663 = vpop.xlane.xlu0 %662
        %664 = vmin.xlane.f32.xlu0 %v605
        %v665 = vpop.xlane.xlu0 %664
        %666 = vmin.xlane.f32.xlu0 %v606
        %v667 = vpop.xlane.xlu0 %666
        %668 = vmin.xlane.f32.xlu0 %v607
        %v669 = vpop.xlane.xlu0 %668
        %670 = vmin.xlane.f32.xlu0 %v608
        %v671 = vpop.xlane.xlu0 %670
        %672 = vmin.xlane.f32.xlu0 %v609
        %v673 = vpop.xlane.xlu0 %672
        %674 = vmin.index.xlane.f32.xlu0 %v578
        %v675 = vpop.xlane.xlu0 %674
        %676 = vmin.index.xlane.f32.xlu0 %v579
        %v677 = vpop.xlane.xlu0 %676
        %678 = vmin.index.xlane.f32.xlu0 %v580
        %v679 = vpop.xlane.xlu0 %678
        %680 = vmin.index.xlane.f32.xlu0 %v581
        %v681 = vpop.xlane.xlu0 %680
        %682 = vmin.index.xlane.f32.xlu0 %v582
        %v683 = vpop.xlane.xlu0 %682
        %684 = vmin.index.xlane.f32.xlu0 %v583
        %v685 = vpop.xlane.xlu0 %684
        %686 = vmin.index.xlane.f32.xlu0 %v584
        %v687 = vpop.xlane.xlu0 %686
        %688 = vmin.index.xlane.f32.xlu0 %v585
        %v689 = vpop.xlane.xlu0 %688
        %690 = vmin.index.xlane.f32.xlu0 %v586
        %v691 = vpop.xlane.xlu0 %690
        %692 = vmin.index.xlane.f32.xlu0 %v587
        %v693 = vpop.xlane.xlu0 %692
        %694 = vmin.index.xlane.f32.xlu0 %v588
        %v695 = vpop.xlane.xlu0 %694
        %696 = vmin.index.xlane.f32.xlu0 %v589
        %v697 = vpop.xlane.xlu0 %696
        %698 = vmin.index.xlane.f32.xlu0 %v590
        %v699 = vpop.xlane.xlu0 %698
        %700 = vmin.index.xlane.f32.xlu0 %v591
        %v701 = vpop.xlane.xlu0 %700
        %702 = vmin.index.xlane.f32.xlu0 %v592
        %v703 = vpop.xlane.xlu0 %702
        %704 = vmin.index.xlane.f32.xlu0 %v593
        %v705 = vpop.xlane.xlu0 %704
        %706 = vmin.index.xlane.f32.xlu0 %v594
        %v707 = vpop.xlane.xlu0 %706
        %708 = vmin.index.xlane.f32.xlu0 %v595
        %v709 = vpop.xlane.xlu0 %708
        %710 = vmin.index.xlane.f32.xlu0 %v596
        %v711 = vpop.xlane.xlu0 %710
        %712 = vmin.index.xlane.f32.xlu0 %v597
        %v713 = vpop.xlane.xlu0 %712
        %714 = vmin.index.xlane.f32.xlu0 %v598
        %v715 = vpop.xlane.xlu0 %714
        %716 = vmin.index.xlane.f32.xlu0 %v599
        %v717 = vpop.xlane.xlu0 %716
        %718 = vmin.index.xlane.f32.xlu0 %v600
        %v719 = vpop.xlane.xlu0 %718
        %720 = vmin.index.xlane.f32.xlu0 %v601
        %v721 = vpop.xlane.xlu0 %720
        %722 = vmin.index.xlane.f32.xlu0 %v602
        %v723 = vpop.xlane.xlu0 %722
        %724 = vmin.index.xlane.f32.xlu0 %v603
        %v725 = vpop.xlane.xlu0 %724
        %726 = vmin.index.xlane.f32.xlu0 %v604
        %v727 = vpop.xlane.xlu0 %726
        %728 = vmin.index.xlane.f32.xlu0 %v605
        %v729 = vpop.xlane.xlu0 %728
        %730 = vmin.index.xlane.f32.xlu0 %v606
        %v731 = vpop.xlane.xlu0 %730
        %732 = vmin.index.xlane.f32.xlu0 %v607
        %v733 = vpop.xlane.xlu0 %732
        %734 = vmin.index.xlane.f32.xlu0 %v608
        %v735 = vpop.xlane.xlu0 %734
        %736 = vmin.index.xlane.f32.xlu0 %v609
        %v737 = vpop.xlane.xlu0 %736
        %vm738 = vcmp.lt.f32.partialorder %v611, inf
        %vm739 = vcmp.lt.f32.partialorder %v613, inf
        %vm740 = vcmp.lt.f32.partialorder %v615, inf
        %vm741 = vcmp.lt.f32.partialorder %v617, inf
        %vm742 = vcmp.lt.f32.partialorder %v619, inf
        %vm743 = vcmp.lt.f32.partialorder %v621, inf
        %vm744 = vcmp.lt.f32.partialorder %v623, inf
        %vm745 = vcmp.lt.f32.partialorder %v625, inf
        %vm746 = vcmp.lt.f32.partialorder %v627, inf
        %vm747 = vcmp.lt.f32.partialorder %v629, inf
        %vm748 = vcmp.lt.f32.partialorder %v631, inf
        %vm749 = vcmp.lt.f32.partialorder %v633, inf
        %vm750 = vcmp.lt.f32.partialorder %v635, inf
        %vm751 = vcmp.lt.f32.partialorder %v637, inf
        %vm752 = vcmp.lt.f32.partialorder %v639, inf
        %vm753 = vcmp.lt.f32.partialorder %v641, inf
        %vm754 = vcmp.lt.f32.partialorder %v643, inf
        %vm755 = vcmp.lt.f32.partialorder %v645, inf
        %vm756 = vcmp.lt.f32.partialorder %v647, inf
        %vm757 = vcmp.lt.f32.partialorder %v649, inf
        %vm758 = vcmp.lt.f32.partialorder %v651, inf
        %vm759 = vcmp.lt.f32.partialorder %v653, inf
        %vm760 = vcmp.lt.f32.partialorder %v655, inf
        %vm761 = vcmp.lt.f32.partialorder %v657, inf
        %vm762 = vcmp.lt.f32.partialorder %v659, inf
        %vm763 = vcmp.lt.f32.partialorder %v661, inf
        %vm764 = vcmp.lt.f32.partialorder %v663, inf
        %vm765 = vcmp.lt.f32.partialorder %v665, inf
        %vm766 = vcmp.lt.f32.partialorder %v667, inf
        %vm767 = vcmp.lt.f32.partialorder %v669, inf
        %vm768 = vcmp.lt.f32.partialorder %v671, inf
        %vm769 = vcmp.lt.f32.partialorder %v673, inf
        %v770 = vsel %vm738, %v675, 0
        %v771 = vsel %vm739, %v677, 0
        %v772 = vsel %vm740, %v679, 0
        %v773 = vsel %vm741, %v681, 0
        %v774 = vsel %vm742, %v683, 0
        %v775 = vsel %vm743, %v685, 0
        %v776 = vsel %vm744, %v687, 0
        %v777 = vsel %vm745, %v689, 0
        %v778 = vsel %vm746, %v691, 0
        %v779 = vsel %vm747, %v693, 0
        %v780 = vsel %vm748, %v695, 0
        %v781 = vsel %vm749, %v697, 0
        %v782 = vsel %vm750, %v699, 0
        %v783 = vsel %vm751, %v701, 0
        %v784 = vsel %vm752, %v703, 0
        %v785 = vsel %vm753, %v705, 0
        %v786 = vsel %vm754, %v707, 0
        %v787 = vsel %vm755, %v709, 0
        %v788 = vsel %vm756, %v711, 0
        %v789 = vsel %vm757, %v713, 0
        %v790 = vsel %vm758, %v715, 0
        %v791 = vsel %vm759, %v717, 0
        %v792 = vsel %vm760, %v719, 0
        %v793 = vsel %vm761, %v721, 0
        %v794 = vsel %vm762, %v723, 0
        %v795 = vsel %vm763, %v725, 0
        %v796 = vsel %vm764, %v727, 0
        %v797 = vsel %vm765, %v729, 0
        %v798 = vsel %vm766, %v731, 0
        %v799 = vsel %vm767, %v733, 0
        %v800 = vsel %vm768, %v735, 0
        %v801 = vsel %vm769, %v737, 0
        %v802 = vlaneseq
        %v803 = vshrl.u32 %v802, 7
        %v804 = vsub.s32 0, %v803
        %v805 = vrot.slane %v770, %v804
        %v806 = vlaneseq
        %v807 = vshrl.u32 %v806, 7
        %v808 = vsub.s32 1, %v807
        %v809 = vrot.slane %v770, %v808
        %v810 = vlaneseq
        %v811 = vshrl.u32 %v810, 7
        %v812 = vsub.s32 2, %v811
        %v813 = vrot.slane %v770, %v812
        %v814 = vlaneseq
        %v815 = vshrl.u32 %v814, 7
        %v816 = vsub.s32 3, %v815
        %v817 = vrot.slane %v770, %v816
        %v818 = vlaneseq
        %v819 = vshrl.u32 %v818, 7
        %v820 = vsub.s32 4, %v819
        %v821 = vrot.slane %v770, %v820
        %v822 = vlaneseq
        %v823 = vshrl.u32 %v822, 7
        %v824 = vsub.s32 5, %v823
        %v825 = vrot.slane %v770, %v824
        %v826 = vlaneseq
        %v827 = vshrl.u32 %v826, 7
        %v828 = vsub.s32 6, %v827
        %v829 = vrot.slane %v770, %v828
        %v830 = vlaneseq
        %v831 = vshrl.u32 %v830, 7
        %v832 = vsub.s32 7, %v831
        %v833 = vrot.slane %v770, %v832
        %v834 = vlaneseq
        %v835 = vshrl.u32 %v834, 7
        %v836 = vsub.s32 0, %v835
        %v837 = vrot.slane %v771, %v836
        %v838 = vlaneseq
        %v839 = vshrl.u32 %v838, 7
        %v840 = vsub.s32 1, %v839
        %v841 = vrot.slane %v771, %v840
        %v842 = vlaneseq
        %v843 = vshrl.u32 %v842, 7
        %v844 = vsub.s32 2, %v843
        %v845 = vrot.slane %v771, %v844
        %v846 = vlaneseq
        %v847 = vshrl.u32 %v846, 7
        %v848 = vsub.s32 3, %v847
        %v849 = vrot.slane %v771, %v848
        %v850 = vlaneseq
        %v851 = vshrl.u32 %v850, 7
        %v852 = vsub.s32 4, %v851
        %v853 = vrot.slane %v771, %v852
        %v854 = vlaneseq
        %v855 = vshrl.u32 %v854, 7
        %v856 = vsub.s32 5, %v855
        %v857 = vrot.slane %v771, %v856
        %v858 = vlaneseq
        %v859 = vshrl.u32 %v858, 7
        %v860 = vsub.s32 6, %v859
        %v861 = vrot.slane %v771, %v860
        %v862 = vlaneseq
        %v863 = vshrl.u32 %v862, 7
        %v864 = vsub.s32 7, %v863
        %v865 = vrot.slane %v771, %v864
        %v866 = vlaneseq
        %v867 = vshrl.u32 %v866, 7
        %v868 = vsub.s32 0, %v867
        %v869 = vrot.slane %v772, %v868
        %v870 = vlaneseq
        %v871 = vshrl.u32 %v870, 7
        %v872 = vsub.s32 1, %v871
        %v873 = vrot.slane %v772, %v872
        %v874 = vlaneseq
        %v875 = vshrl.u32 %v874, 7
        %v876 = vsub.s32 2, %v875
        %v877 = vrot.slane %v772, %v876
        %v878 = vlaneseq
        %v879 = vshrl.u32 %v878, 7
        %v880 = vsub.s32 3, %v879
        %v881 = vrot.slane %v772, %v880
        %v882 = vlaneseq
        %v883 = vshrl.u32 %v882, 7
        %v884 = vsub.s32 4, %v883
        %v885 = vrot.slane %v772, %v884
        %v886 = vlaneseq
        %v887 = vshrl.u32 %v886, 7
        %v888 = vsub.s32 5, %v887
        %v889 = vrot.slane %v772, %v888
        %v890 = vlaneseq
        %v891 = vshrl.u32 %v890, 7
        %v892 = vsub.s32 6, %v891
        %v893 = vrot.slane %v772, %v892
        %v894 = vlaneseq
        %v895 = vshrl.u32 %v894, 7
        %v896 = vsub.s32 7, %v895
        %v897 = vrot.slane %v772, %v896
        %v898 = vlaneseq
        %v899 = vshrl.u32 %v898, 7
        %v900 = vsub.s32 0, %v899
        %v901 = vrot.slane %v773, %v900
        %v902 = vlaneseq
        %v903 = vshrl.u32 %v902, 7
        %v904 = vsub.s32 1, %v903
        %v905 = vrot.slane %v773, %v904
        %v906 = vlaneseq
        %v907 = vshrl.u32 %v906, 7
        %v908 = vsub.s32 2, %v907
        %v909 = vrot.slane %v773, %v908
        %v910 = vlaneseq
        %v911 = vshrl.u32 %v910, 7
        %v912 = vsub.s32 3, %v911
        %v913 = vrot.slane %v773, %v912
        %v914 = vlaneseq
        %v915 = vshrl.u32 %v914, 7
        %v916 = vsub.s32 4, %v915
        %v917 = vrot.slane %v773, %v916
        %v918 = vlaneseq
        %v919 = vshrl.u32 %v918, 7
        %v920 = vsub.s32 5, %v919
        %v921 = vrot.slane %v773, %v920
        %v922 = vlaneseq
        %v923 = vshrl.u32 %v922, 7
        %v924 = vsub.s32 6, %v923
        %v925 = vrot.slane %v773, %v924
        %v926 = vlaneseq
        %v927 = vshrl.u32 %v926, 7
        %v928 = vsub.s32 7, %v927
        %v929 = vrot.slane %v773, %v928
        %v930 = vlaneseq
        %v931 = vshrl.u32 %v930, 7
        %v932 = vsub.s32 0, %v931
        %v933 = vrot.slane %v774, %v932
        %v934 = vlaneseq
        %v935 = vshrl.u32 %v934, 7
        %v936 = vsub.s32 1, %v935
        %v937 = vrot.slane %v774, %v936
        %v938 = vlaneseq
        %v939 = vshrl.u32 %v938, 7
        %v940 = vsub.s32 2, %v939
        %v941 = vrot.slane %v774, %v940
        %v942 = vlaneseq
        %v943 = vshrl.u32 %v942, 7
        %v944 = vsub.s32 3, %v943
        %v945 = vrot.slane %v774, %v944
        %v946 = vlaneseq
        %v947 = vshrl.u32 %v946, 7
        %v948 = vsub.s32 4, %v947
        %v949 = vrot.slane %v774, %v948
        %v950 = vlaneseq
        %v951 = vshrl.u32 %v950, 7
        %v952 = vsub.s32 5, %v951
        %v953 = vrot.slane %v774, %v952
        %v954 = vlaneseq
        %v955 = vshrl.u32 %v954, 7
        %v956 = vsub.s32 6, %v955
        %v957 = vrot.slane %v774, %v956
        %v958 = vlaneseq
        %v959 = vshrl.u32 %v958, 7
        %v960 = vsub.s32 7, %v959
        %v961 = vrot.slane %v774, %v960
        %v962 = vlaneseq
        %v963 = vshrl.u32 %v962, 7
        %v964 = vsub.s32 0, %v963
        %v965 = vrot.slane %v775, %v964
        %v966 = vlaneseq
        %v967 = vshrl.u32 %v966, 7
        %v968 = vsub.s32 1, %v967
        %v969 = vrot.slane %v775, %v968
        %v970 = vlaneseq
        %v971 = vshrl.u32 %v970, 7
        %v972 = vsub.s32 2, %v971
        %v973 = vrot.slane %v775, %v972
        %v974 = vlaneseq
        %v975 = vshrl.u32 %v974, 7
        %v976 = vsub.s32 3, %v975
        %v977 = vrot.slane %v775, %v976
        %v978 = vlaneseq
        %v979 = vshrl.u32 %v978, 7
        %v980 = vsub.s32 4, %v979
        %v981 = vrot.slane %v775, %v980
        %v982 = vlaneseq
        %v983 = vshrl.u32 %v982, 7
        %v984 = vsub.s32 5, %v983
        %v985 = vrot.slane %v775, %v984
        %v986 = vlaneseq
        %v987 = vshrl.u32 %v986, 7
        %v988 = vsub.s32 6, %v987
        %v989 = vrot.slane %v775, %v988
        %v990 = vlaneseq
        %v991 = vshrl.u32 %v990, 7
        %v992 = vsub.s32 7, %v991
        %v993 = vrot.slane %v775, %v992
        %v994 = vlaneseq
        %v995 = vshrl.u32 %v994, 7
        %v996 = vsub.s32 0, %v995
        %v997 = vrot.slane %v776, %v996
        %v998 = vlaneseq
        %v999 = vshrl.u32 %v998, 7
        %v1000 = vsub.s32 1, %v999
        %v1001 = vrot.slane %v776, %v1000
        %v1002 = vlaneseq
        %v1003 = vshrl.u32 %v1002, 7
        %v1004 = vsub.s32 2, %v1003
        %v1005 = vrot.slane %v776, %v1004
        %v1006 = vlaneseq
        %v1007 = vshrl.u32 %v1006, 7
        %v1008 = vsub.s32 3, %v1007
        %v1009 = vrot.slane %v776, %v1008
        %v1010 = vlaneseq
        %v1011 = vshrl.u32 %v1010, 7
        %v1012 = vsub.s32 4, %v1011
        %v1013 = vrot.slane %v776, %v1012
        %v1014 = vlaneseq
        %v1015 = vshrl.u32 %v1014, 7
        %v1016 = vsub.s32 5, %v1015
        %v1017 = vrot.slane %v776, %v1016
        %v1018 = vlaneseq
        %v1019 = vshrl.u32 %v1018, 7
        %v1020 = vsub.s32 6, %v1019
        %v1021 = vrot.slane %v776, %v1020
        %v1022 = vlaneseq
        %v1023 = vshrl.u32 %v1022, 7
        %v1024 = vsub.s32 7, %v1023
        %v1025 = vrot.slane %v776, %v1024
        %v1026 = vlaneseq
        %v1027 = vshrl.u32 %v1026, 7
        %v1028 = vsub.s32 0, %v1027
        %v1029 = vrot.slane %v777, %v1028
        %v1030 = vlaneseq
        %v1031 = vshrl.u32 %v1030, 7
        %v1032 = vsub.s32 1, %v1031
        %v1033 = vrot.slane %v777, %v1032
        %v1034 = vlaneseq
        %v1035 = vshrl.u32 %v1034, 7
        %v1036 = vsub.s32 2, %v1035
        %v1037 = vrot.slane %v777, %v1036
        %v1038 = vlaneseq
        %v1039 = vshrl.u32 %v1038, 7
        %v1040 = vsub.s32 3, %v1039
        %v1041 = vrot.slane %v777, %v1040
        %v1042 = vlaneseq
        %v1043 = vshrl.u32 %v1042, 7
        %v1044 = vsub.s32 4, %v1043
        %v1045 = vrot.slane %v777, %v1044
        %v1046 = vlaneseq
        %v1047 = vshrl.u32 %v1046, 7
        %v1048 = vsub.s32 5, %v1047
        %v1049 = vrot.slane %v777, %v1048
        %v1050 = vlaneseq
        %v1051 = vshrl.u32 %v1050, 7
        %v1052 = vsub.s32 6, %v1051
        %v1053 = vrot.slane %v777, %v1052
        %v1054 = vlaneseq
        %v1055 = vshrl.u32 %v1054, 7
        %v1056 = vsub.s32 7, %v1055
        %v1057 = vrot.slane %v777, %v1056
        %v1058 = vlaneseq
        %v1059 = vshrl.u32 %v1058, 7
        %v1060 = vsub.s32 0, %v1059
        %v1061 = vrot.slane %v778, %v1060
        %v1062 = vlaneseq
        %v1063 = vshrl.u32 %v1062, 7
        %v1064 = vsub.s32 1, %v1063
        %v1065 = vrot.slane %v778, %v1064
        %v1066 = vlaneseq
        %v1067 = vshrl.u32 %v1066, 7
        %v1068 = vsub.s32 2, %v1067
        %v1069 = vrot.slane %v778, %v1068
        %v1070 = vlaneseq
        %v1071 = vshrl.u32 %v1070, 7
        %v1072 = vsub.s32 3, %v1071
        %v1073 = vrot.slane %v778, %v1072
        %v1074 = vlaneseq
        %v1075 = vshrl.u32 %v1074, 7
        %v1076 = vsub.s32 4, %v1075
        %v1077 = vrot.slane %v778, %v1076
        %v1078 = vlaneseq
        %v1079 = vshrl.u32 %v1078, 7
        %v1080 = vsub.s32 5, %v1079
        %v1081 = vrot.slane %v778, %v1080
        %v1082 = vlaneseq
        %v1083 = vshrl.u32 %v1082, 7
        %v1084 = vsub.s32 6, %v1083
        %v1085 = vrot.slane %v778, %v1084
        %v1086 = vlaneseq
        %v1087 = vshrl.u32 %v1086, 7
        %v1088 = vsub.s32 7, %v1087
        %v1089 = vrot.slane %v778, %v1088
        %v1090 = vlaneseq
        %v1091 = vshrl.u32 %v1090, 7
        %v1092 = vsub.s32 0, %v1091
        %v1093 = vrot.slane %v779, %v1092
        %v1094 = vlaneseq
        %v1095 = vshrl.u32 %v1094, 7
        %v1096 = vsub.s32 1, %v1095
        %v1097 = vrot.slane %v779, %v1096
        %v1098 = vlaneseq
        %v1099 = vshrl.u32 %v1098, 7
        %v1100 = vsub.s32 2, %v1099
        %v1101 = vrot.slane %v779, %v1100
        %v1102 = vlaneseq
        %v1103 = vshrl.u32 %v1102, 7
        %v1104 = vsub.s32 3, %v1103
        %v1105 = vrot.slane %v779, %v1104
        %v1106 = vlaneseq
        %v1107 = vshrl.u32 %v1106, 7
        %v1108 = vsub.s32 4, %v1107
        %v1109 = vrot.slane %v779, %v1108
        %v1110 = vlaneseq
        %v1111 = vshrl.u32 %v1110, 7
        %v1112 = vsub.s32 5, %v1111
        %v1113 = vrot.slane %v779, %v1112
        %v1114 = vlaneseq
        %v1115 = vshrl.u32 %v1114, 7
        %v1116 = vsub.s32 6, %v1115
        %v1117 = vrot.slane %v779, %v1116
        %v1118 = vlaneseq
        %v1119 = vshrl.u32 %v1118, 7
        %v1120 = vsub.s32 7, %v1119
        %v1121 = vrot.slane %v779, %v1120
        %v1122 = vlaneseq
        %v1123 = vshrl.u32 %v1122, 7
        %v1124 = vsub.s32 0, %v1123
        %v1125 = vrot.slane %v780, %v1124
        %v1126 = vlaneseq
        %v1127 = vshrl.u32 %v1126, 7
        %v1128 = vsub.s32 1, %v1127
        %v1129 = vrot.slane %v780, %v1128
        %v1130 = vlaneseq
        %v1131 = vshrl.u32 %v1130, 7
        %v1132 = vsub.s32 2, %v1131
        %v1133 = vrot.slane %v780, %v1132
        %v1134 = vlaneseq
        %v1135 = vshrl.u32 %v1134, 7
        %v1136 = vsub.s32 3, %v1135
        %v1137 = vrot.slane %v780, %v1136
        %v1138 = vlaneseq
        %v1139 = vshrl.u32 %v1138, 7
        %v1140 = vsub.s32 4, %v1139
        %v1141 = vrot.slane %v780, %v1140
        %v1142 = vlaneseq
        %v1143 = vshrl.u32 %v1142, 7
        %v1144 = vsub.s32 5, %v1143
        %v1145 = vrot.slane %v780, %v1144
        %v1146 = vlaneseq
        %v1147 = vshrl.u32 %v1146, 7
        %v1148 = vsub.s32 6, %v1147
        %v1149 = vrot.slane %v780, %v1148
        %v1150 = vlaneseq
        %v1151 = vshrl.u32 %v1150, 7
        %v1152 = vsub.s32 7, %v1151
        %v1153 = vrot.slane %v780, %v1152
        %v1154 = vlaneseq
        %v1155 = vshrl.u32 %v1154, 7
        %v1156 = vsub.s32 0, %v1155
        %v1157 = vrot.slane %v781, %v1156
        %v1158 = vlaneseq
        %v1159 = vshrl.u32 %v1158, 7
        %v1160 = vsub.s32 1, %v1159
        %v1161 = vrot.slane %v781, %v1160
        %v1162 = vlaneseq
        %v1163 = vshrl.u32 %v1162, 7
        %v1164 = vsub.s32 2, %v1163
        %v1165 = vrot.slane %v781, %v1164
        %v1166 = vlaneseq
        %v1167 = vshrl.u32 %v1166, 7
        %v1168 = vsub.s32 3, %v1167
        %v1169 = vrot.slane %v781, %v1168
        %v1170 = vlaneseq
        %v1171 = vshrl.u32 %v1170, 7
        %v1172 = vsub.s32 4, %v1171
        %v1173 = vrot.slane %v781, %v1172
        %v1174 = vlaneseq
        %v1175 = vshrl.u32 %v1174, 7
        %v1176 = vsub.s32 5, %v1175
        %v1177 = vrot.slane %v781, %v1176
        %v1178 = vlaneseq
        %v1179 = vshrl.u32 %v1178, 7
        %v1180 = vsub.s32 6, %v1179
        %v1181 = vrot.slane %v781, %v1180
        %v1182 = vlaneseq
        %v1183 = vshrl.u32 %v1182, 7
        %v1184 = vsub.s32 7, %v1183
        %v1185 = vrot.slane %v781, %v1184
        %v1186 = vlaneseq
        %v1187 = vshrl.u32 %v1186, 7
        %v1188 = vsub.s32 0, %v1187
        %v1189 = vrot.slane %v782, %v1188
        %v1190 = vlaneseq
        %v1191 = vshrl.u32 %v1190, 7
        %v1192 = vsub.s32 1, %v1191
        %v1193 = vrot.slane %v782, %v1192
        %v1194 = vlaneseq
        %v1195 = vshrl.u32 %v1194, 7
        %v1196 = vsub.s32 2, %v1195
        %v1197 = vrot.slane %v782, %v1196
        %v1198 = vlaneseq
        %v1199 = vshrl.u32 %v1198, 7
        %v1200 = vsub.s32 3, %v1199
        %v1201 = vrot.slane %v782, %v1200
        %v1202 = vlaneseq
        %v1203 = vshrl.u32 %v1202, 7
        %v1204 = vsub.s32 4, %v1203
        %v1205 = vrot.slane %v782, %v1204
        %v1206 = vlaneseq
        %v1207 = vshrl.u32 %v1206, 7
        %v1208 = vsub.s32 5, %v1207
        %v1209 = vrot.slane %v782, %v1208
        %v1210 = vlaneseq
        %v1211 = vshrl.u32 %v1210, 7
        %v1212 = vsub.s32 6, %v1211
        %v1213 = vrot.slane %v782, %v1212
        %v1214 = vlaneseq
        %v1215 = vshrl.u32 %v1214, 7
        %v1216 = vsub.s32 7, %v1215
        %v1217 = vrot.slane %v782, %v1216
        %v1218 = vlaneseq
        %v1219 = vshrl.u32 %v1218, 7
        %v1220 = vsub.s32 0, %v1219
        %v1221 = vrot.slane %v783, %v1220
        %v1222 = vlaneseq
        %v1223 = vshrl.u32 %v1222, 7
        %v1224 = vsub.s32 1, %v1223
        %v1225 = vrot.slane %v783, %v1224
        %v1226 = vlaneseq
        %v1227 = vshrl.u32 %v1226, 7
        %v1228 = vsub.s32 2, %v1227
        %v1229 = vrot.slane %v783, %v1228
        %v1230 = vlaneseq
        %v1231 = vshrl.u32 %v1230, 7
        %v1232 = vsub.s32 3, %v1231
        %v1233 = vrot.slane %v783, %v1232
        %v1234 = vlaneseq
        %v1235 = vshrl.u32 %v1234, 7
        %v1236 = vsub.s32 4, %v1235
        %v1237 = vrot.slane %v783, %v1236
        %v1238 = vlaneseq
        %v1239 = vshrl.u32 %v1238, 7
        %v1240 = vsub.s32 5, %v1239
        %v1241 = vrot.slane %v783, %v1240
        %v1242 = vlaneseq
        %v1243 = vshrl.u32 %v1242, 7
        %v1244 = vsub.s32 6, %v1243
        %v1245 = vrot.slane %v783, %v1244
        %v1246 = vlaneseq
        %v1247 = vshrl.u32 %v1246, 7
        %v1248 = vsub.s32 7, %v1247
        %v1249 = vrot.slane %v783, %v1248
        %v1250 = vlaneseq
        %v1251 = vshrl.u32 %v1250, 7
        %v1252 = vsub.s32 0, %v1251
        %v1253 = vrot.slane %v784, %v1252
        %v1254 = vlaneseq
        %v1255 = vshrl.u32 %v1254, 7
        %v1256 = vsub.s32 1, %v1255
        %v1257 = vrot.slane %v784, %v1256
        %v1258 = vlaneseq
        %v1259 = vshrl.u32 %v1258, 7
        %v1260 = vsub.s32 2, %v1259
        %v1261 = vrot.slane %v784, %v1260
        %v1262 = vlaneseq
        %v1263 = vshrl.u32 %v1262, 7
        %v1264 = vsub.s32 3, %v1263
        %v1265 = vrot.slane %v784, %v1264
        %v1266 = vlaneseq
        %v1267 = vshrl.u32 %v1266, 7
        %v1268 = vsub.s32 4, %v1267
        %v1269 = vrot.slane %v784, %v1268
        %v1270 = vlaneseq
        %v1271 = vshrl.u32 %v1270, 7
        %v1272 = vsub.s32 5, %v1271
        %v1273 = vrot.slane %v784, %v1272
        %v1274 = vlaneseq
        %v1275 = vshrl.u32 %v1274, 7
        %v1276 = vsub.s32 6, %v1275
        %v1277 = vrot.slane %v784, %v1276
        %v1278 = vlaneseq
        %v1279 = vshrl.u32 %v1278, 7
        %v1280 = vsub.s32 7, %v1279
        %v1281 = vrot.slane %v784, %v1280
        %v1282 = vlaneseq
        %v1283 = vshrl.u32 %v1282, 7
        %v1284 = vsub.s32 0, %v1283
        %v1285 = vrot.slane %v785, %v1284
        %v1286 = vlaneseq
        %v1287 = vshrl.u32 %v1286, 7
        %v1288 = vsub.s32 1, %v1287
        %v1289 = vrot.slane %v785, %v1288
        %v1290 = vlaneseq
        %v1291 = vshrl.u32 %v1290, 7
        %v1292 = vsub.s32 2, %v1291
        %v1293 = vrot.slane %v785, %v1292
        %v1294 = vlaneseq
        %v1295 = vshrl.u32 %v1294, 7
        %v1296 = vsub.s32 3, %v1295
        %v1297 = vrot.slane %v785, %v1296
        %v1298 = vlaneseq
        %v1299 = vshrl.u32 %v1298, 7
        %v1300 = vsub.s32 4, %v1299
        %v1301 = vrot.slane %v785, %v1300
        %v1302 = vlaneseq
        %v1303 = vshrl.u32 %v1302, 7
        %v1304 = vsub.s32 5, %v1303
        %v1305 = vrot.slane %v785, %v1304
        %v1306 = vlaneseq
        %v1307 = vshrl.u32 %v1306, 7
        %v1308 = vsub.s32 6, %v1307
        %v1309 = vrot.slane %v785, %v1308
        %v1310 = vlaneseq
        %v1311 = vshrl.u32 %v1310, 7
        %v1312 = vsub.s32 7, %v1311
        %v1313 = vrot.slane %v785, %v1312
        %v1314 = vlaneseq
        %v1315 = vshrl.u32 %v1314, 7
        %v1316 = vsub.s32 0, %v1315
        %v1317 = vrot.slane %v786, %v1316
        %v1318 = vlaneseq
        %v1319 = vshrl.u32 %v1318, 7
        %v1320 = vsub.s32 1, %v1319
        %v1321 = vrot.slane %v786, %v1320
        %v1322 = vlaneseq
        %v1323 = vshrl.u32 %v1322, 7
        %v1324 = vsub.s32 2, %v1323
        %v1325 = vrot.slane %v786, %v1324
        %v1326 = vlaneseq
        %v1327 = vshrl.u32 %v1326, 7
        %v1328 = vsub.s32 3, %v1327
        %v1329 = vrot.slane %v786, %v1328
        %v1330 = vlaneseq
        %v1331 = vshrl.u32 %v1330, 7
        %v1332 = vsub.s32 4, %v1331
        %v1333 = vrot.slane %v786, %v1332
        %v1334 = vlaneseq
        %v1335 = vshrl.u32 %v1334, 7
        %v1336 = vsub.s32 5, %v1335
        %v1337 = vrot.slane %v786, %v1336
        %v1338 = vlaneseq
        %v1339 = vshrl.u32 %v1338, 7
        %v1340 = vsub.s32 6, %v1339
        %v1341 = vrot.slane %v786, %v1340
        %v1342 = vlaneseq
        %v1343 = vshrl.u32 %v1342, 7
        %v1344 = vsub.s32 7, %v1343
        %v1345 = vrot.slane %v786, %v1344
        %v1346 = vlaneseq
        %v1347 = vshrl.u32 %v1346, 7
        %v1348 = vsub.s32 0, %v1347
        %v1349 = vrot.slane %v787, %v1348
        %v1350 = vlaneseq
        %v1351 = vshrl.u32 %v1350, 7
        %v1352 = vsub.s32 1, %v1351
        %v1353 = vrot.slane %v787, %v1352
        %v1354 = vlaneseq
        %v1355 = vshrl.u32 %v1354, 7
        %v1356 = vsub.s32 2, %v1355
        %v1357 = vrot.slane %v787, %v1356
        %v1358 = vlaneseq
        %v1359 = vshrl.u32 %v1358, 7
        %v1360 = vsub.s32 3, %v1359
        %v1361 = vrot.slane %v787, %v1360
        %v1362 = vlaneseq
        %v1363 = vshrl.u32 %v1362, 7
        %v1364 = vsub.s32 4, %v1363
        %v1365 = vrot.slane %v787, %v1364
        %v1366 = vlaneseq
        %v1367 = vshrl.u32 %v1366, 7
        %v1368 = vsub.s32 5, %v1367
        %v1369 = vrot.slane %v787, %v1368
        %v1370 = vlaneseq
        %v1371 = vshrl.u32 %v1370, 7
        %v1372 = vsub.s32 6, %v1371
        %v1373 = vrot.slane %v787, %v1372
        %v1374 = vlaneseq
        %v1375 = vshrl.u32 %v1374, 7
        %v1376 = vsub.s32 7, %v1375
        %v1377 = vrot.slane %v787, %v1376
        %v1378 = vlaneseq
        %v1379 = vshrl.u32 %v1378, 7
        %v1380 = vsub.s32 0, %v1379
        %v1381 = vrot.slane %v788, %v1380
        %v1382 = vlaneseq
        %v1383 = vshrl.u32 %v1382, 7
        %v1384 = vsub.s32 1, %v1383
        %v1385 = vrot.slane %v788, %v1384
        %v1386 = vlaneseq
        %v1387 = vshrl.u32 %v1386, 7
        %v1388 = vsub.s32 2, %v1387
        %v1389 = vrot.slane %v788, %v1388
        %v1390 = vlaneseq
        %v1391 = vshrl.u32 %v1390, 7
        %v1392 = vsub.s32 3, %v1391
        %v1393 = vrot.slane %v788, %v1392
        %v1394 = vlaneseq
        %v1395 = vshrl.u32 %v1394, 7
        %v1396 = vsub.s32 4, %v1395
        %v1397 = vrot.slane %v788, %v1396
        %v1398 = vlaneseq
        %v1399 = vshrl.u32 %v1398, 7
        %v1400 = vsub.s32 5, %v1399
        %v1401 = vrot.slane %v788, %v1400
        %v1402 = vlaneseq
        %v1403 = vshrl.u32 %v1402, 7
        %v1404 = vsub.s32 6, %v1403
        %v1405 = vrot.slane %v788, %v1404
        %v1406 = vlaneseq
        %v1407 = vshrl.u32 %v1406, 7
        %v1408 = vsub.s32 7, %v1407
        %v1409 = vrot.slane %v788, %v1408
        %v1410 = vlaneseq
        %v1411 = vshrl.u32 %v1410, 7
        %v1412 = vsub.s32 0, %v1411
        %v1413 = vrot.slane %v789, %v1412
        %v1414 = vlaneseq
        %v1415 = vshrl.u32 %v1414, 7
        %v1416 = vsub.s32 1, %v1415
        %v1417 = vrot.slane %v789, %v1416
        %v1418 = vlaneseq
        %v1419 = vshrl.u32 %v1418, 7
        %v1420 = vsub.s32 2, %v1419
        %v1421 = vrot.slane %v789, %v1420
        %v1422 = vlaneseq
        %v1423 = vshrl.u32 %v1422, 7
        %v1424 = vsub.s32 3, %v1423
        %v1425 = vrot.slane %v789, %v1424
        %v1426 = vlaneseq
        %v1427 = vshrl.u32 %v1426, 7
        %v1428 = vsub.s32 4, %v1427
        %v1429 = vrot.slane %v789, %v1428
        %v1430 = vlaneseq
        %v1431 = vshrl.u32 %v1430, 7
        %v1432 = vsub.s32 5, %v1431
        %v1433 = vrot.slane %v789, %v1432
        %v1434 = vlaneseq
        %v1435 = vshrl.u32 %v1434, 7
        %v1436 = vsub.s32 6, %v1435
        %v1437 = vrot.slane %v789, %v1436
        %v1438 = vlaneseq
        %v1439 = vshrl.u32 %v1438, 7
        %v1440 = vsub.s32 7, %v1439
        %v1441 = vrot.slane %v789, %v1440
        %v1442 = vlaneseq
        %v1443 = vshrl.u32 %v1442, 7
        %v1444 = vsub.s32 0, %v1443
        %v1445 = vrot.slane %v790, %v1444
        %v1446 = vlaneseq
        %v1447 = vshrl.u32 %v1446, 7
        %v1448 = vsub.s32 1, %v1447
        %v1449 = vrot.slane %v790, %v1448
        %v1450 = vlaneseq
        %v1451 = vshrl.u32 %v1450, 7
        %v1452 = vsub.s32 2, %v1451
        %v1453 = vrot.slane %v790, %v1452
        %v1454 = vlaneseq
        %v1455 = vshrl.u32 %v1454, 7
        %v1456 = vsub.s32 3, %v1455
        %v1457 = vrot.slane %v790, %v1456
        %v1458 = vlaneseq
        %v1459 = vshrl.u32 %v1458, 7
        %v1460 = vsub.s32 4, %v1459
        %v1461 = vrot.slane %v790, %v1460
        %v1462 = vlaneseq
        %v1463 = vshrl.u32 %v1462, 7
        %v1464 = vsub.s32 5, %v1463
        %v1465 = vrot.slane %v790, %v1464
        %v1466 = vlaneseq
        %v1467 = vshrl.u32 %v1466, 7
        %v1468 = vsub.s32 6, %v1467
        %v1469 = vrot.slane %v790, %v1468
        %v1470 = vlaneseq
        %v1471 = vshrl.u32 %v1470, 7
        %v1472 = vsub.s32 7, %v1471
        %v1473 = vrot.slane %v790, %v1472
        %v1474 = vlaneseq
        %v1475 = vshrl.u32 %v1474, 7
        %v1476 = vsub.s32 0, %v1475
        %v1477 = vrot.slane %v791, %v1476
        %v1478 = vlaneseq
        %v1479 = vshrl.u32 %v1478, 7
        %v1480 = vsub.s32 1, %v1479
        %v1481 = vrot.slane %v791, %v1480
        %v1482 = vlaneseq
        %v1483 = vshrl.u32 %v1482, 7
        %v1484 = vsub.s32 2, %v1483
        %v1485 = vrot.slane %v791, %v1484
        %v1486 = vlaneseq
        %v1487 = vshrl.u32 %v1486, 7
        %v1488 = vsub.s32 3, %v1487
        %v1489 = vrot.slane %v791, %v1488
        %v1490 = vlaneseq
        %v1491 = vshrl.u32 %v1490, 7
        %v1492 = vsub.s32 4, %v1491
        %v1493 = vrot.slane %v791, %v1492
        %v1494 = vlaneseq
        %v1495 = vshrl.u32 %v1494, 7
        %v1496 = vsub.s32 5, %v1495
        %v1497 = vrot.slane %v791, %v1496
        %v1498 = vlaneseq
        %v1499 = vshrl.u32 %v1498, 7
        %v1500 = vsub.s32 6, %v1499
        %v1501 = vrot.slane %v791, %v1500
        %v1502 = vlaneseq
        %v1503 = vshrl.u32 %v1502, 7
        %v1504 = vsub.s32 7, %v1503
        %v1505 = vrot.slane %v791, %v1504
        %v1506 = vlaneseq
        %v1507 = vshrl.u32 %v1506, 7
        %v1508 = vsub.s32 0, %v1507
        %v1509 = vrot.slane %v792, %v1508
        %v1510 = vlaneseq
        %v1511 = vshrl.u32 %v1510, 7
        %v1512 = vsub.s32 1, %v1511
        %v1513 = vrot.slane %v792, %v1512
        %v1514 = vlaneseq
        %v1515 = vshrl.u32 %v1514, 7
        %v1516 = vsub.s32 2, %v1515
        %v1517 = vrot.slane %v792, %v1516
        %v1518 = vlaneseq
        %v1519 = vshrl.u32 %v1518, 7
        %v1520 = vsub.s32 3, %v1519
        %v1521 = vrot.slane %v792, %v1520
        %v1522 = vlaneseq
        %v1523 = vshrl.u32 %v1522, 7
        %v1524 = vsub.s32 4, %v1523
        %v1525 = vrot.slane %v792, %v1524
        %v1526 = vlaneseq
        %v1527 = vshrl.u32 %v1526, 7
        %v1528 = vsub.s32 5, %v1527
        %v1529 = vrot.slane %v792, %v1528
        %v1530 = vlaneseq
        %v1531 = vshrl.u32 %v1530, 7
        %v1532 = vsub.s32 6, %v1531
        %v1533 = vrot.slane %v792, %v1532
        %v1534 = vlaneseq
        %v1535 = vshrl.u32 %v1534, 7
        %v1536 = vsub.s32 7, %v1535
        %v1537 = vrot.slane %v792, %v1536
        %v1538 = vlaneseq
        %v1539 = vshrl.u32 %v1538, 7
        %v1540 = vsub.s32 0, %v1539
        %v1541 = vrot.slane %v793, %v1540
        %v1542 = vlaneseq
        %v1543 = vshrl.u32 %v1542, 7
        %v1544 = vsub.s32 1, %v1543
        %v1545 = vrot.slane %v793, %v1544
        %v1546 = vlaneseq
        %v1547 = vshrl.u32 %v1546, 7
        %v1548 = vsub.s32 2, %v1547
        %v1549 = vrot.slane %v793, %v1548
        %v1550 = vlaneseq
        %v1551 = vshrl.u32 %v1550, 7
        %v1552 = vsub.s32 3, %v1551
        %v1553 = vrot.slane %v793, %v1552
        %v1554 = vlaneseq
        %v1555 = vshrl.u32 %v1554, 7
        %v1556 = vsub.s32 4, %v1555
        %v1557 = vrot.slane %v793, %v1556
        %v1558 = vlaneseq
        %v1559 = vshrl.u32 %v1558, 7
        %v1560 = vsub.s32 5, %v1559
        %v1561 = vrot.slane %v793, %v1560
        %v1562 = vlaneseq
        %v1563 = vshrl.u32 %v1562, 7
        %v1564 = vsub.s32 6, %v1563
        %v1565 = vrot.slane %v793, %v1564
        %v1566 = vlaneseq
        %v1567 = vshrl.u32 %v1566, 7
        %v1568 = vsub.s32 7, %v1567
        %v1569 = vrot.slane %v793, %v1568
        %v1570 = vlaneseq
        %v1571 = vshrl.u32 %v1570, 7
        %v1572 = vsub.s32 0, %v1571
        %v1573 = vrot.slane %v794, %v1572
        %v1574 = vlaneseq
        %v1575 = vshrl.u32 %v1574, 7
        %v1576 = vsub.s32 1, %v1575
        %v1577 = vrot.slane %v794, %v1576
        %v1578 = vlaneseq
        %v1579 = vshrl.u32 %v1578, 7
        %v1580 = vsub.s32 2, %v1579
        %v1581 = vrot.slane %v794, %v1580
        %v1582 = vlaneseq
        %v1583 = vshrl.u32 %v1582, 7
        %v1584 = vsub.s32 3, %v1583
        %v1585 = vrot.slane %v794, %v1584
        %v1586 = vlaneseq
        %v1587 = vshrl.u32 %v1586, 7
        %v1588 = vsub.s32 4, %v1587
        %v1589 = vrot.slane %v794, %v1588
        %v1590 = vlaneseq
        %v1591 = vshrl.u32 %v1590, 7
        %v1592 = vsub.s32 5, %v1591
        %v1593 = vrot.slane %v794, %v1592
        %v1594 = vlaneseq
        %v1595 = vshrl.u32 %v1594, 7
        %v1596 = vsub.s32 6, %v1595
        %v1597 = vrot.slane %v794, %v1596
        %v1598 = vlaneseq
        %v1599 = vshrl.u32 %v1598, 7
        %v1600 = vsub.s32 7, %v1599
        %v1601 = vrot.slane %v794, %v1600
        %v1602 = vlaneseq
        %v1603 = vshrl.u32 %v1602, 7
        %v1604 = vsub.s32 0, %v1603
        %v1605 = vrot.slane %v795, %v1604
        %v1606 = vlaneseq
        %v1607 = vshrl.u32 %v1606, 7
        %v1608 = vsub.s32 1, %v1607
        %v1609 = vrot.slane %v795, %v1608
        %v1610 = vlaneseq
        %v1611 = vshrl.u32 %v1610, 7
        %v1612 = vsub.s32 2, %v1611
        %v1613 = vrot.slane %v795, %v1612
        %v1614 = vlaneseq
        %v1615 = vshrl.u32 %v1614, 7
        %v1616 = vsub.s32 3, %v1615
        %v1617 = vrot.slane %v795, %v1616
        %v1618 = vlaneseq
        %v1619 = vshrl.u32 %v1618, 7
        %v1620 = vsub.s32 4, %v1619
        %v1621 = vrot.slane %v795, %v1620
        %v1622 = vlaneseq
        %v1623 = vshrl.u32 %v1622, 7
        %v1624 = vsub.s32 5, %v1623
        %v1625 = vrot.slane %v795, %v1624
        %v1626 = vlaneseq
        %v1627 = vshrl.u32 %v1626, 7
        %v1628 = vsub.s32 6, %v1627
        %v1629 = vrot.slane %v795, %v1628
        %v1630 = vlaneseq
        %v1631 = vshrl.u32 %v1630, 7
        %v1632 = vsub.s32 7, %v1631
        %v1633 = vrot.slane %v795, %v1632
        %v1634 = vlaneseq
        %v1635 = vshrl.u32 %v1634, 7
        %v1636 = vsub.s32 0, %v1635
        %v1637 = vrot.slane %v796, %v1636
        %v1638 = vlaneseq
        %v1639 = vshrl.u32 %v1638, 7
        %v1640 = vsub.s32 1, %v1639
        %v1641 = vrot.slane %v796, %v1640
        %v1642 = vlaneseq
        %v1643 = vshrl.u32 %v1642, 7
        %v1644 = vsub.s32 2, %v1643
        %v1645 = vrot.slane %v796, %v1644
        %v1646 = vlaneseq
        %v1647 = vshrl.u32 %v1646, 7
        %v1648 = vsub.s32 3, %v1647
        %v1649 = vrot.slane %v796, %v1648
        %v1650 = vlaneseq
        %v1651 = vshrl.u32 %v1650, 7
        %v1652 = vsub.s32 4, %v1651
        %v1653 = vrot.slane %v796, %v1652
        %v1654 = vlaneseq
        %v1655 = vshrl.u32 %v1654, 7
        %v1656 = vsub.s32 5, %v1655
        %v1657 = vrot.slane %v796, %v1656
        %v1658 = vlaneseq
        %v1659 = vshrl.u32 %v1658, 7
        %v1660 = vsub.s32 6, %v1659
        %v1661 = vrot.slane %v796, %v1660
        %v1662 = vlaneseq
        %v1663 = vshrl.u32 %v1662, 7
        %v1664 = vsub.s32 7, %v1663
        %v1665 = vrot.slane %v796, %v1664
        %v1666 = vlaneseq
        %v1667 = vshrl.u32 %v1666, 7
        %v1668 = vsub.s32 0, %v1667
        %v1669 = vrot.slane %v797, %v1668
        %v1670 = vlaneseq
        %v1671 = vshrl.u32 %v1670, 7
        %v1672 = vsub.s32 1, %v1671
        %v1673 = vrot.slane %v797, %v1672
        %v1674 = vlaneseq
        %v1675 = vshrl.u32 %v1674, 7
        %v1676 = vsub.s32 2, %v1675
        %v1677 = vrot.slane %v797, %v1676
        %v1678 = vlaneseq
        %v1679 = vshrl.u32 %v1678, 7
        %v1680 = vsub.s32 3, %v1679
        %v1681 = vrot.slane %v797, %v1680
        %v1682 = vlaneseq
        %v1683 = vshrl.u32 %v1682, 7
        %v1684 = vsub.s32 4, %v1683
        %v1685 = vrot.slane %v797, %v1684
        %v1686 = vlaneseq
        %v1687 = vshrl.u32 %v1686, 7
        %v1688 = vsub.s32 5, %v1687
        %v1689 = vrot.slane %v797, %v1688
        %v1690 = vlaneseq
        %v1691 = vshrl.u32 %v1690, 7
        %v1692 = vsub.s32 6, %v1691
        %v1693 = vrot.slane %v797, %v1692
        %v1694 = vlaneseq
        %v1695 = vshrl.u32 %v1694, 7
        %v1696 = vsub.s32 7, %v1695
        %v1697 = vrot.slane %v797, %v1696
        %v1698 = vlaneseq
        %v1699 = vshrl.u32 %v1698, 7
        %v1700 = vsub.s32 0, %v1699
        %v1701 = vrot.slane %v798, %v1700
        %v1702 = vlaneseq
        %v1703 = vshrl.u32 %v1702, 7
        %v1704 = vsub.s32 1, %v1703
        %v1705 = vrot.slane %v798, %v1704
        %v1706 = vlaneseq
        %v1707 = vshrl.u32 %v1706, 7
        %v1708 = vsub.s32 2, %v1707
        %v1709 = vrot.slane %v798, %v1708
        %v1710 = vlaneseq
        %v1711 = vshrl.u32 %v1710, 7
        %v1712 = vsub.s32 3, %v1711
        %v1713 = vrot.slane %v798, %v1712
        %v1714 = vlaneseq
        %v1715 = vshrl.u32 %v1714, 7
        %v1716 = vsub.s32 4, %v1715
        %v1717 = vrot.slane %v798, %v1716
        %v1718 = vlaneseq
        %v1719 = vshrl.u32 %v1718, 7
        %v1720 = vsub.s32 5, %v1719
        %v1721 = vrot.slane %v798, %v1720
        %v1722 = vlaneseq
        %v1723 = vshrl.u32 %v1722, 7
        %v1724 = vsub.s32 6, %v1723
        %v1725 = vrot.slane %v798, %v1724
        %v1726 = vlaneseq
        %v1727 = vshrl.u32 %v1726, 7
        %v1728 = vsub.s32 7, %v1727
        %v1729 = vrot.slane %v798, %v1728
        %v1730 = vlaneseq
        %v1731 = vshrl.u32 %v1730, 7
        %v1732 = vsub.s32 0, %v1731
        %v1733 = vrot.slane %v799, %v1732
        %v1734 = vlaneseq
        %v1735 = vshrl.u32 %v1734, 7
        %v1736 = vsub.s32 1, %v1735
        %v1737 = vrot.slane %v799, %v1736
        %v1738 = vlaneseq
        %v1739 = vshrl.u32 %v1738, 7
        %v1740 = vsub.s32 2, %v1739
        %v1741 = vrot.slane %v799, %v1740
        %v1742 = vlaneseq
        %v1743 = vshrl.u32 %v1742, 7
        %v1744 = vsub.s32 3, %v1743
        %v1745 = vrot.slane %v799, %v1744
        %v1746 = vlaneseq
        %v1747 = vshrl.u32 %v1746, 7
        %v1748 = vsub.s32 4, %v1747
        %v1749 = vrot.slane %v799, %v1748
        %v1750 = vlaneseq
        %v1751 = vshrl.u32 %v1750, 7
        %v1752 = vsub.s32 5, %v1751
        %v1753 = vrot.slane %v799, %v1752
        %v1754 = vlaneseq
        %v1755 = vshrl.u32 %v1754, 7
        %v1756 = vsub.s32 6, %v1755
        %v1757 = vrot.slane %v799, %v1756
        %v1758 = vlaneseq
        %v1759 = vshrl.u32 %v1758, 7
        %v1760 = vsub.s32 7, %v1759
        %v1761 = vrot.slane %v799, %v1760
        %v1762 = vlaneseq
        %v1763 = vshrl.u32 %v1762, 7
        %v1764 = vsub.s32 0, %v1763
        %v1765 = vrot.slane %v800, %v1764
        %v1766 = vlaneseq
        %v1767 = vshrl.u32 %v1766, 7
        %v1768 = vsub.s32 1, %v1767
        %v1769 = vrot.slane %v800, %v1768
        %v1770 = vlaneseq
        %v1771 = vshrl.u32 %v1770, 7
        %v1772 = vsub.s32 2, %v1771
        %v1773 = vrot.slane %v800, %v1772
        %v1774 = vlaneseq
        %v1775 = vshrl.u32 %v1774, 7
        %v1776 = vsub.s32 3, %v1775
        %v1777 = vrot.slane %v800, %v1776
        %v1778 = vlaneseq
        %v1779 = vshrl.u32 %v1778, 7
        %v1780 = vsub.s32 4, %v1779
        %v1781 = vrot.slane %v800, %v1780
        %v1782 = vlaneseq
        %v1783 = vshrl.u32 %v1782, 7
        %v1784 = vsub.s32 5, %v1783
        %v1785 = vrot.slane %v800, %v1784
        %v1786 = vlaneseq
        %v1787 = vshrl.u32 %v1786, 7
        %v1788 = vsub.s32 6, %v1787
        %v1789 = vrot.slane %v800, %v1788
        %v1790 = vlaneseq
        %v1791 = vshrl.u32 %v1790, 7
        %v1792 = vsub.s32 7, %v1791
        %v1793 = vrot.slane %v800, %v1792
        %v1794 = vlaneseq
        %v1795 = vshrl.u32 %v1794, 7
        %v1796 = vsub.s32 0, %v1795
        %v1797 = vrot.slane %v801, %v1796
        %v1798 = vlaneseq
        %v1799 = vshrl.u32 %v1798, 7
        %v1800 = vsub.s32 1, %v1799
        %v1801 = vrot.slane %v801, %v1800
        %v1802 = vlaneseq
        %v1803 = vshrl.u32 %v1802, 7
        %v1804 = vsub.s32 2, %v1803
        %v1805 = vrot.slane %v801, %v1804
        %v1806 = vlaneseq
        %v1807 = vshrl.u32 %v1806, 7
        %v1808 = vsub.s32 3, %v1807
        %v1809 = vrot.slane %v801, %v1808
        %v1810 = vlaneseq
        %v1811 = vshrl.u32 %v1810, 7
        %v1812 = vsub.s32 4, %v1811
        %v1813 = vrot.slane %v801, %v1812
        %v1814 = vlaneseq
        %v1815 = vshrl.u32 %v1814, 7
        %v1816 = vsub.s32 5, %v1815
        %v1817 = vrot.slane %v801, %v1816
        %v1818 = vlaneseq
        %v1819 = vshrl.u32 %v1818, 7
        %v1820 = vsub.s32 6, %v1819
        %v1821 = vrot.slane %v801, %v1820
        %v1822 = vlaneseq
        %v1823 = vshrl.u32 %v1822, 7
        %v1824 = vsub.s32 7, %v1823
        %v1825 = vrot.slane %v801, %v1824
        %v1826 = vcombine.low %v805, %v809
        %v1827 = vcombine.low %v813, %v817
        %v1828 = vcombine.low %v821, %v825
        %v1829 = vcombine.low %v829, %v833
        %v1831 = vunpack.c.l.s4 1966171168
        %v1832 = vunpack.c.0.s8 %v1831
        %v1833 = vlaneseq
        %v1834 = vshrl.u32 %v1833, 7
        %v1835 = vsub.s32 %v1832, %v1834
        %v1836 = vrot.slane %v1826, %v1835
        %v1838 = vunpack.c.l.s4 1966171168
        %v1839 = vunpack.c.0.s8 %v1838
        %v1840 = vlaneseq
        %v1841 = vshrl.u32 %v1840, 7
        %v1842 = vsub.s32 %v1839, %v1841
        %v1843 = vrot.slane %v1827, %v1842
        %v1845 = vunpack.c.l.s4 1966171168
        %v1846 = vunpack.c.0.s8 %v1845
        %v1847 = vlaneseq
        %v1848 = vshrl.u32 %v1847, 7
        %v1849 = vsub.s32 %v1846, %v1848
        %v1850 = vrot.slane %v1828, %v1849
        %v1852 = vunpack.c.l.s4 1966171168
        %v1853 = vunpack.c.0.s8 %v1852
        %v1854 = vlaneseq
        %v1855 = vshrl.u32 %v1854, 7
        %v1856 = vsub.s32 %v1853, %v1855
        %v1857 = vrot.slane %v1829, %v1856
        %v1858 = vcombine.low %v1836, %v1843
        %v1859 = vcombine.low %v1850, %v1857
        %v1861 = vunpack.c.l.s4 1966171168
        %v1862 = vunpack.c.0.s8 %v1861
        %v1863 = vlaneseq
        %v1864 = vshrl.u32 %v1863, 7
        %v1865 = vsub.s32 %v1862, %v1864
        %v1866 = vrot.slane %v1858, %v1865
        %v1868 = vunpack.c.l.s4 1966171168
        %v1869 = vunpack.c.0.s8 %v1868
        %v1870 = vlaneseq
        %v1871 = vshrl.u32 %v1870, 7
        %v1872 = vsub.s32 %v1869, %v1871
        %v1873 = vrot.slane %v1859, %v1872
        %v1874 = vcombine.low %v1866, %v1873
        %v1875 = vcombine.low %v837, %v841
        %v1876 = vcombine.low %v845, %v849
        %v1877 = vcombine.low %v853, %v857
        %v1878 = vcombine.low %v861, %v865
        %v1880 = vunpack.c.l.s4 1966171168
        %v1881 = vunpack.c.0.s8 %v1880
        %v1882 = vlaneseq
        %v1883 = vshrl.u32 %v1882, 7
        %v1884 = vsub.s32 %v1881, %v1883
        %v1885 = vrot.slane %v1875, %v1884
        %v1887 = vunpack.c.l.s4 1966171168
        %v1888 = vunpack.c.0.s8 %v1887
        %v1889 = vlaneseq
        %v1890 = vshrl.u32 %v1889, 7
        %v1891 = vsub.s32 %v1888, %v1890
        %v1892 = vrot.slane %v1876, %v1891
        %v1894 = vunpack.c.l.s4 1966171168
        %v1895 = vunpack.c.0.s8 %v1894
        %v1896 = vlaneseq
        %v1897 = vshrl.u32 %v1896, 7
        %v1898 = vsub.s32 %v1895, %v1897
        %v1899 = vrot.slane %v1877, %v1898
        %v1901 = vunpack.c.l.s4 1966171168
        %v1902 = vunpack.c.0.s8 %v1901
        %v1903 = vlaneseq
        %v1904 = vshrl.u32 %v1903, 7
        %v1905 = vsub.s32 %v1902, %v1904
        %v1906 = vrot.slane %v1878, %v1905
        %v1907 = vcombine.low %v1885, %v1892
        %v1908 = vcombine.low %v1899, %v1906
        %v1910 = vunpack.c.l.s4 1966171168
        %v1911 = vunpack.c.0.s8 %v1910
        %v1912 = vlaneseq
        %v1913 = vshrl.u32 %v1912, 7
        %v1914 = vsub.s32 %v1911, %v1913
        %v1915 = vrot.slane %v1907, %v1914
        %v1917 = vunpack.c.l.s4 1966171168
        %v1918 = vunpack.c.0.s8 %v1917
        %v1919 = vlaneseq
        %v1920 = vshrl.u32 %v1919, 7
        %v1921 = vsub.s32 %v1918, %v1920
        %v1922 = vrot.slane %v1908, %v1921
        %v1923 = vcombine.low %v1915, %v1922
        %v1924 = vcombine.low %v869, %v873
        %v1925 = vcombine.low %v877, %v881
        %v1926 = vcombine.low %v885, %v889
        %v1927 = vcombine.low %v893, %v897
        %v1929 = vunpack.c.l.s4 1966171168
        %v1930 = vunpack.c.0.s8 %v1929
        %v1931 = vlaneseq
        %v1932 = vshrl.u32 %v1931, 7
        %v1933 = vsub.s32 %v1930, %v1932
        %v1934 = vrot.slane %v1924, %v1933
        %v1936 = vunpack.c.l.s4 1966171168
        %v1937 = vunpack.c.0.s8 %v1936
        %v1938 = vlaneseq
        %v1939 = vshrl.u32 %v1938, 7
        %v1940 = vsub.s32 %v1937, %v1939
        %v1941 = vrot.slane %v1925, %v1940
        %v1943 = vunpack.c.l.s4 1966171168
        %v1944 = vunpack.c.0.s8 %v1943
        %v1945 = vlaneseq
        %v1946 = vshrl.u32 %v1945, 7
        %v1947 = vsub.s32 %v1944, %v1946
        %v1948 = vrot.slane %v1926, %v1947
        %v1950 = vunpack.c.l.s4 1966171168
        %v1951 = vunpack.c.0.s8 %v1950
        %v1952 = vlaneseq
        %v1953 = vshrl.u32 %v1952, 7
        %v1954 = vsub.s32 %v1951, %v1953
        %v1955 = vrot.slane %v1927, %v1954
        %v1956 = vcombine.low %v1934, %v1941
        %v1957 = vcombine.low %v1948, %v1955
        %v1959 = vunpack.c.l.s4 1966171168
        %v1960 = vunpack.c.0.s8 %v1959
        %v1961 = vlaneseq
        %v1962 = vshrl.u32 %v1961, 7
        %v1963 = vsub.s32 %v1960, %v1962
        %v1964 = vrot.slane %v1956, %v1963
        %v1966 = vunpack.c.l.s4 1966171168
        %v1967 = vunpack.c.0.s8 %v1966
        %v1968 = vlaneseq
        %v1969 = vshrl.u32 %v1968, 7
        %v1970 = vsub.s32 %v1967, %v1969
        %v1971 = vrot.slane %v1957, %v1970
        %v1972 = vcombine.low %v1964, %v1971
        %v1973 = vcombine.low %v901, %v905
        %v1974 = vcombine.low %v909, %v913
        %v1975 = vcombine.low %v917, %v921
        %v1976 = vcombine.low %v925, %v929
        %v1978 = vunpack.c.l.s4 1966171168
        %v1979 = vunpack.c.0.s8 %v1978
        %v1980 = vlaneseq
        %v1981 = vshrl.u32 %v1980, 7
        %v1982 = vsub.s32 %v1979, %v1981
        %v1983 = vrot.slane %v1973, %v1982
        %v1985 = vunpack.c.l.s4 1966171168
        %v1986 = vunpack.c.0.s8 %v1985
        %v1987 = vlaneseq
        %v1988 = vshrl.u32 %v1987, 7
        %v1989 = vsub.s32 %v1986, %v1988
        %v1990 = vrot.slane %v1974, %v1989
        %v1992 = vunpack.c.l.s4 1966171168
        %v1993 = vunpack.c.0.s8 %v1992
        %v1994 = vlaneseq
        %v1995 = vshrl.u32 %v1994, 7
        %v1996 = vsub.s32 %v1993, %v1995
        %v1997 = vrot.slane %v1975, %v1996
        %v1999 = vunpack.c.l.s4 1966171168
        %v2000 = vunpack.c.0.s8 %v1999
        %v2001 = vlaneseq
        %v2002 = vshrl.u32 %v2001, 7
        %v2003 = vsub.s32 %v2000, %v2002
        %v2004 = vrot.slane %v1976, %v2003
        %v2005 = vcombine.low %v1983, %v1990
        %v2006 = vcombine.low %v1997, %v2004
        %v2008 = vunpack.c.l.s4 1966171168
        %v2009 = vunpack.c.0.s8 %v2008
        %v2010 = vlaneseq
        %v2011 = vshrl.u32 %v2010, 7
        %v2012 = vsub.s32 %v2009, %v2011
        %v2013 = vrot.slane %v2005, %v2012
        %v2015 = vunpack.c.l.s4 1966171168
        %v2016 = vunpack.c.0.s8 %v2015
        %v2017 = vlaneseq
        %v2018 = vshrl.u32 %v2017, 7
        %v2019 = vsub.s32 %v2016, %v2018
        %v2020 = vrot.slane %v2006, %v2019
        %v2021 = vcombine.low %v2013, %v2020
        %v2022 = vcombine.low %v933, %v937
        %v2023 = vcombine.low %v941, %v945
        %v2024 = vcombine.low %v949, %v953
        %v2025 = vcombine.low %v957, %v961
        %v2027 = vunpack.c.l.s4 1966171168
        %v2028 = vunpack.c.0.s8 %v2027
        %v2029 = vlaneseq
        %v2030 = vshrl.u32 %v2029, 7
        %v2031 = vsub.s32 %v2028, %v2030
        %v2032 = vrot.slane %v2022, %v2031
        %v2034 = vunpack.c.l.s4 1966171168
        %v2035 = vunpack.c.0.s8 %v2034
        %v2036 = vlaneseq
        %v2037 = vshrl.u32 %v2036, 7
        %v2038 = vsub.s32 %v2035, %v2037
        %v2039 = vrot.slane %v2023, %v2038
        %v2041 = vunpack.c.l.s4 1966171168
        %v2042 = vunpack.c.0.s8 %v2041
        %v2043 = vlaneseq
        %v2044 = vshrl.u32 %v2043, 7
        %v2045 = vsub.s32 %v2042, %v2044
        %v2046 = vrot.slane %v2024, %v2045
        %v2048 = vunpack.c.l.s4 1966171168
        %v2049 = vunpack.c.0.s8 %v2048
        %v2050 = vlaneseq
        %v2051 = vshrl.u32 %v2050, 7
        %v2052 = vsub.s32 %v2049, %v2051
        %v2053 = vrot.slane %v2025, %v2052
        %v2054 = vcombine.low %v2032, %v2039
        %v2055 = vcombine.low %v2046, %v2053
        %v2057 = vunpack.c.l.s4 1966171168
        %v2058 = vunpack.c.0.s8 %v2057
        %v2059 = vlaneseq
        %v2060 = vshrl.u32 %v2059, 7
        %v2061 = vsub.s32 %v2058, %v2060
        %v2062 = vrot.slane %v2054, %v2061
        %v2064 = vunpack.c.l.s4 1966171168
        %v2065 = vunpack.c.0.s8 %v2064
        %v2066 = vlaneseq
        %v2067 = vshrl.u32 %v2066, 7
        %v2068 = vsub.s32 %v2065, %v2067
        %v2069 = vrot.slane %v2055, %v2068
        %v2070 = vcombine.low %v2062, %v2069
        %v2071 = vcombine.low %v965, %v969
        %v2072 = vcombine.low %v973, %v977
        %v2073 = vcombine.low %v981, %v985
        %v2074 = vcombine.low %v989, %v993
        %v2076 = vunpack.c.l.s4 1966171168
        %v2077 = vunpack.c.0.s8 %v2076
        %v2078 = vlaneseq
        %v2079 = vshrl.u32 %v2078, 7
        %v2080 = vsub.s32 %v2077, %v2079
        %v2081 = vrot.slane %v2071, %v2080
        %v2083 = vunpack.c.l.s4 1966171168
        %v2084 = vunpack.c.0.s8 %v2083
        %v2085 = vlaneseq
        %v2086 = vshrl.u32 %v2085, 7
        %v2087 = vsub.s32 %v2084, %v2086
        %v2088 = vrot.slane %v2072, %v2087
        %v2090 = vunpack.c.l.s4 1966171168
        %v2091 = vunpack.c.0.s8 %v2090
        %v2092 = vlaneseq
        %v2093 = vshrl.u32 %v2092, 7
        %v2094 = vsub.s32 %v2091, %v2093
        %v2095 = vrot.slane %v2073, %v2094
        %v2097 = vunpack.c.l.s4 1966171168
        %v2098 = vunpack.c.0.s8 %v2097
        %v2099 = vlaneseq
        %v2100 = vshrl.u32 %v2099, 7
        %v2101 = vsub.s32 %v2098, %v2100
        %v2102 = vrot.slane %v2074, %v2101
        %v2103 = vcombine.low %v2081, %v2088
        %v2104 = vcombine.low %v2095, %v2102
        %v2106 = vunpack.c.l.s4 1966171168
        %v2107 = vunpack.c.0.s8 %v2106
        %v2108 = vlaneseq
        %v2109 = vshrl.u32 %v2108, 7
        %v2110 = vsub.s32 %v2107, %v2109
        %v2111 = vrot.slane %v2103, %v2110
        %v2113 = vunpack.c.l.s4 1966171168
        %v2114 = vunpack.c.0.s8 %v2113
        %v2115 = vlaneseq
        %v2116 = vshrl.u32 %v2115, 7
        %v2117 = vsub.s32 %v2114, %v2116
        %v2118 = vrot.slane %v2104, %v2117
        %v2119 = vcombine.low %v2111, %v2118
        %v2120 = vcombine.low %v997, %v1001
        %v2121 = vcombine.low %v1005, %v1009
        %v2122 = vcombine.low %v1013, %v1017
        %v2123 = vcombine.low %v1021, %v1025
        %v2125 = vunpack.c.l.s4 1966171168
        %v2126 = vunpack.c.0.s8 %v2125
        %v2127 = vlaneseq
        %v2128 = vshrl.u32 %v2127, 7
        %v2129 = vsub.s32 %v2126, %v2128
        %v2130 = vrot.slane %v2120, %v2129
        %v2132 = vunpack.c.l.s4 1966171168
        %v2133 = vunpack.c.0.s8 %v2132
        %v2134 = vlaneseq
        %v2135 = vshrl.u32 %v2134, 7
        %v2136 = vsub.s32 %v2133, %v2135
        %v2137 = vrot.slane %v2121, %v2136
        %v2139 = vunpack.c.l.s4 1966171168
        %v2140 = vunpack.c.0.s8 %v2139
        %v2141 = vlaneseq
        %v2142 = vshrl.u32 %v2141, 7
        %v2143 = vsub.s32 %v2140, %v2142
        %v2144 = vrot.slane %v2122, %v2143
        %v2146 = vunpack.c.l.s4 1966171168
        %v2147 = vunpack.c.0.s8 %v2146
        %v2148 = vlaneseq
        %v2149 = vshrl.u32 %v2148, 7
        %v2150 = vsub.s32 %v2147, %v2149
        %v2151 = vrot.slane %v2123, %v2150
        %v2152 = vcombine.low %v2130, %v2137
        %v2153 = vcombine.low %v2144, %v2151
        %v2155 = vunpack.c.l.s4 1966171168
        %v2156 = vunpack.c.0.s8 %v2155
        %v2157 = vlaneseq
        %v2158 = vshrl.u32 %v2157, 7
        %v2159 = vsub.s32 %v2156, %v2158
        %v2160 = vrot.slane %v2152, %v2159
        %v2162 = vunpack.c.l.s4 1966171168
        %v2163 = vunpack.c.0.s8 %v2162
        %v2164 = vlaneseq
        %v2165 = vshrl.u32 %v2164, 7
        %v2166 = vsub.s32 %v2163, %v2165
        %v2167 = vrot.slane %v2153, %v2166
        %v2168 = vcombine.low %v2160, %v2167
        %v2169 = vcombine.low %v1029, %v1033
        %v2170 = vcombine.low %v1037, %v1041
        %v2171 = vcombine.low %v1045, %v1049
        %v2172 = vcombine.low %v1053, %v1057
        %v2174 = vunpack.c.l.s4 1966171168
        %v2175 = vunpack.c.0.s8 %v2174
        %v2176 = vlaneseq
        %v2177 = vshrl.u32 %v2176, 7
        %v2178 = vsub.s32 %v2175, %v2177
        %v2179 = vrot.slane %v2169, %v2178
        %v2181 = vunpack.c.l.s4 1966171168
        %v2182 = vunpack.c.0.s8 %v2181
        %v2183 = vlaneseq
        %v2184 = vshrl.u32 %v2183, 7
        %v2185 = vsub.s32 %v2182, %v2184
        %v2186 = vrot.slane %v2170, %v2185
        %v2188 = vunpack.c.l.s4 1966171168
        %v2189 = vunpack.c.0.s8 %v2188
        %v2190 = vlaneseq
        %v2191 = vshrl.u32 %v2190, 7
        %v2192 = vsub.s32 %v2189, %v2191
        %v2193 = vrot.slane %v2171, %v2192
        %v2195 = vunpack.c.l.s4 1966171168
        %v2196 = vunpack.c.0.s8 %v2195
        %v2197 = vlaneseq
        %v2198 = vshrl.u32 %v2197, 7
        %v2199 = vsub.s32 %v2196, %v2198
        %v2200 = vrot.slane %v2172, %v2199
        %v2201 = vcombine.low %v2179, %v2186
        %v2202 = vcombine.low %v2193, %v2200
        %v2204 = vunpack.c.l.s4 1966171168
        %v2205 = vunpack.c.0.s8 %v2204
        %v2206 = vlaneseq
        %v2207 = vshrl.u32 %v2206, 7
        %v2208 = vsub.s32 %v2205, %v2207
        %v2209 = vrot.slane %v2201, %v2208
        %v2211 = vunpack.c.l.s4 1966171168
        %v2212 = vunpack.c.0.s8 %v2211
        %v2213 = vlaneseq
        %v2214 = vshrl.u32 %v2213, 7
        %v2215 = vsub.s32 %v2212, %v2214
        %v2216 = vrot.slane %v2202, %v2215
        %v2217 = vcombine.low %v2209, %v2216
        %v2218 = vcombine.low %v1061, %v1065
        %v2219 = vcombine.low %v1069, %v1073
        %v2220 = vcombine.low %v1077, %v1081
        %v2221 = vcombine.low %v1085, %v1089
        %v2223 = vunpack.c.l.s4 1966171168
        %v2224 = vunpack.c.0.s8 %v2223
        %v2225 = vlaneseq
        %v2226 = vshrl.u32 %v2225, 7
        %v2227 = vsub.s32 %v2224, %v2226
        %v2228 = vrot.slane %v2218, %v2227
        %v2230 = vunpack.c.l.s4 1966171168
        %v2231 = vunpack.c.0.s8 %v2230
        %v2232 = vlaneseq
        %v2233 = vshrl.u32 %v2232, 7
        %v2234 = vsub.s32 %v2231, %v2233
        %v2235 = vrot.slane %v2219, %v2234
        %v2237 = vunpack.c.l.s4 1966171168
        %v2238 = vunpack.c.0.s8 %v2237
        %v2239 = vlaneseq
        %v2240 = vshrl.u32 %v2239, 7
        %v2241 = vsub.s32 %v2238, %v2240
        %v2242 = vrot.slane %v2220, %v2241
        %v2244 = vunpack.c.l.s4 1966171168
        %v2245 = vunpack.c.0.s8 %v2244
        %v2246 = vlaneseq
        %v2247 = vshrl.u32 %v2246, 7
        %v2248 = vsub.s32 %v2245, %v2247
        %v2249 = vrot.slane %v2221, %v2248
        %v2250 = vcombine.low %v2228, %v2235
        %v2251 = vcombine.low %v2242, %v2249
        %v2253 = vunpack.c.l.s4 1966171168
        %v2254 = vunpack.c.0.s8 %v2253
        %v2255 = vlaneseq
        %v2256 = vshrl.u32 %v2255, 7
        %v2257 = vsub.s32 %v2254, %v2256
        %v2258 = vrot.slane %v2250, %v2257
        %v2260 = vunpack.c.l.s4 1966171168
        %v2261 = vunpack.c.0.s8 %v2260
        %v2262 = vlaneseq
        %v2263 = vshrl.u32 %v2262, 7
        %v2264 = vsub.s32 %v2261, %v2263
        %v2265 = vrot.slane %v2251, %v2264
        %v2266 = vcombine.low %v2258, %v2265
        %v2267 = vcombine.low %v1093, %v1097
        %v2268 = vcombine.low %v1101, %v1105
        %v2269 = vcombine.low %v1109, %v1113
        %v2270 = vcombine.low %v1117, %v1121
        %v2272 = vunpack.c.l.s4 1966171168
        %v2273 = vunpack.c.0.s8 %v2272
        %v2274 = vlaneseq
        %v2275 = vshrl.u32 %v2274, 7
        %v2276 = vsub.s32 %v2273, %v2275
        %v2277 = vrot.slane %v2267, %v2276
        %v2279 = vunpack.c.l.s4 1966171168
        %v2280 = vunpack.c.0.s8 %v2279
        %v2281 = vlaneseq
        %v2282 = vshrl.u32 %v2281, 7
        %v2283 = vsub.s32 %v2280, %v2282
        %v2284 = vrot.slane %v2268, %v2283
        %v2286 = vunpack.c.l.s4 1966171168
        %v2287 = vunpack.c.0.s8 %v2286
        %v2288 = vlaneseq
        %v2289 = vshrl.u32 %v2288, 7
        %v2290 = vsub.s32 %v2287, %v2289
        %v2291 = vrot.slane %v2269, %v2290
        %v2293 = vunpack.c.l.s4 1966171168
        %v2294 = vunpack.c.0.s8 %v2293
        %v2295 = vlaneseq
        %v2296 = vshrl.u32 %v2295, 7
        %v2297 = vsub.s32 %v2294, %v2296
        %v2298 = vrot.slane %v2270, %v2297
        %v2299 = vcombine.low %v2277, %v2284
        %v2300 = vcombine.low %v2291, %v2298
        %v2302 = vunpack.c.l.s4 1966171168
        %v2303 = vunpack.c.0.s8 %v2302
        %v2304 = vlaneseq
        %v2305 = vshrl.u32 %v2304, 7
        %v2306 = vsub.s32 %v2303, %v2305
        %v2307 = vrot.slane %v2299, %v2306
        %v2309 = vunpack.c.l.s4 1966171168
        %v2310 = vunpack.c.0.s8 %v2309
        %v2311 = vlaneseq
        %v2312 = vshrl.u32 %v2311, 7
        %v2313 = vsub.s32 %v2310, %v2312
        %v2314 = vrot.slane %v2300, %v2313
        %v2315 = vcombine.low %v2307, %v2314
        %v2316 = vcombine.low %v1125, %v1129
        %v2317 = vcombine.low %v1133, %v1137
        %v2318 = vcombine.low %v1141, %v1145
        %v2319 = vcombine.low %v1149, %v1153
        %v2321 = vunpack.c.l.s4 1966171168
        %v2322 = vunpack.c.0.s8 %v2321
        %v2323 = vlaneseq
        %v2324 = vshrl.u32 %v2323, 7
        %v2325 = vsub.s32 %v2322, %v2324
        %v2326 = vrot.slane %v2316, %v2325
        %v2328 = vunpack.c.l.s4 1966171168
        %v2329 = vunpack.c.0.s8 %v2328
        %v2330 = vlaneseq
        %v2331 = vshrl.u32 %v2330, 7
        %v2332 = vsub.s32 %v2329, %v2331
        %v2333 = vrot.slane %v2317, %v2332
        %v2335 = vunpack.c.l.s4 1966171168
        %v2336 = vunpack.c.0.s8 %v2335
        %v2337 = vlaneseq
        %v2338 = vshrl.u32 %v2337, 7
        %v2339 = vsub.s32 %v2336, %v2338
        %v2340 = vrot.slane %v2318, %v2339
        %v2342 = vunpack.c.l.s4 1966171168
        %v2343 = vunpack.c.0.s8 %v2342
        %v2344 = vlaneseq
        %v2345 = vshrl.u32 %v2344, 7
        %v2346 = vsub.s32 %v2343, %v2345
        %v2347 = vrot.slane %v2319, %v2346
        %v2348 = vcombine.low %v2326, %v2333
        %v2349 = vcombine.low %v2340, %v2347
        %v2351 = vunpack.c.l.s4 1966171168
        %v2352 = vunpack.c.0.s8 %v2351
        %v2353 = vlaneseq
        %v2354 = vshrl.u32 %v2353, 7
        %v2355 = vsub.s32 %v2352, %v2354
        %v2356 = vrot.slane %v2348, %v2355
        %v2358 = vunpack.c.l.s4 1966171168
        %v2359 = vunpack.c.0.s8 %v2358
        %v2360 = vlaneseq
        %v2361 = vshrl.u32 %v2360, 7
        %v2362 = vsub.s32 %v2359, %v2361
        %v2363 = vrot.slane %v2349, %v2362
        %v2364 = vcombine.low %v2356, %v2363
        %v2365 = vcombine.low %v1157, %v1161
        %v2366 = vcombine.low %v1165, %v1169
        %v2367 = vcombine.low %v1173, %v1177
        %v2368 = vcombine.low %v1181, %v1185
        %v2370 = vunpack.c.l.s4 1966171168
        %v2371 = vunpack.c.0.s8 %v2370
        %v2372 = vlaneseq
        %v2373 = vshrl.u32 %v2372, 7
        %v2374 = vsub.s32 %v2371, %v2373
        %v2375 = vrot.slane %v2365, %v2374
        %v2377 = vunpack.c.l.s4 1966171168
        %v2378 = vunpack.c.0.s8 %v2377
        %v2379 = vlaneseq
        %v2380 = vshrl.u32 %v2379, 7
        %v2381 = vsub.s32 %v2378, %v2380
        %v2382 = vrot.slane %v2366, %v2381
        %v2384 = vunpack.c.l.s4 1966171168
        %v2385 = vunpack.c.0.s8 %v2384
        %v2386 = vlaneseq
        %v2387 = vshrl.u32 %v2386, 7
        %v2388 = vsub.s32 %v2385, %v2387
        %v2389 = vrot.slane %v2367, %v2388
        %v2391 = vunpack.c.l.s4 1966171168
        %v2392 = vunpack.c.0.s8 %v2391
        %v2393 = vlaneseq
        %v2394 = vshrl.u32 %v2393, 7
        %v2395 = vsub.s32 %v2392, %v2394
        %v2396 = vrot.slane %v2368, %v2395
        %v2397 = vcombine.low %v2375, %v2382
        %v2398 = vcombine.low %v2389, %v2396
        %v2400 = vunpack.c.l.s4 1966171168
        %v2401 = vunpack.c.0.s8 %v2400
        %v2402 = vlaneseq
        %v2403 = vshrl.u32 %v2402, 7
        %v2404 = vsub.s32 %v2401, %v2403
        %v2405 = vrot.slane %v2397, %v2404
        %v2407 = vunpack.c.l.s4 1966171168
        %v2408 = vunpack.c.0.s8 %v2407
        %v2409 = vlaneseq
        %v2410 = vshrl.u32 %v2409, 7
        %v2411 = vsub.s32 %v2408, %v2410
        %v2412 = vrot.slane %v2398, %v2411
        %v2413 = vcombine.low %v2405, %v2412
        %v2414 = vcombine.low %v1189, %v1193
        %v2415 = vcombine.low %v1197, %v1201
        %v2416 = vcombine.low %v1205, %v1209
        %v2417 = vcombine.low %v1213, %v1217
        %v2419 = vunpack.c.l.s4 1966171168
        %v2420 = vunpack.c.0.s8 %v2419
        %v2421 = vlaneseq
        %v2422 = vshrl.u32 %v2421, 7
        %v2423 = vsub.s32 %v2420, %v2422
        %v2424 = vrot.slane %v2414, %v2423
        %v2426 = vunpack.c.l.s4 1966171168
        %v2427 = vunpack.c.0.s8 %v2426
        %v2428 = vlaneseq
        %v2429 = vshrl.u32 %v2428, 7
        %v2430 = vsub.s32 %v2427, %v2429
        %v2431 = vrot.slane %v2415, %v2430
        %v2433 = vunpack.c.l.s4 1966171168
        %v2434 = vunpack.c.0.s8 %v2433
        %v2435 = vlaneseq
        %v2436 = vshrl.u32 %v2435, 7
        %v2437 = vsub.s32 %v2434, %v2436
        %v2438 = vrot.slane %v2416, %v2437
        %v2440 = vunpack.c.l.s4 1966171168
        %v2441 = vunpack.c.0.s8 %v2440
        %v2442 = vlaneseq
        %v2443 = vshrl.u32 %v2442, 7
        %v2444 = vsub.s32 %v2441, %v2443
        %v2445 = vrot.slane %v2417, %v2444
        %v2446 = vcombine.low %v2424, %v2431
        %v2447 = vcombine.low %v2438, %v2445
        %v2449 = vunpack.c.l.s4 1966171168
        %v2450 = vunpack.c.0.s8 %v2449
        %v2451 = vlaneseq
        %v2452 = vshrl.u32 %v2451, 7
        %v2453 = vsub.s32 %v2450, %v2452
        %v2454 = vrot.slane %v2446, %v2453
        %v2456 = vunpack.c.l.s4 1966171168
        %v2457 = vunpack.c.0.s8 %v2456
        %v2458 = vlaneseq
        %v2459 = vshrl.u32 %v2458, 7
        %v2460 = vsub.s32 %v2457, %v2459
        %v2461 = vrot.slane %v2447, %v2460
        %v2462 = vcombine.low %v2454, %v2461
        %v2463 = vcombine.low %v1221, %v1225
        %v2464 = vcombine.low %v1229, %v1233
        %v2465 = vcombine.low %v1237, %v1241
        %v2466 = vcombine.low %v1245, %v1249
        %v2468 = vunpack.c.l.s4 1966171168
        %v2469 = vunpack.c.0.s8 %v2468
        %v2470 = vlaneseq
        %v2471 = vshrl.u32 %v2470, 7
        %v2472 = vsub.s32 %v2469, %v2471
        %v2473 = vrot.slane %v2463, %v2472
        %v2475 = vunpack.c.l.s4 1966171168
        %v2476 = vunpack.c.0.s8 %v2475
        %v2477 = vlaneseq
        %v2478 = vshrl.u32 %v2477, 7
        %v2479 = vsub.s32 %v2476, %v2478
        %v2480 = vrot.slane %v2464, %v2479
        %v2482 = vunpack.c.l.s4 1966171168
        %v2483 = vunpack.c.0.s8 %v2482
        %v2484 = vlaneseq
        %v2485 = vshrl.u32 %v2484, 7
        %v2486 = vsub.s32 %v2483, %v2485
        %v2487 = vrot.slane %v2465, %v2486
        %v2489 = vunpack.c.l.s4 1966171168
        %v2490 = vunpack.c.0.s8 %v2489
        %v2491 = vlaneseq
        %v2492 = vshrl.u32 %v2491, 7
        %v2493 = vsub.s32 %v2490, %v2492
        %v2494 = vrot.slane %v2466, %v2493
        %v2495 = vcombine.low %v2473, %v2480
        %v2496 = vcombine.low %v2487, %v2494
        %v2498 = vunpack.c.l.s4 1966171168
        %v2499 = vunpack.c.0.s8 %v2498
        %v2500 = vlaneseq
        %v2501 = vshrl.u32 %v2500, 7
        %v2502 = vsub.s32 %v2499, %v2501
        %v2503 = vrot.slane %v2495, %v2502
        %v2505 = vunpack.c.l.s4 1966171168
        %v2506 = vunpack.c.0.s8 %v2505
        %v2507 = vlaneseq
        %v2508 = vshrl.u32 %v2507, 7
        %v2509 = vsub.s32 %v2506, %v2508
        %v2510 = vrot.slane %v2496, %v2509
        %v2511 = vcombine.low %v2503, %v2510
        %v2512 = vcombine.low %v1253, %v1257
        %v2513 = vcombine.low %v1261, %v1265
        %v2514 = vcombine.low %v1269, %v1273
        %v2515 = vcombine.low %v1277, %v1281
        %v2517 = vunpack.c.l.s4 1966171168
        %v2518 = vunpack.c.0.s8 %v2517
        %v2519 = vlaneseq
        %v2520 = vshrl.u32 %v2519, 7
        %v2521 = vsub.s32 %v2518, %v2520
        %v2522 = vrot.slane %v2512, %v2521
        %v2524 = vunpack.c.l.s4 1966171168
        %v2525 = vunpack.c.0.s8 %v2524
        %v2526 = vlaneseq
        %v2527 = vshrl.u32 %v2526, 7
        %v2528 = vsub.s32 %v2525, %v2527
        %v2529 = vrot.slane %v2513, %v2528
        %v2531 = vunpack.c.l.s4 1966171168
        %v2532 = vunpack.c.0.s8 %v2531
        %v2533 = vlaneseq
        %v2534 = vshrl.u32 %v2533, 7
        %v2535 = vsub.s32 %v2532, %v2534
        %v2536 = vrot.slane %v2514, %v2535
        %v2538 = vunpack.c.l.s4 1966171168
        %v2539 = vunpack.c.0.s8 %v2538
        %v2540 = vlaneseq
        %v2541 = vshrl.u32 %v2540, 7
        %v2542 = vsub.s32 %v2539, %v2541
        %v2543 = vrot.slane %v2515, %v2542
        %v2544 = vcombine.low %v2522, %v2529
        %v2545 = vcombine.low %v2536, %v2543
        %v2547 = vunpack.c.l.s4 1966171168
        %v2548 = vunpack.c.0.s8 %v2547
        %v2549 = vlaneseq
        %v2550 = vshrl.u32 %v2549, 7
        %v2551 = vsub.s32 %v2548, %v2550
        %v2552 = vrot.slane %v2544, %v2551
        %v2554 = vunpack.c.l.s4 1966171168
        %v2555 = vunpack.c.0.s8 %v2554
        %v2556 = vlaneseq
        %v2557 = vshrl.u32 %v2556, 7
        %v2558 = vsub.s32 %v2555, %v2557
        %v2559 = vrot.slane %v2545, %v2558
        %v2560 = vcombine.low %v2552, %v2559
        %v2561 = vcombine.low %v1285, %v1289
        %v2562 = vcombine.low %v1293, %v1297
        %v2563 = vcombine.low %v1301, %v1305
        %v2564 = vcombine.low %v1309, %v1313
        %v2566 = vunpack.c.l.s4 1966171168
        %v2567 = vunpack.c.0.s8 %v2566
        %v2568 = vlaneseq
        %v2569 = vshrl.u32 %v2568, 7
        %v2570 = vsub.s32 %v2567, %v2569
        %v2571 = vrot.slane %v2561, %v2570
        %v2573 = vunpack.c.l.s4 1966171168
        %v2574 = vunpack.c.0.s8 %v2573
        %v2575 = vlaneseq
        %v2576 = vshrl.u32 %v2575, 7
        %v2577 = vsub.s32 %v2574, %v2576
        %v2578 = vrot.slane %v2562, %v2577
        %v2580 = vunpack.c.l.s4 1966171168
        %v2581 = vunpack.c.0.s8 %v2580
        %v2582 = vlaneseq
        %v2583 = vshrl.u32 %v2582, 7
        %v2584 = vsub.s32 %v2581, %v2583
        %v2585 = vrot.slane %v2563, %v2584
        %v2587 = vunpack.c.l.s4 1966171168
        %v2588 = vunpack.c.0.s8 %v2587
        %v2589 = vlaneseq
        %v2590 = vshrl.u32 %v2589, 7
        %v2591 = vsub.s32 %v2588, %v2590
        %v2592 = vrot.slane %v2564, %v2591
        %v2593 = vcombine.low %v2571, %v2578
        %v2594 = vcombine.low %v2585, %v2592
        %v2596 = vunpack.c.l.s4 1966171168
        %v2597 = vunpack.c.0.s8 %v2596
        %v2598 = vlaneseq
        %v2599 = vshrl.u32 %v2598, 7
        %v2600 = vsub.s32 %v2597, %v2599
        %v2601 = vrot.slane %v2593, %v2600
        %v2603 = vunpack.c.l.s4 1966171168
        %v2604 = vunpack.c.0.s8 %v2603
        %v2605 = vlaneseq
        %v2606 = vshrl.u32 %v2605, 7
        %v2607 = vsub.s32 %v2604, %v2606
        %v2608 = vrot.slane %v2594, %v2607
        %v2609 = vcombine.low %v2601, %v2608
        %v2610 = vcombine.low %v1317, %v1321
        %v2611 = vcombine.low %v1325, %v1329
        %v2612 = vcombine.low %v1333, %v1337
        %v2613 = vcombine.low %v1341, %v1345
        %v2615 = vunpack.c.l.s4 1966171168
        %v2616 = vunpack.c.0.s8 %v2615
        %v2617 = vlaneseq
        %v2618 = vshrl.u32 %v2617, 7
        %v2619 = vsub.s32 %v2616, %v2618
        %v2620 = vrot.slane %v2610, %v2619
        %v2622 = vunpack.c.l.s4 1966171168
        %v2623 = vunpack.c.0.s8 %v2622
        %v2624 = vlaneseq
        %v2625 = vshrl.u32 %v2624, 7
        %v2626 = vsub.s32 %v2623, %v2625
        %v2627 = vrot.slane %v2611, %v2626
        %v2629 = vunpack.c.l.s4 1966171168
        %v2630 = vunpack.c.0.s8 %v2629
        %v2631 = vlaneseq
        %v2632 = vshrl.u32 %v2631, 7
        %v2633 = vsub.s32 %v2630, %v2632
        %v2634 = vrot.slane %v2612, %v2633
        %v2636 = vunpack.c.l.s4 1966171168
        %v2637 = vunpack.c.0.s8 %v2636
        %v2638 = vlaneseq
        %v2639 = vshrl.u32 %v2638, 7
        %v2640 = vsub.s32 %v2637, %v2639
        %v2641 = vrot.slane %v2613, %v2640
        %v2642 = vcombine.low %v2620, %v2627
        %v2643 = vcombine.low %v2634, %v2641
        %v2645 = vunpack.c.l.s4 1966171168
        %v2646 = vunpack.c.0.s8 %v2645
        %v2647 = vlaneseq
        %v2648 = vshrl.u32 %v2647, 7
        %v2649 = vsub.s32 %v2646, %v2648
        %v2650 = vrot.slane %v2642, %v2649
        %v2652 = vunpack.c.l.s4 1966171168
        %v2653 = vunpack.c.0.s8 %v2652
        %v2654 = vlaneseq
        %v2655 = vshrl.u32 %v2654, 7
        %v2656 = vsub.s32 %v2653, %v2655
        %v2657 = vrot.slane %v2643, %v2656
        %v2658 = vcombine.low %v2650, %v2657
        %v2659 = vcombine.low %v1349, %v1353
        %v2660 = vcombine.low %v1357, %v1361
        %v2661 = vcombine.low %v1365, %v1369
        %v2662 = vcombine.low %v1373, %v1377
        %v2664 = vunpack.c.l.s4 1966171168
        %v2665 = vunpack.c.0.s8 %v2664
        %v2666 = vlaneseq
        %v2667 = vshrl.u32 %v2666, 7
        %v2668 = vsub.s32 %v2665, %v2667
        %v2669 = vrot.slane %v2659, %v2668
        %v2671 = vunpack.c.l.s4 1966171168
        %v2672 = vunpack.c.0.s8 %v2671
        %v2673 = vlaneseq
        %v2674 = vshrl.u32 %v2673, 7
        %v2675 = vsub.s32 %v2672, %v2674
        %v2676 = vrot.slane %v2660, %v2675
        %v2678 = vunpack.c.l.s4 1966171168
        %v2679 = vunpack.c.0.s8 %v2678
        %v2680 = vlaneseq
        %v2681 = vshrl.u32 %v2680, 7
        %v2682 = vsub.s32 %v2679, %v2681
        %v2683 = vrot.slane %v2661, %v2682
        %v2685 = vunpack.c.l.s4 1966171168
        %v2686 = vunpack.c.0.s8 %v2685
        %v2687 = vlaneseq
        %v2688 = vshrl.u32 %v2687, 7
        %v2689 = vsub.s32 %v2686, %v2688
        %v2690 = vrot.slane %v2662, %v2689
        %v2691 = vcombine.low %v2669, %v2676
        %v2692 = vcombine.low %v2683, %v2690
        %v2694 = vunpack.c.l.s4 1966171168
        %v2695 = vunpack.c.0.s8 %v2694
        %v2696 = vlaneseq
        %v2697 = vshrl.u32 %v2696, 7
        %v2698 = vsub.s32 %v2695, %v2697
        %v2699 = vrot.slane %v2691, %v2698
        %v2701 = vunpack.c.l.s4 1966171168
        %v2702 = vunpack.c.0.s8 %v2701
        %v2703 = vlaneseq
        %v2704 = vshrl.u32 %v2703, 7
        %v2705 = vsub.s32 %v2702, %v2704
        %v2706 = vrot.slane %v2692, %v2705
        %v2707 = vcombine.low %v2699, %v2706
        %v2708 = vcombine.low %v1381, %v1385
        %v2709 = vcombine.low %v1389, %v1393
        %v2710 = vcombine.low %v1397, %v1401
        %v2711 = vcombine.low %v1405, %v1409
        %v2713 = vunpack.c.l.s4 1966171168
        %v2714 = vunpack.c.0.s8 %v2713
        %v2715 = vlaneseq
        %v2716 = vshrl.u32 %v2715, 7
        %v2717 = vsub.s32 %v2714, %v2716
        %v2718 = vrot.slane %v2708, %v2717
        %v2720 = vunpack.c.l.s4 1966171168
        %v2721 = vunpack.c.0.s8 %v2720
        %v2722 = vlaneseq
        %v2723 = vshrl.u32 %v2722, 7
        %v2724 = vsub.s32 %v2721, %v2723
        %v2725 = vrot.slane %v2709, %v2724
        %v2727 = vunpack.c.l.s4 1966171168
        %v2728 = vunpack.c.0.s8 %v2727
        %v2729 = vlaneseq
        %v2730 = vshrl.u32 %v2729, 7
        %v2731 = vsub.s32 %v2728, %v2730
        %v2732 = vrot.slane %v2710, %v2731
        %v2734 = vunpack.c.l.s4 1966171168
        %v2735 = vunpack.c.0.s8 %v2734
        %v2736 = vlaneseq
        %v2737 = vshrl.u32 %v2736, 7
        %v2738 = vsub.s32 %v2735, %v2737
        %v2739 = vrot.slane %v2711, %v2738
        %v2740 = vcombine.low %v2718, %v2725
        %v2741 = vcombine.low %v2732, %v2739
        %v2743 = vunpack.c.l.s4 1966171168
        %v2744 = vunpack.c.0.s8 %v2743
        %v2745 = vlaneseq
        %v2746 = vshrl.u32 %v2745, 7
        %v2747 = vsub.s32 %v2744, %v2746
        %v2748 = vrot.slane %v2740, %v2747
        %v2750 = vunpack.c.l.s4 1966171168
        %v2751 = vunpack.c.0.s8 %v2750
        %v2752 = vlaneseq
        %v2753 = vshrl.u32 %v2752, 7
        %v2754 = vsub.s32 %v2751, %v2753
        %v2755 = vrot.slane %v2741, %v2754
        %v2756 = vcombine.low %v2748, %v2755
        %v2757 = vcombine.low %v1413, %v1417
        %v2758 = vcombine.low %v1421, %v1425
        %v2759 = vcombine.low %v1429, %v1433
        %v2760 = vcombine.low %v1437, %v1441
        %v2762 = vunpack.c.l.s4 1966171168
        %v2763 = vunpack.c.0.s8 %v2762
        %v2764 = vlaneseq
        %v2765 = vshrl.u32 %v2764, 7
        %v2766 = vsub.s32 %v2763, %v2765
        %v2767 = vrot.slane %v2757, %v2766
        %v2769 = vunpack.c.l.s4 1966171168
        %v2770 = vunpack.c.0.s8 %v2769
        %v2771 = vlaneseq
        %v2772 = vshrl.u32 %v2771, 7
        %v2773 = vsub.s32 %v2770, %v2772
        %v2774 = vrot.slane %v2758, %v2773
        %v2776 = vunpack.c.l.s4 1966171168
        %v2777 = vunpack.c.0.s8 %v2776
        %v2778 = vlaneseq
        %v2779 = vshrl.u32 %v2778, 7
        %v2780 = vsub.s32 %v2777, %v2779
        %v2781 = vrot.slane %v2759, %v2780
        %v2783 = vunpack.c.l.s4 1966171168
        %v2784 = vunpack.c.0.s8 %v2783
        %v2785 = vlaneseq
        %v2786 = vshrl.u32 %v2785, 7
        %v2787 = vsub.s32 %v2784, %v2786
        %v2788 = vrot.slane %v2760, %v2787
        %v2789 = vcombine.low %v2767, %v2774
        %v2790 = vcombine.low %v2781, %v2788
        %v2792 = vunpack.c.l.s4 1966171168
        %v2793 = vunpack.c.0.s8 %v2792
        %v2794 = vlaneseq
        %v2795 = vshrl.u32 %v2794, 7
        %v2796 = vsub.s32 %v2793, %v2795
        %v2797 = vrot.slane %v2789, %v2796
        %v2799 = vunpack.c.l.s4 1966171168
        %v2800 = vunpack.c.0.s8 %v2799
        %v2801 = vlaneseq
        %v2802 = vshrl.u32 %v2801, 7
        %v2803 = vsub.s32 %v2800, %v2802
        %v2804 = vrot.slane %v2790, %v2803
        %v2805 = vcombine.low %v2797, %v2804
        %v2806 = vcombine.low %v1445, %v1449
        %v2807 = vcombine.low %v1453, %v1457
        %v2808 = vcombine.low %v1461, %v1465
        %v2809 = vcombine.low %v1469, %v1473
        %v2811 = vunpack.c.l.s4 1966171168
        %v2812 = vunpack.c.0.s8 %v2811
        %v2813 = vlaneseq
        %v2814 = vshrl.u32 %v2813, 7
        %v2815 = vsub.s32 %v2812, %v2814
        %v2816 = vrot.slane %v2806, %v2815
        %v2818 = vunpack.c.l.s4 1966171168
        %v2819 = vunpack.c.0.s8 %v2818
        %v2820 = vlaneseq
        %v2821 = vshrl.u32 %v2820, 7
        %v2822 = vsub.s32 %v2819, %v2821
        %v2823 = vrot.slane %v2807, %v2822
        %v2825 = vunpack.c.l.s4 1966171168
        %v2826 = vunpack.c.0.s8 %v2825
        %v2827 = vlaneseq
        %v2828 = vshrl.u32 %v2827, 7
        %v2829 = vsub.s32 %v2826, %v2828
        %v2830 = vrot.slane %v2808, %v2829
        %v2832 = vunpack.c.l.s4 1966171168
        %v2833 = vunpack.c.0.s8 %v2832
        %v2834 = vlaneseq
        %v2835 = vshrl.u32 %v2834, 7
        %v2836 = vsub.s32 %v2833, %v2835
        %v2837 = vrot.slane %v2809, %v2836
        %v2838 = vcombine.low %v2816, %v2823
        %v2839 = vcombine.low %v2830, %v2837
        %v2841 = vunpack.c.l.s4 1966171168
        %v2842 = vunpack.c.0.s8 %v2841
        %v2843 = vlaneseq
        %v2844 = vshrl.u32 %v2843, 7
        %v2845 = vsub.s32 %v2842, %v2844
        %v2846 = vrot.slane %v2838, %v2845
        %v2848 = vunpack.c.l.s4 1966171168
        %v2849 = vunpack.c.0.s8 %v2848
        %v2850 = vlaneseq
        %v2851 = vshrl.u32 %v2850, 7
        %v2852 = vsub.s32 %v2849, %v2851
        %v2853 = vrot.slane %v2839, %v2852
        %v2854 = vcombine.low %v2846, %v2853
        %v2855 = vcombine.low %v1477, %v1481
        %v2856 = vcombine.low %v1485, %v1489
        %v2857 = vcombine.low %v1493, %v1497
        %v2858 = vcombine.low %v1501, %v1505
        %v2860 = vunpack.c.l.s4 1966171168
        %v2861 = vunpack.c.0.s8 %v2860
        %v2862 = vlaneseq
        %v2863 = vshrl.u32 %v2862, 7
        %v2864 = vsub.s32 %v2861, %v2863
        %v2865 = vrot.slane %v2855, %v2864
        %v2867 = vunpack.c.l.s4 1966171168
        %v2868 = vunpack.c.0.s8 %v2867
        %v2869 = vlaneseq
        %v2870 = vshrl.u32 %v2869, 7
        %v2871 = vsub.s32 %v2868, %v2870
        %v2872 = vrot.slane %v2856, %v2871
        %v2874 = vunpack.c.l.s4 1966171168
        %v2875 = vunpack.c.0.s8 %v2874
        %v2876 = vlaneseq
        %v2877 = vshrl.u32 %v2876, 7
        %v2878 = vsub.s32 %v2875, %v2877
        %v2879 = vrot.slane %v2857, %v2878
        %v2881 = vunpack.c.l.s4 1966171168
        %v2882 = vunpack.c.0.s8 %v2881
        %v2883 = vlaneseq
        %v2884 = vshrl.u32 %v2883, 7
        %v2885 = vsub.s32 %v2882, %v2884
        %v2886 = vrot.slane %v2858, %v2885
        %v2887 = vcombine.low %v2865, %v2872
        %v2888 = vcombine.low %v2879, %v2886
        %v2890 = vunpack.c.l.s4 1966171168
        %v2891 = vunpack.c.0.s8 %v2890
        %v2892 = vlaneseq
        %v2893 = vshrl.u32 %v2892, 7
        %v2894 = vsub.s32 %v2891, %v2893
        %v2895 = vrot.slane %v2887, %v2894
        %v2897 = vunpack.c.l.s4 1966171168
        %v2898 = vunpack.c.0.s8 %v2897
        %v2899 = vlaneseq
        %v2900 = vshrl.u32 %v2899, 7
        %v2901 = vsub.s32 %v2898, %v2900
        %v2902 = vrot.slane %v2888, %v2901
        %v2903 = vcombine.low %v2895, %v2902
        %v2904 = vcombine.low %v1509, %v1513
        %v2905 = vcombine.low %v1517, %v1521
        %v2906 = vcombine.low %v1525, %v1529
        %v2907 = vcombine.low %v1533, %v1537
        %v2909 = vunpack.c.l.s4 1966171168
        %v2910 = vunpack.c.0.s8 %v2909
        %v2911 = vlaneseq
        %v2912 = vshrl.u32 %v2911, 7
        %v2913 = vsub.s32 %v2910, %v2912
        %v2914 = vrot.slane %v2904, %v2913
        %v2916 = vunpack.c.l.s4 1966171168
        %v2917 = vunpack.c.0.s8 %v2916
        %v2918 = vlaneseq
        %v2919 = vshrl.u32 %v2918, 7
        %v2920 = vsub.s32 %v2917, %v2919
        %v2921 = vrot.slane %v2905, %v2920
        %v2923 = vunpack.c.l.s4 1966171168
        %v2924 = vunpack.c.0.s8 %v2923
        %v2925 = vlaneseq
        %v2926 = vshrl.u32 %v2925, 7
        %v2927 = vsub.s32 %v2924, %v2926
        %v2928 = vrot.slane %v2906, %v2927
        %v2930 = vunpack.c.l.s4 1966171168
        %v2931 = vunpack.c.0.s8 %v2930
        %v2932 = vlaneseq
        %v2933 = vshrl.u32 %v2932, 7
        %v2934 = vsub.s32 %v2931, %v2933
        %v2935 = vrot.slane %v2907, %v2934
        %v2936 = vcombine.low %v2914, %v2921
        %v2937 = vcombine.low %v2928, %v2935
        %v2939 = vunpack.c.l.s4 1966171168
        %v2940 = vunpack.c.0.s8 %v2939
        %v2941 = vlaneseq
        %v2942 = vshrl.u32 %v2941, 7
        %v2943 = vsub.s32 %v2940, %v2942
        %v2944 = vrot.slane %v2936, %v2943
        %v2946 = vunpack.c.l.s4 1966171168
        %v2947 = vunpack.c.0.s8 %v2946
        %v2948 = vlaneseq
        %v2949 = vshrl.u32 %v2948, 7
        %v2950 = vsub.s32 %v2947, %v2949
        %v2951 = vrot.slane %v2937, %v2950
        %v2952 = vcombine.low %v2944, %v2951
        %v2953 = vcombine.low %v1541, %v1545
        %v2954 = vcombine.low %v1549, %v1553
        %v2955 = vcombine.low %v1557, %v1561
        %v2956 = vcombine.low %v1565, %v1569
        %v2958 = vunpack.c.l.s4 1966171168
        %v2959 = vunpack.c.0.s8 %v2958
        %v2960 = vlaneseq
        %v2961 = vshrl.u32 %v2960, 7
        %v2962 = vsub.s32 %v2959, %v2961
        %v2963 = vrot.slane %v2953, %v2962
        %v2965 = vunpack.c.l.s4 1966171168
        %v2966 = vunpack.c.0.s8 %v2965
        %v2967 = vlaneseq
        %v2968 = vshrl.u32 %v2967, 7
        %v2969 = vsub.s32 %v2966, %v2968
        %v2970 = vrot.slane %v2954, %v2969
        %v2972 = vunpack.c.l.s4 1966171168
        %v2973 = vunpack.c.0.s8 %v2972
        %v2974 = vlaneseq
        %v2975 = vshrl.u32 %v2974, 7
        %v2976 = vsub.s32 %v2973, %v2975
        %v2977 = vrot.slane %v2955, %v2976
        %v2979 = vunpack.c.l.s4 1966171168
        %v2980 = vunpack.c.0.s8 %v2979
        %v2981 = vlaneseq
        %v2982 = vshrl.u32 %v2981, 7
        %v2983 = vsub.s32 %v2980, %v2982
        %v2984 = vrot.slane %v2956, %v2983
        %v2985 = vcombine.low %v2963, %v2970
        %v2986 = vcombine.low %v2977, %v2984
        %v2988 = vunpack.c.l.s4 1966171168
        %v2989 = vunpack.c.0.s8 %v2988
        %v2990 = vlaneseq
        %v2991 = vshrl.u32 %v2990, 7
        %v2992 = vsub.s32 %v2989, %v2991
        %v2993 = vrot.slane %v2985, %v2992
        %v2995 = vunpack.c.l.s4 1966171168
        %v2996 = vunpack.c.0.s8 %v2995
        %v2997 = vlaneseq
        %v2998 = vshrl.u32 %v2997, 7
        %v2999 = vsub.s32 %v2996, %v2998
        %v3000 = vrot.slane %v2986, %v2999
        %v3001 = vcombine.low %v2993, %v3000
        %v3002 = vcombine.low %v1573, %v1577
        %v3003 = vcombine.low %v1581, %v1585
        %v3004 = vcombine.low %v1589, %v1593
        %v3005 = vcombine.low %v1597, %v1601
        %v3007 = vunpack.c.l.s4 1966171168
        %v3008 = vunpack.c.0.s8 %v3007
        %v3009 = vlaneseq
        %v3010 = vshrl.u32 %v3009, 7
        %v3011 = vsub.s32 %v3008, %v3010
        %v3012 = vrot.slane %v3002, %v3011
        %v3014 = vunpack.c.l.s4 1966171168
        %v3015 = vunpack.c.0.s8 %v3014
        %v3016 = vlaneseq
        %v3017 = vshrl.u32 %v3016, 7
        %v3018 = vsub.s32 %v3015, %v3017
        %v3019 = vrot.slane %v3003, %v3018
        %v3021 = vunpack.c.l.s4 1966171168
        %v3022 = vunpack.c.0.s8 %v3021
        %v3023 = vlaneseq
        %v3024 = vshrl.u32 %v3023, 7
        %v3025 = vsub.s32 %v3022, %v3024
        %v3026 = vrot.slane %v3004, %v3025
        %v3028 = vunpack.c.l.s4 1966171168
        %v3029 = vunpack.c.0.s8 %v3028
        %v3030 = vlaneseq
        %v3031 = vshrl.u32 %v3030, 7
        %v3032 = vsub.s32 %v3029, %v3031
        %v3033 = vrot.slane %v3005, %v3032
        %v3034 = vcombine.low %v3012, %v3019
        %v3035 = vcombine.low %v3026, %v3033
        %v3037 = vunpack.c.l.s4 1966171168
        %v3038 = vunpack.c.0.s8 %v3037
        %v3039 = vlaneseq
        %v3040 = vshrl.u32 %v3039, 7
        %v3041 = vsub.s32 %v3038, %v3040
        %v3042 = vrot.slane %v3034, %v3041
        %v3044 = vunpack.c.l.s4 1966171168
        %v3045 = vunpack.c.0.s8 %v3044
        %v3046 = vlaneseq
        %v3047 = vshrl.u32 %v3046, 7
        %v3048 = vsub.s32 %v3045, %v3047
        %v3049 = vrot.slane %v3035, %v3048
        %v3050 = vcombine.low %v3042, %v3049
        %v3051 = vcombine.low %v1605, %v1609
        %v3052 = vcombine.low %v1613, %v1617
        %v3053 = vcombine.low %v1621, %v1625
        %v3054 = vcombine.low %v1629, %v1633
        %v3056 = vunpack.c.l.s4 1966171168
        %v3057 = vunpack.c.0.s8 %v3056
        %v3058 = vlaneseq
        %v3059 = vshrl.u32 %v3058, 7
        %v3060 = vsub.s32 %v3057, %v3059
        %v3061 = vrot.slane %v3051, %v3060
        %v3063 = vunpack.c.l.s4 1966171168
        %v3064 = vunpack.c.0.s8 %v3063
        %v3065 = vlaneseq
        %v3066 = vshrl.u32 %v3065, 7
        %v3067 = vsub.s32 %v3064, %v3066
        %v3068 = vrot.slane %v3052, %v3067
        %v3070 = vunpack.c.l.s4 1966171168
        %v3071 = vunpack.c.0.s8 %v3070
        %v3072 = vlaneseq
        %v3073 = vshrl.u32 %v3072, 7
        %v3074 = vsub.s32 %v3071, %v3073
        %v3075 = vrot.slane %v3053, %v3074
        %v3077 = vunpack.c.l.s4 1966171168
        %v3078 = vunpack.c.0.s8 %v3077
        %v3079 = vlaneseq
        %v3080 = vshrl.u32 %v3079, 7
        %v3081 = vsub.s32 %v3078, %v3080
        %v3082 = vrot.slane %v3054, %v3081
        %v3083 = vcombine.low %v3061, %v3068
        %v3084 = vcombine.low %v3075, %v3082
        %v3086 = vunpack.c.l.s4 1966171168
        %v3087 = vunpack.c.0.s8 %v3086
        %v3088 = vlaneseq
        %v3089 = vshrl.u32 %v3088, 7
        %v3090 = vsub.s32 %v3087, %v3089
        %v3091 = vrot.slane %v3083, %v3090
        %v3093 = vunpack.c.l.s4 1966171168
        %v3094 = vunpack.c.0.s8 %v3093
        %v3095 = vlaneseq
        %v3096 = vshrl.u32 %v3095, 7
        %v3097 = vsub.s32 %v3094, %v3096
        %v3098 = vrot.slane %v3084, %v3097
        %v3099 = vcombine.low %v3091, %v3098
        %v3100 = vcombine.low %v1637, %v1641
        %v3101 = vcombine.low %v1645, %v1649
        %v3102 = vcombine.low %v1653, %v1657
        %v3103 = vcombine.low %v1661, %v1665
        %v3105 = vunpack.c.l.s4 1966171168
        %v3106 = vunpack.c.0.s8 %v3105
        %v3107 = vlaneseq
        %v3108 = vshrl.u32 %v3107, 7
        %v3109 = vsub.s32 %v3106, %v3108
        %v3110 = vrot.slane %v3100, %v3109
        %v3112 = vunpack.c.l.s4 1966171168
        %v3113 = vunpack.c.0.s8 %v3112
        %v3114 = vlaneseq
        %v3115 = vshrl.u32 %v3114, 7
        %v3116 = vsub.s32 %v3113, %v3115
        %v3117 = vrot.slane %v3101, %v3116
        %v3119 = vunpack.c.l.s4 1966171168
        %v3120 = vunpack.c.0.s8 %v3119
        %v3121 = vlaneseq
        %v3122 = vshrl.u32 %v3121, 7
        %v3123 = vsub.s32 %v3120, %v3122
        %v3124 = vrot.slane %v3102, %v3123
        %v3126 = vunpack.c.l.s4 1966171168
        %v3127 = vunpack.c.0.s8 %v3126
        %v3128 = vlaneseq
        %v3129 = vshrl.u32 %v3128, 7
        %v3130 = vsub.s32 %v3127, %v3129
        %v3131 = vrot.slane %v3103, %v3130
        %v3132 = vcombine.low %v3110, %v3117
        %v3133 = vcombine.low %v3124, %v3131
        %v3135 = vunpack.c.l.s4 1966171168
        %v3136 = vunpack.c.0.s8 %v3135
        %v3137 = vlaneseq
        %v3138 = vshrl.u32 %v3137, 7
        %v3139 = vsub.s32 %v3136, %v3138
        %v3140 = vrot.slane %v3132, %v3139
        %v3142 = vunpack.c.l.s4 1966171168
        %v3143 = vunpack.c.0.s8 %v3142
        %v3144 = vlaneseq
        %v3145 = vshrl.u32 %v3144, 7
        %v3146 = vsub.s32 %v3143, %v3145
        %v3147 = vrot.slane %v3133, %v3146
        %v3148 = vcombine.low %v3140, %v3147
        %v3149 = vcombine.low %v1669, %v1673
        %v3150 = vcombine.low %v1677, %v1681
        %v3151 = vcombine.low %v1685, %v1689
        %v3152 = vcombine.low %v1693, %v1697
        %v3154 = vunpack.c.l.s4 1966171168
        %v3155 = vunpack.c.0.s8 %v3154
        %v3156 = vlaneseq
        %v3157 = vshrl.u32 %v3156, 7
        %v3158 = vsub.s32 %v3155, %v3157
        %v3159 = vrot.slane %v3149, %v3158
        %v3161 = vunpack.c.l.s4 1966171168
        %v3162 = vunpack.c.0.s8 %v3161
        %v3163 = vlaneseq
        %v3164 = vshrl.u32 %v3163, 7
        %v3165 = vsub.s32 %v3162, %v3164
        %v3166 = vrot.slane %v3150, %v3165
        %v3168 = vunpack.c.l.s4 1966171168
        %v3169 = vunpack.c.0.s8 %v3168
        %v3170 = vlaneseq
        %v3171 = vshrl.u32 %v3170, 7
        %v3172 = vsub.s32 %v3169, %v3171
        %v3173 = vrot.slane %v3151, %v3172
        %v3175 = vunpack.c.l.s4 1966171168
        %v3176 = vunpack.c.0.s8 %v3175
        %v3177 = vlaneseq
        %v3178 = vshrl.u32 %v3177, 7
        %v3179 = vsub.s32 %v3176, %v3178
        %v3180 = vrot.slane %v3152, %v3179
        %v3181 = vcombine.low %v3159, %v3166
        %v3182 = vcombine.low %v3173, %v3180
        %v3184 = vunpack.c.l.s4 1966171168
        %v3185 = vunpack.c.0.s8 %v3184
        %v3186 = vlaneseq
        %v3187 = vshrl.u32 %v3186, 7
        %v3188 = vsub.s32 %v3185, %v3187
        %v3189 = vrot.slane %v3181, %v3188
        %v3191 = vunpack.c.l.s4 1966171168
        %v3192 = vunpack.c.0.s8 %v3191
        %v3193 = vlaneseq
        %v3194 = vshrl.u32 %v3193, 7
        %v3195 = vsub.s32 %v3192, %v3194
        %v3196 = vrot.slane %v3182, %v3195
        %v3197 = vcombine.low %v3189, %v3196
        %v3198 = vcombine.low %v1701, %v1705
        %v3199 = vcombine.low %v1709, %v1713
        %v3200 = vcombine.low %v1717, %v1721
        %v3201 = vcombine.low %v1725, %v1729
        %v3203 = vunpack.c.l.s4 1966171168
        %v3204 = vunpack.c.0.s8 %v3203
        %v3205 = vlaneseq
        %v3206 = vshrl.u32 %v3205, 7
        %v3207 = vsub.s32 %v3204, %v3206
        %v3208 = vrot.slane %v3198, %v3207
        %v3210 = vunpack.c.l.s4 1966171168
        %v3211 = vunpack.c.0.s8 %v3210
        %v3212 = vlaneseq
        %v3213 = vshrl.u32 %v3212, 7
        %v3214 = vsub.s32 %v3211, %v3213
        %v3215 = vrot.slane %v3199, %v3214
        %v3217 = vunpack.c.l.s4 1966171168
        %v3218 = vunpack.c.0.s8 %v3217
        %v3219 = vlaneseq
        %v3220 = vshrl.u32 %v3219, 7
        %v3221 = vsub.s32 %v3218, %v3220
        %v3222 = vrot.slane %v3200, %v3221
        %v3224 = vunpack.c.l.s4 1966171168
        %v3225 = vunpack.c.0.s8 %v3224
        %v3226 = vlaneseq
        %v3227 = vshrl.u32 %v3226, 7
        %v3228 = vsub.s32 %v3225, %v3227
        %v3229 = vrot.slane %v3201, %v3228
        %v3230 = vcombine.low %v3208, %v3215
        %v3231 = vcombine.low %v3222, %v3229
        %v3233 = vunpack.c.l.s4 1966171168
        %v3234 = vunpack.c.0.s8 %v3233
        %v3235 = vlaneseq
        %v3236 = vshrl.u32 %v3235, 7
        %v3237 = vsub.s32 %v3234, %v3236
        %v3238 = vrot.slane %v3230, %v3237
        %v3240 = vunpack.c.l.s4 1966171168
        %v3241 = vunpack.c.0.s8 %v3240
        %v3242 = vlaneseq
        %v3243 = vshrl.u32 %v3242, 7
        %v3244 = vsub.s32 %v3241, %v3243
        %v3245 = vrot.slane %v3231, %v3244
        %v3246 = vcombine.low %v3238, %v3245
        %v3247 = vcombine.low %v1733, %v1737
        %v3248 = vcombine.low %v1741, %v1745
        %v3249 = vcombine.low %v1749, %v1753
        %v3250 = vcombine.low %v1757, %v1761
        %v3252 = vunpack.c.l.s4 1966171168
        %v3253 = vunpack.c.0.s8 %v3252
        %v3254 = vlaneseq
        %v3255 = vshrl.u32 %v3254, 7
        %v3256 = vsub.s32 %v3253, %v3255
        %v3257 = vrot.slane %v3247, %v3256
        %v3259 = vunpack.c.l.s4 1966171168
        %v3260 = vunpack.c.0.s8 %v3259
        %v3261 = vlaneseq
        %v3262 = vshrl.u32 %v3261, 7
        %v3263 = vsub.s32 %v3260, %v3262
        %v3264 = vrot.slane %v3248, %v3263
        %v3266 = vunpack.c.l.s4 1966171168
        %v3267 = vunpack.c.0.s8 %v3266
        %v3268 = vlaneseq
        %v3269 = vshrl.u32 %v3268, 7
        %v3270 = vsub.s32 %v3267, %v3269
        %v3271 = vrot.slane %v3249, %v3270
        %v3273 = vunpack.c.l.s4 1966171168
        %v3274 = vunpack.c.0.s8 %v3273
        %v3275 = vlaneseq
        %v3276 = vshrl.u32 %v3275, 7
        %v3277 = vsub.s32 %v3274, %v3276
        %v3278 = vrot.slane %v3250, %v3277
        %v3279 = vcombine.low %v3257, %v3264
        %v3280 = vcombine.low %v3271, %v3278
        %v3282 = vunpack.c.l.s4 1966171168
        %v3283 = vunpack.c.0.s8 %v3282
        %v3284 = vlaneseq
        %v3285 = vshrl.u32 %v3284, 7
        %v3286 = vsub.s32 %v3283, %v3285
        %v3287 = vrot.slane %v3279, %v3286
        %v3289 = vunpack.c.l.s4 1966171168
        %v3290 = vunpack.c.0.s8 %v3289
        %v3291 = vlaneseq
        %v3292 = vshrl.u32 %v3291, 7
        %v3293 = vsub.s32 %v3290, %v3292
        %v3294 = vrot.slane %v3280, %v3293
        %v3295 = vcombine.low %v3287, %v3294
        %v3296 = vcombine.low %v1765, %v1769
        %v3297 = vcombine.low %v1773, %v1777
        %v3298 = vcombine.low %v1781, %v1785
        %v3299 = vcombine.low %v1789, %v1793
        %v3301 = vunpack.c.l.s4 1966171168
        %v3302 = vunpack.c.0.s8 %v3301
        %v3303 = vlaneseq
        %v3304 = vshrl.u32 %v3303, 7
        %v3305 = vsub.s32 %v3302, %v3304
        %v3306 = vrot.slane %v3296, %v3305
        %v3308 = vunpack.c.l.s4 1966171168
        %v3309 = vunpack.c.0.s8 %v3308
        %v3310 = vlaneseq
        %v3311 = vshrl.u32 %v3310, 7
        %v3312 = vsub.s32 %v3309, %v3311
        %v3313 = vrot.slane %v3297, %v3312
        %v3315 = vunpack.c.l.s4 1966171168
        %v3316 = vunpack.c.0.s8 %v3315
        %v3317 = vlaneseq
        %v3318 = vshrl.u32 %v3317, 7
        %v3319 = vsub.s32 %v3316, %v3318
        %v3320 = vrot.slane %v3298, %v3319
        %v3322 = vunpack.c.l.s4 1966171168
        %v3323 = vunpack.c.0.s8 %v3322
        %v3324 = vlaneseq
        %v3325 = vshrl.u32 %v3324, 7
        %v3326 = vsub.s32 %v3323, %v3325
        %v3327 = vrot.slane %v3299, %v3326
        %v3328 = vcombine.low %v3306, %v3313
        %v3329 = vcombine.low %v3320, %v3327
        %v3331 = vunpack.c.l.s4 1966171168
        %v3332 = vunpack.c.0.s8 %v3331
        %v3333 = vlaneseq
        %v3334 = vshrl.u32 %v3333, 7
        %v3335 = vsub.s32 %v3332, %v3334
        %v3336 = vrot.slane %v3328, %v3335
        %v3338 = vunpack.c.l.s4 1966171168
        %v3339 = vunpack.c.0.s8 %v3338
        %v3340 = vlaneseq
        %v3341 = vshrl.u32 %v3340, 7
        %v3342 = vsub.s32 %v3339, %v3341
        %v3343 = vrot.slane %v3329, %v3342
        %v3344 = vcombine.low %v3336, %v3343
        %v3345 = vcombine.low %v1797, %v1801
        %v3346 = vcombine.low %v1805, %v1809
        %v3347 = vcombine.low %v1813, %v1817
        %v3348 = vcombine.low %v1821, %v1825
        %v3350 = vunpack.c.l.s4 1966171168
        %v3351 = vunpack.c.0.s8 %v3350
        %v3352 = vlaneseq
        %v3353 = vshrl.u32 %v3352, 7
        %v3354 = vsub.s32 %v3351, %v3353
        %v3355 = vrot.slane %v3345, %v3354
        %v3357 = vunpack.c.l.s4 1966171168
        %v3358 = vunpack.c.0.s8 %v3357
        %v3359 = vlaneseq
        %v3360 = vshrl.u32 %v3359, 7
        %v3361 = vsub.s32 %v3358, %v3360
        %v3362 = vrot.slane %v3346, %v3361
        %v3364 = vunpack.c.l.s4 1966171168
        %v3365 = vunpack.c.0.s8 %v3364
        %v3366 = vlaneseq
        %v3367 = vshrl.u32 %v3366, 7
        %v3368 = vsub.s32 %v3365, %v3367
        %v3369 = vrot.slane %v3347, %v3368
        %v3371 = vunpack.c.l.s4 1966171168
        %v3372 = vunpack.c.0.s8 %v3371
        %v3373 = vlaneseq
        %v3374 = vshrl.u32 %v3373, 7
        %v3375 = vsub.s32 %v3372, %v3374
        %v3376 = vrot.slane %v3348, %v3375
        %v3377 = vcombine.low %v3355, %v3362
        %v3378 = vcombine.low %v3369, %v3376
        %v3380 = vunpack.c.l.s4 1966171168
        %v3381 = vunpack.c.0.s8 %v3380
        %v3382 = vlaneseq
        %v3383 = vshrl.u32 %v3382, 7
        %v3384 = vsub.s32 %v3381, %v3383
        %v3385 = vrot.slane %v3377, %v3384
        %v3387 = vunpack.c.l.s4 1966171168
        %v3388 = vunpack.c.0.s8 %v3387
        %v3389 = vlaneseq
        %v3390 = vshrl.u32 %v3389, 7
        %v3391 = vsub.s32 %v3388, %v3390
        %v3392 = vrot.slane %v3378, %v3391
        %v3393 = vcombine.low %v3385, %v3392
        %3394 = vset.pattern.permute.xlu0 0
        %3395 = vperm.xlu0 %3394, %v1874
        %v3396 = vpop.permute.xlu0 %3395
        %3397 = vset.pattern.permute.xlu0 0
        %3398 = vperm.xlu0 %3397, %v1923
        %v3399 = vpop.permute.xlu0 %3398
        %3400 = vset.pattern.permute.xlu0 0
        %3401 = vperm.xlu0 %3400, %v1972
        %v3402 = vpop.permute.xlu0 %3401
        %3403 = vset.pattern.permute.xlu0 0
        %3404 = vperm.xlu0 %3403, %v2021
        %v3405 = vpop.permute.xlu0 %3404
        %3406 = vset.pattern.permute.xlu0 0
        %3407 = vperm.xlu0 %3406, %v2070
        %v3408 = vpop.permute.xlu0 %3407
        %3409 = vset.pattern.permute.xlu0 0
        %3410 = vperm.xlu0 %3409, %v2119
        %v3411 = vpop.permute.xlu0 %3410
        %3412 = vset.pattern.permute.xlu0 0
        %3413 = vperm.xlu0 %3412, %v2168
        %v3414 = vpop.permute.xlu0 %3413
        %3415 = vset.pattern.permute.xlu0 0
        %3416 = vperm.xlu0 %3415, %v2217
        %v3417 = vpop.permute.xlu0 %3416
        %3418 = vset.pattern.permute.xlu0 0
        %3419 = vperm.xlu0 %3418, %v2266
        %v3420 = vpop.permute.xlu0 %3419
        %3421 = vset.pattern.permute.xlu0 0
        %3422 = vperm.xlu0 %3421, %v2315
        %v3423 = vpop.permute.xlu0 %3422
        %3424 = vset.pattern.permute.xlu0 0
        %3425 = vperm.xlu0 %3424, %v2364
        %v3426 = vpop.permute.xlu0 %3425
        %3427 = vset.pattern.permute.xlu0 0
        %3428 = vperm.xlu0 %3427, %v2413
        %v3429 = vpop.permute.xlu0 %3428
        %3430 = vset.pattern.permute.xlu0 0
        %3431 = vperm.xlu0 %3430, %v2462
        %v3432 = vpop.permute.xlu0 %3431
        %3433 = vset.pattern.permute.xlu0 0
        %3434 = vperm.xlu0 %3433, %v2511
        %v3435 = vpop.permute.xlu0 %3434
        %3436 = vset.pattern.permute.xlu0 0
        %3437 = vperm.xlu0 %3436, %v2560
        %v3438 = vpop.permute.xlu0 %3437
        %3439 = vset.pattern.permute.xlu0 0
        %3440 = vperm.xlu0 %3439, %v2609
        %v3441 = vpop.permute.xlu0 %3440
        %3442 = vset.pattern.permute.xlu0 0
        %3443 = vperm.xlu0 %3442, %v2658
        %v3444 = vpop.permute.xlu0 %3443
        %3445 = vset.pattern.permute.xlu0 0
        %3446 = vperm.xlu0 %3445, %v2707
        %v3447 = vpop.permute.xlu0 %3446
        %3448 = vset.pattern.permute.xlu0 0
        %3449 = vperm.xlu0 %3448, %v2756
        %v3450 = vpop.permute.xlu0 %3449
        %3451 = vset.pattern.permute.xlu0 0
        %3452 = vperm.xlu0 %3451, %v2805
        %v3453 = vpop.permute.xlu0 %3452
        %3454 = vset.pattern.permute.xlu0 0
        %3455 = vperm.xlu0 %3454, %v2854
        %v3456 = vpop.permute.xlu0 %3455
        %3457 = vset.pattern.permute.xlu0 0
        %3458 = vperm.xlu0 %3457, %v2903
        %v3459 = vpop.permute.xlu0 %3458
        %3460 = vset.pattern.permute.xlu0 0
        %3461 = vperm.xlu0 %3460, %v2952
        %v3462 = vpop.permute.xlu0 %3461
        %3463 = vset.pattern.permute.xlu0 0
        %3464 = vperm.xlu0 %3463, %v3001
        %v3465 = vpop.permute.xlu0 %3464
        %3466 = vset.pattern.permute.xlu0 0
        %3467 = vperm.xlu0 %3466, %v3050
        %v3468 = vpop.permute.xlu0 %3467
        %3469 = vset.pattern.permute.xlu0 0
        %3470 = vperm.xlu0 %3469, %v3099
        %v3471 = vpop.permute.xlu0 %3470
        %3472 = vset.pattern.permute.xlu0 0
        %3473 = vperm.xlu0 %3472, %v3148
        %v3474 = vpop.permute.xlu0 %3473
        %3475 = vset.pattern.permute.xlu0 0
        %3476 = vperm.xlu0 %3475, %v3197
        %v3477 = vpop.permute.xlu0 %3476
        %3478 = vset.pattern.permute.xlu0 0
        %3479 = vperm.xlu0 %3478, %v3246
        %v3480 = vpop.permute.xlu0 %3479
        %3481 = vset.pattern.permute.xlu0 0
        %3482 = vperm.xlu0 %3481, %v3295
        %v3483 = vpop.permute.xlu0 %3482
        %3484 = vset.pattern.permute.xlu0 0
        %3485 = vperm.xlu0 %3484, %v3344
        %v3486 = vpop.permute.xlu0 %3485
        %3487 = vset.pattern.permute.xlu0 0
        %3488 = vperm.xlu0 %3487, %v3393
        %v3489 = vpop.permute.xlu0 %3488
        %v3490 = vlaneseq
        %v3491 = vand.u32 %v3490, 127
        %v3492 = vlaneseq
        %v3493 = vshrl.u32 %v3492, 7
        %v3494 = vsub.s32 %v3491, %v3493
        %v3495 = vrot.slane %v3396, %v3494
        %v3496 = vadd.s32 %v3491, 4294967288
        %v3497 = vlaneseq
        %v3498 = vshrl.u32 %v3497, 7
        %v3499 = vsub.s32 %v3496, %v3498
        %v3500 = vrot.slane %v3399, %v3499
        %vm3501 = vcmask 130112
        %v3502 = vsel %vm3501, %v3500, %v3495
        %v3503 = vadd.s32 %v3491, 4294967280
        %v3504 = vlaneseq
        %v3505 = vshrl.u32 %v3504, 7
        %v3506 = vsub.s32 %v3503, %v3505
        %v3507 = vrot.slane %v3402, %v3506
        %vm3508 = vcmask 195712
        %v3509 = vsel %vm3508, %v3507, %v3502
        %v3510 = vadd.s32 %v3491, 4294967272
        %v3511 = vlaneseq
        %v3512 = vshrl.u32 %v3511, 7
        %v3513 = vsub.s32 %v3510, %v3512
        %v3514 = vrot.slane %v3405, %v3513
        %vm3515 = vcmask 261312
        %v3516 = vsel %vm3515, %v3514, %v3509
        %v3517 = vadd.s32 %v3491, 4294967264
        %v3518 = vlaneseq
        %v3519 = vshrl.u32 %v3518, 7
        %v3520 = vsub.s32 %v3517, %v3519
        %v3521 = vrot.slane %v3408, %v3520
        %vm3522 = vcmask 326912
        %v3523 = vsel %vm3522, %v3521, %v3516
        %v3524 = vadd.s32 %v3491, 4294967256
        %v3525 = vlaneseq
        %v3526 = vshrl.u32 %v3525, 7
        %v3527 = vsub.s32 %v3524, %v3526
        %v3528 = vrot.slane %v3411, %v3527
        %vm3529 = vcmask 392512
        %v3530 = vsel %vm3529, %v3528, %v3523
        %v3531 = vadd.s32 %v3491, 4294967248
        %v3532 = vlaneseq
        %v3533 = vshrl.u32 %v3532, 7
        %v3534 = vsub.s32 %v3531, %v3533
        %v3535 = vrot.slane %v3414, %v3534
        %vm3536 = vcmask 458112
        %v3537 = vsel %vm3536, %v3535, %v3530
        %v3538 = vadd.s32 %v3491, 4294967240
        %v3539 = vlaneseq
        %v3540 = vshrl.u32 %v3539, 7
        %v3541 = vsub.s32 %v3538, %v3540
        %v3542 = vrot.slane %v3417, %v3541
        %vm3543 = vcmask 523712
        %v3544 = vsel %vm3543, %v3542, %v3537
        %v3545 = vadd.s32 %v3491, 4294967232
        %v3546 = vlaneseq
        %v3547 = vshrl.u32 %v3546, 7
        %v3548 = vsub.s32 %v3545, %v3547
        %v3549 = vrot.slane %v3420, %v3548
        %vm3550 = vcmask 589312
        %v3551 = vsel %vm3550, %v3549, %v3544
        %v3552 = vadd.s32 %v3491, 4294967224
        %v3553 = vlaneseq
        %v3554 = vshrl.u32 %v3553, 7
        %v3555 = vsub.s32 %v3552, %v3554
        %v3556 = vrot.slane %v3423, %v3555
        %vm3557 = vcmask 654912
        %v3558 = vsel %vm3557, %v3556, %v3551
        %v3559 = vadd.s32 %v3491, 4294967216
        %v3560 = vlaneseq
        %v3561 = vshrl.u32 %v3560, 7
        %v3562 = vsub.s32 %v3559, %v3561
        %v3563 = vrot.slane %v3426, %v3562
        %vm3564 = vcmask 720512
        %v3565 = vsel %vm3564, %v3563, %v3558
        %v3566 = vadd.s32 %v3491, 4294967208
        %v3567 = vlaneseq
        %v3568 = vshrl.u32 %v3567, 7
        %v3569 = vsub.s32 %v3566, %v3568
        %v3570 = vrot.slane %v3429, %v3569
        %vm3571 = vcmask 786112
        %v3572 = vsel %vm3571, %v3570, %v3565
        %v3573 = vadd.s32 %v3491, 4294967200
        %v3574 = vlaneseq
        %v3575 = vshrl.u32 %v3574, 7
        %v3576 = vsub.s32 %v3573, %v3575
        %v3577 = vrot.slane %v3432, %v3576
        %vm3578 = vcmask 851712
        %v3579 = vsel %vm3578, %v3577, %v3572
        %v3580 = vadd.s32 %v3491, 4294967192
        %v3581 = vlaneseq
        %v3582 = vshrl.u32 %v3581, 7
        %v3583 = vsub.s32 %v3580, %v3582
        %v3584 = vrot.slane %v3435, %v3583
        %vm3585 = vcmask 917312
        %v3586 = vsel %vm3585, %v3584, %v3579
        %v3587 = vadd.s32 %v3491, 4294967184
        %v3588 = vlaneseq
        %v3589 = vshrl.u32 %v3588, 7
        %v3590 = vsub.s32 %v3587, %v3589
        %v3591 = vrot.slane %v3438, %v3590
        %vm3592 = vcmask 982912
        %v3593 = vsel %vm3592, %v3591, %v3586
        %v3594 = vadd.s32 %v3491, 4294967176
        %v3595 = vlaneseq
        %v3596 = vshrl.u32 %v3595, 7
        %v3597 = vsub.s32 %v3594, %v3596
        %v3598 = vrot.slane %v3441, %v3597
        %vm3599 = vcmask 1048512
        %v3600 = vsel %vm3599, %v3598, %v3593
        %v3601 = vlaneseq
        %v3602 = vshrl.u32 %v3601, 7
        %v3603 = vsub.s32 %v3491, %v3602
        %v3604 = vrot.slane %v3444, %v3603
        %v3605 = vlaneseq
        %v3606 = vshrl.u32 %v3605, 7
        %v3607 = vsub.s32 %v3496, %v3606
        %v3608 = vrot.slane %v3447, %v3607
        %v3609 = vsel %vm3501, %v3608, %v3604
        %v3610 = vlaneseq
        %v3611 = vshrl.u32 %v3610, 7
        %v3612 = vsub.s32 %v3503, %v3611
        %v3613 = vrot.slane %v3450, %v3612
        %v3614 = vsel %vm3508, %v3613, %v3609
        %v3615 = vlaneseq
        %v3616 = vshrl.u32 %v3615, 7
        %v3617 = vsub.s32 %v3510, %v3616
        %v3618 = vrot.slane %v3453, %v3617
        %v3619 = vsel %vm3515, %v3618, %v3614
        %v3620 = vlaneseq
        %v3621 = vshrl.u32 %v3620, 7
        %v3622 = vsub.s32 %v3517, %v3621
        %v3623 = vrot.slane %v3456, %v3622
        %v3624 = vsel %vm3522, %v3623, %v3619
        %v3625 = vlaneseq
        %v3626 = vshrl.u32 %v3625, 7
        %v3627 = vsub.s32 %v3524, %v3626
        %v3628 = vrot.slane %v3459, %v3627
        %v3629 = vsel %vm3529, %v3628, %v3624
        %v3630 = vlaneseq
        %v3631 = vshrl.u32 %v3630, 7
        %v3632 = vsub.s32 %v3531, %v3631
        %v3633 = vrot.slane %v3462, %v3632
        %v3634 = vsel %vm3536, %v3633, %v3629
        %v3635 = vlaneseq
        %v3636 = vshrl.u32 %v3635, 7
        %v3637 = vsub.s32 %v3538, %v3636
        %v3638 = vrot.slane %v3465, %v3637
        %v3639 = vsel %vm3543, %v3638, %v3634
        %v3640 = vlaneseq
        %v3641 = vshrl.u32 %v3640, 7
        %v3642 = vsub.s32 %v3545, %v3641
        %v3643 = vrot.slane %v3468, %v3642
        %v3644 = vsel %vm3550, %v3643, %v3639
        %v3645 = vlaneseq
        %v3646 = vshrl.u32 %v3645, 7
        %v3647 = vsub.s32 %v3552, %v3646
        %v3648 = vrot.slane %v3471, %v3647
        %v3649 = vsel %vm3557, %v3648, %v3644
        %v3650 = vlaneseq
        %v3651 = vshrl.u32 %v3650, 7
        %v3652 = vsub.s32 %v3559, %v3651
        %v3653 = vrot.slane %v3474, %v3652
        %v3654 = vsel %vm3564, %v3653, %v3649
        %v3655 = vlaneseq
        %v3656 = vshrl.u32 %v3655, 7
        %v3657 = vsub.s32 %v3566, %v3656
        %v3658 = vrot.slane %v3477, %v3657
        %v3659 = vsel %vm3571, %v3658, %v3654
        %v3660 = vlaneseq
        %v3661 = vshrl.u32 %v3660, 7
        %v3662 = vsub.s32 %v3573, %v3661
        %v3663 = vrot.slane %v3480, %v3662
        %v3664 = vsel %vm3578, %v3663, %v3659
        %v3665 = vlaneseq
        %v3666 = vshrl.u32 %v3665, 7
        %v3667 = vsub.s32 %v3580, %v3666
        %v3668 = vrot.slane %v3483, %v3667
        %v3669 = vsel %vm3585, %v3668, %v3664
        %v3670 = vlaneseq
        %v3671 = vshrl.u32 %v3670, 7
        %v3672 = vsub.s32 %v3587, %v3671
        %v3673 = vrot.slane %v3486, %v3672
        %v3674 = vsel %vm3592, %v3673, %v3669
        %v3675 = vlaneseq
        %v3676 = vshrl.u32 %v3675, 7
        %v3677 = vsub.s32 %v3594, %v3676
        %v3678 = vrot.slane %v3489, %v3677
        %v3679 = vsel %vm3599, %v3678, %v3674
        %v3680 = vcombine.low %v3600, %v3679
        %v3682 = vunpack.c.l.s4 1966171168
        %v3683 = vunpack.c.0.s8 %v3682
        %v3684 = vlaneseq
        %v3685 = vshrl.u32 %v3684, 7
        %v3686 = vsub.s32 %v3683, %v3685
        %v3687 = vrot.slane %v3680, %v3686
        %v3689 = vunpack.c.l.s4 1966171168
        %v3690 = vunpack.c.0.s8 %v3689
        %v3691 = vlaneseq
        %v3692 = vshrl.u32 %v3691, 7
        %v3693 = vsub.s32 %v3690, %v3692
        %v3694 = vrot.slane %v3687, %v3693
        %v3695 = vlaneseq
        %vm3696 = vcmp.ge.s32.totalorder %v3695, 0
        %vm3697 = vcmp.lt.s32.totalorder %v3695, 256
        %vm3698 = vmand %vm3696, %vm3697
        %3699 = vst.msk [vmem:[%s215] sm:$0x3] %vm3698, %v3694
        %s3700 = sand.u32 %s97, 1
        %s3701 = scalar_lea.sflag [#allocation4], %s3700
        %s3702 = sand.u32 %s97, 1
        %s3703 = smul.addr %s3702, 2
        %s3704 = scalar_lea.vmem [#allocation8], %s3703
        // Predicated region
        $region45: #{tpu_custom_call.1} parent=31 // pred_check
          %p3705 = pneg %p107
        $region46: #{tpu_custom_call.1} parent=31 // pred_check_branch
          %3707 = sbr.rel (%p3705) target = $region48
        $region47: #{tpu_custom_call.1} parent=31 // pred_region
          %s3709 = ssub.s32 32, 32
          %3710 = vsyncadd %s3701, %s3709
          %s3711 = smul.addr %s21, 2
          %s3712 = smul.addr %s3711, 16
          %s3713 = scalar_lea.hbm %s3, %s3712
          %s3715 = sshll.u32 %s3704, 4
          %s3716 = int_to_ptr.vmem [resolvable:$true] %s3715
          %3718 = dma.vmem_to_hbm [thread:$0]  %s3716, 32, %s3713, %s3701
        $region48: #{tpu_custom_call.1} parent=31 // pred_fallthru
          _
      $region32: #{tpu_custom_call.1} parent=5 // pred_fallthru
        _
      %p3719 = scmp.le.s32.totalorder 2, %s16
      // Predicated region
      $region49: #{tpu_custom_call.1} parent=5 // pred_check
        %p3720 = pneg %p3719
      $region50: #{tpu_custom_call.1} parent=5 // pred_check_branch
        %3722 = sbr.rel (%p3720) target = $region52
      $region51: #{tpu_custom_call.1} parent=5 // pred_region
        %s3723 = ssub.s32 %s16, 2
        // Predicated region
        $region53: #{tpu_custom_call.1} parent=51 // pred_check
          %p3724 = pneg %p113
        $region54: #{tpu_custom_call.1} parent=51 // pred_check_branch
          %3726 = sbr.rel (%p3724) target = $region56
        $region55: #{tpu_custom_call.1} parent=51 // pred_region
          %s3727 = sand.u32 %s98, 1
          %s3728 = scalar_lea.sflag [#allocation4], %s3727
          %s3729 = sand.u32 %s98, 1
          %s3730 = smul.addr %s3729, 2
          %s3731 = scalar_lea.vmem [#allocation8], %s3730
          %3732 = dma.done %s3728, 32
        $region56: #{tpu_custom_call.1} parent=51 // pred_fallthru
          _
      $region52: #{tpu_custom_call.1} parent=5 // pred_fallthru
        _
    $region6: #{tpu_custom_call.1} parent=1 // loop_footer
      %s20 = sadd.s32 1, %s16
    $region7: #{tpu_custom_call.1} parent=1 // loop_footer_branch
      %15 = sbr.rel target = $region3
    $region8: #{tpu_custom_call.1} parent=1 // loop_exit
      _
    %3733 = vsyncpa [#allocation3], 1
    %s3734 = scalar_lea.sflag [#allocation3], 1
    %3735 = vsyncpa %s3734, 1
    %3736 = vsyncpa [#allocation6], 1
    %3737 = vsyncpa [#allocation4], 1
    %s3738 = scalar_lea.sflag [#allocation4], 1
    %3739 = vsyncpa %s3738, 1

</llo_original>
